<compile_context>
chip_gen: v6e
topology: v6e:2x2x1
jax: 0.10.0
libtpu: 0.0.40
codegen_flags: <defaults>
</compile_context>

<pallas_src>
import jax
import jax.numpy as jnp
from jax.experimental import pallas as pl
from jax.experimental.pallas import tpu as pltpu

# ---------------- problem sizes (small, consistent with the module) ----------------
B = 2            # batch
Q = 8            # report length (report_embedding.shape[1])
E = 32           # word embedding dim
NS = 8           # snippets per code file (code_embedding.shape[1])
LS = 16          # words per snippet (code_snippet_embedding.shape[1])
DD = 32          # dim_dense
DD2 = DD // 2
K = 3            # k_max_pool

NUM_BUGS, NUM_PATHS = 4, 6
NUM_REPORTS, REPORT_VOCAB = 4, 20
NUM_CODES, NUM_SNIPPETS, CODE_VOCAB = 6, 12, 24

NEG_BIG = 1.0e12
NEG_FILL = -1.0e30

# packed-weight row offsets
_W1_R, _W2_R, _B1_R, _B2_R, _W3_R = 0, E, E + DD, E + DD + 1, E + DD + 2
W_ROWS = E + DD + 3            # 67
# packed-scalar layout: [wk0..wk(K-1), bk, b3, pad...]
_BK_I, _B3_I = K, K + 1


# ---------------------------------- Pallas kernel ----------------------------------
def relevance_kernel(scal_ref,                      # SMEM (8,)  [wk*, bk, b3]
                     lens_ref, r_emb_ref, c_emb_ref, idf_ref, w_ref,   # VMEM
                     out_ref):
    q = r_emb_ref[...]                 # (B, Q, E)
    c = c_emb_ref[...]                 # (B, NS, LS, E)
    lens = lens_ref[...]               # (B, NS+1)  float lengths: s_len | c_len
    idf = idf_ref[...]                 # (B, Q)

    b, q_len, e_dim = q.shape
    _, ns, ls, _ = c.shape
    g = b * ns

    # ----- masks rebuilt in-kernel from lengths (saves two DMA operands) -----
    s_len = lens[:, :ns]                                              # (B, NS)
    c_len = lens[:, ns:ns + 1]                                        # (B, 1)
    l_pos = jax.lax.broadcasted_iota(jnp.int32, (b, ns, ls), 2).astype(jnp.float32)
    s_add = jnp.where(l_pos < s_len[:, :, None], 0.0, NEG_BIG)        # (B,NS,LS) additive
    n_pos = jax.lax.broadcasted_iota(jnp.int32, (b, ns), 1).astype(jnp.float32)
    c_maskf = jnp.where(n_pos < c_len, 1.0, 0.0)                      # (B, NS)

    # ----- grouped views: g = (batch, snippet) -----
    c_g = c.reshape(g, ls, e_dim)                                     # (G, LS, E)
    q_g = jnp.broadcast_to(q[:, None], (b, ns, q_len, e_dim)).reshape(g, q_len, e_dim)
    s_add_g = s_add.reshape(g, ls)[:, None, :]                        # (G, 1, LS)

    # ----- DotAttn scores on the MXU: <q, c> contracted over E -----
    scores = jnp.einsum('gqe,gle->gql', q_g, c_g,
                        preferred_element_type=jnp.float32)           # (G, Q, LS)
    scores = scores - s_add_g

    # masked softmax over snippet length (exp on EUP, approx reciprocal on EUP;
    # the uniform per-row scale error cancels in the L2 normalization below)
    m = jnp.max(scores, axis=-1, keepdims=True)
    p = jnp.exp(scores - m)
    attn = p * pl.reciprocal(jnp.sum(p, axis=-1, keepdims=True), approx=True)

    # ----- attention-weighted values, also on the MXU (contract LS) -----
    attn_v = jnp.einsum('gql,gle->gqe', attn, c_g,
                        preferred_element_type=jnp.float32)           # (G, Q, E)

    # ----- L2 normalize (0/0 -> NaN -> 0, matching torch `x[x!=x]=0`) -----
    nc = attn_v * jax.lax.rsqrt(jnp.sum(attn_v * attn_v, axis=-1, keepdims=True))
    nc = jnp.where(nc != nc, 0.0, nc)
    nq = q * jax.lax.rsqrt(jnp.sum(q * q, axis=-1, keepdims=True))
    nq = jnp.where(nq != nq, 0.0, nq)
    nq_g = jnp.broadcast_to(nq[:, None], (b, ns, q_len, e_dim)).reshape(g, q_len, e_dim)
    rc = nq_g * nc                                                    # (G, Q, E)

    # ----- relevance_dense: Linear->Tanh x3 on (B*NS*Q, E) = (128, 32) -----
    w1 = w_ref[_W1_R:_W1_R + E, :]      # (E, DD)
    w2 = w_ref[_W2_R:_W2_R + DD, :]     # (DD, DD)  cols >= DD2 are zero-padded
    b1 = w_ref[_B1_R, :]                # (DD,)
    b2 = w_ref[_B2_R, :]                # (DD,)     pad entries zero -> tanh(0)=0
    w3 = w_ref[_W3_R, :]                # (DD,)     pad entries zero -> no contribution

    x = rc.reshape(g * q_len, e_dim)                                  # (128, 32)
    h = jnp.tanh(jnp.dot(x, w1, preferred_element_type=jnp.float32) + b1)
    h = jnp.tanh(jnp.dot(h, w2, preferred_element_type=jnp.float32) + b2)
    h = h.reshape(g, q_len, DD)
    rel = jnp.tanh(jnp.sum(h * w3, axis=-1) + scal_ref[_B3_I])        # (G, Q)
    rel = rel.reshape(b, ns, q_len) * c_maskf[:, :, None]             # (B, NS, Q)

    # ----- sorted top-k over snippets (axis=NS) + Linear(K,1) fusion -----
    sub = jax.lax.broadcasted_iota(jnp.int32, (b, ns, q_len), 1)
    work = rel
    fused = jnp.zeros((b, 1, q_len), jnp.float32) + scal_ref[_BK_I]   # + bias
    for j in range(K):
        mx = jnp.max(work, axis=1, keepdims=True)                     # (B, 1, Q)
        fused = fused + mx * scal_ref[j]
        hit = work == mx
        first = jnp.min(jnp.where(hit, sub, ns), axis=1, keepdims=True)
        work = jnp.where(sub == first, NEG_FILL, work)

    # ----- idf softmax over report words, weighted sum (exact divide) -----
    idf_m = jnp.where(idf == 0.0, -NEG_BIG, idf)                      # (B, Q)
    mi = jnp.max(idf_m, axis=1, keepdims=True)
    pi = jnp.exp(idf_m - mi)
    wi = pi / jnp.sum(pi, axis=1, keepdims=True)                      # (B, Q)

    out_ref[...] = jnp.sum(fused[:, 0, :] * wi, axis=1, keepdims=True)   # (B, 1)


# --------------------------------- JAX glue ----------------------------------------
def prepare_inputs(p, r_idx, c_idx):
    """Embedding-table gathers (plain-JAX glue; no clean Pallas equivalent)."""
    trans_c_idx = p["matrix"][r_idx, c_idx].astype(jnp.int32)              # (B,)
    r_vec = p["report_embedding"][r_idx].astype(jnp.int32)                 # (B,Q)
    r_emb = p["report_word_embedding"][r_vec]                              # (B,Q,E)
    c_vec = p["code_embedding"][trans_c_idx].astype(jnp.int32)             # (B,NS)
    s_len = p["code_snippet_len_embedding"][c_vec][..., 0]                 # (B,NS) float
    c_words = p["code_snippet_embedding"][c_vec].astype(jnp.int32)         # (B,NS,LS)
    c_emb = p["code_word_embedding"][c_words]                              # (B,NS,LS,E)
    c_len = p["code_len_embedding"][c_idx][..., 0]                         # (B,)  float
    r_idf = p["report_word_idf_embedding"][r_vec][..., 0]                  # (B,Q)
    lens = jnp.concatenate([s_len, c_len[:, None]], axis=1).astype(jnp.float32)  # (B,NS+1)
    return r_emb.astype(jnp.float32), c_emb.astype(jnp.float32), lens, r_idf.astype(jnp.float32)


def pack_weights(p):
    """Pack the 6 dense-layer params into one VMEM blob + the fusion scalars into SMEM."""
    wmat = jnp.zeros((W_ROWS, DD), jnp.float32)
    wmat = wmat.at[_W1_R:_W1_R + E, :].set(p["W1"])
    wmat = wmat.at[_W2_R:_W2_R + DD, :DD2].set(p["W2"])
    wmat = wmat.at[_B1_R, :].set(p["b1"][0])
    wmat = wmat.at[_B2_R, :DD2].set(p["b2"][0])
    wmat = wmat.at[_W3_R, :DD2].set(p["W3t"][0])
    scal = jnp.zeros((8,), jnp.float32)
    scal = scal.at[0:K].set(p["wk"])
    scal = scal.at[_BK_I].set(p["bk"][0])
    scal = scal.at[_B3_I].set(p["b3"][0, 0])
    return wmat, scal


def relevance_forward(p, r_idx, c_idx):
    r_emb, c_emb, lens, r_idf = prepare_inputs(p, r_idx, c_idx)
    wmat, scal = pack_weights(p)
    b = r_emb.shape[0]

    vmem = pl.BlockSpec(memory_space=pltpu.MemorySpace.VMEM)
    smem = pl.BlockSpec(memory_space=pltpu.MemorySpace.SMEM)

    out = pl.pallas_call(
        relevance_kernel,
        out_shape=jax.ShapeDtypeStruct((b, 1), jnp.float32),
        in_specs=[smem, vmem, vmem, vmem, vmem, vmem],
        out_specs=vmem,
    )(scal, lens, r_emb, c_emb, r_idf, wmat)
    return out[:, 0]                                                       # (B,)


def reference_forward(p, r_idx, c_idx):
    """Pure-JAX mirror of the PyTorch forward, for a correctness check."""
    r_emb, c_emb, lens, r_idf = prepare_inputs(p, r_idx, c_idx)
    b = r_emb.shape[0]
    s_len = lens[:, :NS]
    c_len = lens[:, NS]
    s_mask = jnp.arange(LS, dtype=jnp.float32)[None, None, :] < s_len[:, :, None]  # (B,NS,LS)
    c_mask = jnp.arange(NS, dtype=jnp.float32)[None, :] < c_len[:, None]           # (B,NS)

    trans_k = jnp.transpose(c_emb, (0, 3, 1, 2)).reshape(b, E, NS * LS)
    attn = jnp.einsum("bqe,bes->bqs", r_emb, trans_k).reshape(b, Q, NS, LS)
    attn = attn - ((~s_mask).astype(jnp.float32) * NEG_BIG)[:, None, :, :]
    attn = jax.nn.softmax(attn, axis=3)
    attn_v = jnp.einsum("bqnl,bnle->bqne", attn, c_emb)
    nc = attn_v / jnp.linalg.norm(attn_v, axis=3, keepdims=True)
    nc = jnp.where(jnp.isnan(nc), 0.0, nc)
    nq = r_emb / jnp.linalg.norm(r_emb, axis=2, keepdims=True)
    nq = jnp.where(jnp.isnan(nq), 0.0, nq)
    rc = nq[:, :, None, :] * nc
    h = jnp.tanh(rc @ p["W1"] + p["b1"][0])
    h = jnp.tanh(h @ p["W2"] + p["b2"][0])
    rel = jnp.tanh(jnp.sum(h * p["W3t"][0], axis=-1) + p["b3"][0, 0])
    rel = rel * c_mask.astype(jnp.float32)[:, None, :]
    topk = jax.lax.top_k(rel, K)[0]
    fused = jnp.sum(topk * p["wk"], axis=-1) + p["bk"][0]
    idf = jnp.where(r_idf == 0.0, -NEG_BIG, r_idf)
    w = jax.nn.softmax(idf, axis=1)
    return jnp.sum(fused * w, axis=1)


def init_params(key):
    ks = jax.random.split(key, 16)
    p = {}
    p["matrix"] = jax.random.randint(ks[0], (NUM_BUGS, NUM_PATHS), 0, NUM_CODES).astype(jnp.float32)
    p["report_embedding"] = jax.random.randint(ks[1], (NUM_REPORTS, Q), 0, REPORT_VOCAB).astype(jnp.float32)
    p["report_word_embedding"] = jax.random.normal(ks[2], (REPORT_VOCAB, E), jnp.float32)
    idf = jax.random.uniform(ks[3], (REPORT_VOCAB, 1), jnp.float32, 0.5, 2.0)
    p["report_word_idf_embedding"] = idf.at[0].set(0.0)
    p["code_embedding"] = jax.random.randint(ks[4], (NUM_CODES, NS), 0, NUM_SNIPPETS).astype(jnp.float32)
    p["code_snippet_embedding"] = jax.random.randint(ks[5], (NUM_SNIPPETS, LS), 0, CODE_VOCAB).astype(jnp.float32)
    p["code_snippet_len_embedding"] = jax.random.randint(ks[6], (NUM_SNIPPETS, 1), 1, LS + 1).astype(jnp.float32)
    p["code_word_embedding"] = jax.random.normal(ks[7], (CODE_VOCAB, E), jnp.float32)
    p["code_len_embedding"] = jax.random.randint(ks[8], (NUM_PATHS, 1), 1, NS + 1).astype(jnp.float32)
    # relevance_dense: Linear(E,DD)-Tanh-Linear(DD,DD2)-Tanh-Linear(DD2,1)-Tanh
    p["W1"] = 0.2 * jax.random.normal(ks[9], (E, DD), jnp.float32)
    p["b1"] = 0.1 * jax.random.normal(ks[10], (1, DD), jnp.float32)
    p["W2"] = 0.2 * jax.random.normal(ks[11], (DD, DD2), jnp.float32)
    p["b2"] = 0.1 * jax.random.normal(ks[12], (1, DD2), jnp.float32)
    p["W3t"] = 0.2 * jax.random.normal(ks[13], (1, DD2), jnp.float32)   # Linear(DD2,1) weight, as a row
    p["b3"] = jnp.zeros((1, 1), jnp.float32)
    # k_max_fusion: Linear(K, 1)
    p["wk"] = 0.5 * jax.random.normal(ks[14], (K,), jnp.float32)
    p["bk"] = 0.1 * jax.random.normal(ks[15], (1,), jnp.float32)
    return p


if __name__ == "__main__":
    params = init_params(jax.random.PRNGKey(0))
    r_idx = jnp.array([0, 1], dtype=jnp.int32)
    c_idx = jnp.array([2, 3], dtype=jnp.int32)

    score = relevance_forward(params, r_idx, c_idx)
    score = jax.block_until_ready(score)

    ref = reference_forward(params, r_idx, c_idx)
    assert score.shape == (B,)
    assert jnp.allclose(score, ref, atol=2e-3, rtol=2e-3), (score, ref)
    print("KERNEL_OK")
</pallas_src>

<mosaic_0001>
module attributes {stable_mosaic.version = 11 : i64} {
  func.func @relevance_kernel(%arg0: memref<8xf32, #tpu.memory_space<smem>>, %arg1: memref<2x9xf32, #tpu.memory_space<vmem>>, %arg2: memref<2x8x32xf32, #tpu.memory_space<vmem>>, %arg3: memref<2x8x16x32xf32, #tpu.memory_space<vmem>>, %arg4: memref<2x8xf32, #tpu.memory_space<vmem>>, %arg5: memref<67x32xf32, #tpu.memory_space<vmem>>, %arg6: memref<2x1xf32, #tpu.memory_space<vmem>>) attributes {dimension_semantics = [], scalar_prefetch = 0 : i64, scratch_operands = 0 : i64, tpu.core_type = #tpu.core_type<tc>} {
    %c0 = arith.constant 0 : index
    %c0_0 = arith.constant 0 : index
    %c0_1 = arith.constant 0 : index
    %0 = vector.load %arg2[%c0, %c0_0, %c0_1] : memref<2x8x32xf32, #tpu.memory_space<vmem>>, vector<2x8x32xf32>
    %c0_2 = arith.constant 0 : index
    %c0_3 = arith.constant 0 : index
    %c0_4 = arith.constant 0 : index
    %c0_5 = arith.constant 0 : index
    %1 = vector.load %arg3[%c0_2, %c0_3, %c0_4, %c0_5] : memref<2x8x16x32xf32, #tpu.memory_space<vmem>>, vector<2x8x16x32xf32>
    %c0_6 = arith.constant 0 : index
    %c0_7 = arith.constant 0 : index
    %2 = vector.load %arg1[%c0_6, %c0_7] : memref<2x9xf32, #tpu.memory_space<vmem>>, vector<2x9xf32>
    %c0_8 = arith.constant 0 : index
    %c0_9 = arith.constant 0 : index
    %3 = vector.load %arg4[%c0_8, %c0_9] : memref<2x8xf32, #tpu.memory_space<vmem>>, vector<2x8xf32>
    %4 = vector.extract_strided_slice %2 {offsets = [0, 0], sizes = [2, 8], strides = [1, 1]} : vector<2x9xf32> to vector<2x8xf32>
    %5 = vector.extract_strided_slice %2 {offsets = [0, 8], sizes = [2, 1], strides = [1, 1]} : vector<2x9xf32> to vector<2x1xf32>
    %6 = tpu.iota {dimensions = array<i32: 2>} : vector<2x8x16xi32>
    %7 = arith.sitofp %6 : vector<2x8x16xi32> to vector<2x8x16xf32>
    %8 = vector.shape_cast %4 : vector<2x8xf32> to vector<2x8x1xf32>
    %9 = vector.broadcast %8 : vector<2x8x1xf32> to vector<2x8x16xf32>
    %10 = arith.cmpf olt, %7, %9 : vector<2x8x16xf32>
    %cst = arith.constant 0.000000e+00 : f32
    %cst_10 = arith.constant 9.99999995E+11 : f32
    %11 = vector.broadcast %cst : f32 to vector<2x8x16xf32>
    %12 = vector.broadcast %cst_10 : f32 to vector<2x8x16xf32>
    %13 = arith.select %10, %11, %12 : vector<2x8x16xi1>, vector<2x8x16xf32>
    %14 = tpu.iota {dimensions = array<i32: 1>} : vector<2x8xi32>
    %15 = arith.sitofp %14 : vector<2x8xi32> to vector<2x8xf32>
    %16 = vector.broadcast %5 : vector<2x1xf32> to vector<2x8xf32>
    %17 = arith.cmpf olt, %15, %16 : vector<2x8xf32>
    %cst_11 = arith.constant 1.000000e+00 : f32
    %cst_12 = arith.constant 0.000000e+00 : f32
    %18 = vector.broadcast %cst_11 : f32 to vector<2x8xf32>
    %19 = vector.broadcast %cst_12 : f32 to vector<2x8xf32>
    %20 = arith.select %17, %18, %19 : vector<2x8xi1>, vector<2x8xf32>
    %21 = vector.shape_cast %1 : vector<2x8x16x32xf32> to vector<16x16x32xf32>
    %22 = vector.shape_cast %0 : vector<2x8x32xf32> to vector<2x1x8x32xf32>
    %23 = vector.shape_cast %22 : vector<2x1x8x32xf32> to vector<2x1x8x32xf32>
    %24 = vector.broadcast %23 : vector<2x1x8x32xf32> to vector<2x8x8x32xf32>
    %25 = vector.shape_cast %24 : vector<2x8x8x32xf32> to vector<16x8x32xf32>
    %26 = vector.shape_cast %13 : vector<2x8x16xf32> to vector<16x16xf32>
    %27 = vector.shape_cast %26 : vector<16x16xf32> to vector<16x1x16xf32>
    "tpu.trace_start"() <{level = 10 : i32, message = "gqe,gle->gql"}> : () -> ()
    %cst_13 = arith.constant dense<0.000000e+00> : vector<16x8x16xf32>
    %28 = tpu.matmul %25, %21, %cst_13 {dimension_numbers = #tpu.dot_dimension_numbers<[2], [2], [1], [1], [0, 0, 0, 1, 1, 1], [0], [0]>} : vector<16x8x32xf32>, vector<16x16x32xf32>, vector<16x8x16xf32> -> vector<16x8x16xf32>
    "tpu.trace_stop"() : () -> ()
    %29 = vector.broadcast %27 : vector<16x1x16xf32> to vector<16x8x16xf32>
    %30 = arith.subf %28, %29 : vector<16x8x16xf32>
    %cst_14 = arith.constant dense<0xFF800000> : vector<16x8xf32>
    %31 = vector.multi_reduction <maximumf>, %30, %cst_14 [2] : vector<16x8x16xf32> to vector<16x8xf32>
    %32 = vector.shape_cast %31 : vector<16x8xf32> to vector<16x8x1xf32>
    %33 = vector.broadcast %32 : vector<16x8x1xf32> to vector<16x8x16xf32>
    %34 = arith.subf %30, %33 : vector<16x8x16xf32>
    %35 = math.exp %34 : vector<16x8x16xf32>
    %cst_15 = arith.constant dense<0.000000e+00> : vector<16x8xf32>
    %36 = vector.multi_reduction <add>, %35, %cst_15 [2] : vector<16x8x16xf32> to vector<16x8xf32>
    %37 = vector.shape_cast %36 : vector<16x8xf32> to vector<16x8x1xf32>
    %38 = tpu.reciprocal %37 {approx = true} : vector<16x8x1xf32> -> vector<16x8x1xf32>
    %39 = vector.broadcast %38 : vector<16x8x1xf32> to vector<16x8x16xf32>
    %40 = arith.mulf %35, %39 : vector<16x8x16xf32>
    "tpu.trace_start"() <{level = 10 : i32, message = "gql,gle->gqe"}> : () -> ()
    %cst_16 = arith.constant dense<0.000000e+00> : vector<16x8x32xf32>
    %41 = tpu.matmul %40, %21, %cst_16 {dimension_numbers = #tpu.dot_dimension_numbers<[2], [1], [1], [2], [0, 0, 0, 1, 1, 2], [0], [0]>} : vector<16x8x16xf32>, vector<16x16x32xf32>, vector<16x8x32xf32> -> vector<16x8x32xf32>
    "tpu.trace_stop"() : () -> ()
    %42 = arith.mulf %41, %41 : vector<16x8x32xf32>
    %cst_17 = arith.constant dense<0.000000e+00> : vector<16x8xf32>
    %43 = vector.multi_reduction <add>, %42, %cst_17 [2] : vector<16x8x32xf32> to vector<16x8xf32>
    %44 = vector.shape_cast %43 : vector<16x8xf32> to vector<16x8x1xf32>
    %45 = math.rsqrt %44 : vector<16x8x1xf32>
    %46 = vector.broadcast %45 : vector<16x8x1xf32> to vector<16x8x32xf32>
    %47 = arith.mulf %41, %46 : vector<16x8x32xf32>
    %48 = arith.cmpf one, %47, %47 : vector<16x8x32xf32>
    %cst_18 = arith.constant 0.000000e+00 : f32
    %49 = vector.broadcast %cst_18 : f32 to vector<16x8x32xf32>
    %50 = arith.select %48, %49, %47 : vector<16x8x32xi1>, vector<16x8x32xf32>
    %51 = arith.mulf %0, %0 : vector<2x8x32xf32>
    %cst_19 = arith.constant dense<0.000000e+00> : vector<2x8xf32>
    %52 = vector.multi_reduction <add>, %51, %cst_19 [2] : vector<2x8x32xf32> to vector<2x8xf32>
    %53 = vector.shape_cast %52 : vector<2x8xf32> to vector<2x8x1xf32>
    %54 = math.rsqrt %53 : vector<2x8x1xf32>
    %55 = vector.broadcast %54 : vector<2x8x1xf32> to vector<2x8x32xf32>
    %56 = arith.mulf %0, %55 : vector<2x8x32xf32>
    %57 = arith.cmpf one, %56, %56 : vector<2x8x32xf32>
    %cst_20 = arith.constant 0.000000e+00 : f32
    %58 = vector.broadcast %cst_20 : f32 to vector<2x8x32xf32>
    %59 = arith.select %57, %58, %56 : vector<2x8x32xi1>, vector<2x8x32xf32>
    %60 = vector.shape_cast %59 : vector<2x8x32xf32> to vector<2x1x8x32xf32>
    %61 = vector.shape_cast %60 : vector<2x1x8x32xf32> to vector<2x1x8x32xf32>
    %62 = vector.broadcast %61 : vector<2x1x8x32xf32> to vector<2x8x8x32xf32>
    %63 = vector.shape_cast %62 : vector<2x8x8x32xf32> to vector<16x8x32xf32>
    %64 = arith.mulf %63, %50 : vector<16x8x32xf32>
    %c0_21 = arith.constant 0 : index
    %c0_22 = arith.constant 0 : index
    %65 = vector.load %arg5[%c0_21, %c0_22] : memref<67x32xf32, #tpu.memory_space<vmem>>, vector<32x32xf32>
    %c32 = arith.constant 32 : index
    %c0_23 = arith.constant 0 : index
    %66 = vector.load %arg5[%c32, %c0_23] : memref<67x32xf32, #tpu.memory_space<vmem>>, vector<32x32xf32>
    %c64 = arith.constant 64 : index
    %c0_24 = arith.constant 0 : index
    %67 = vector.load %arg5[%c64, %c0_24] : memref<67x32xf32, #tpu.memory_space<vmem>>, vector<1x32xf32>
    %68 = vector.shape_cast %67 : vector<1x32xf32> to vector<32xf32>
    %c65 = arith.constant 65 : index
    %c0_25 = arith.constant 0 : index
    %69 = vector.load %arg5[%c65, %c0_25] : memref<67x32xf32, #tpu.memory_space<vmem>>, vector<1x32xf32>
    %70 = vector.shape_cast %69 : vector<1x32xf32> to vector<32xf32>
    %c66 = arith.constant 66 : index
    %c0_26 = arith.constant 0 : index
    %71 = vector.load %arg5[%c66, %c0_26] : memref<67x32xf32, #tpu.memory_space<vmem>>, vector<1x32xf32>
    %72 = vector.shape_cast %71 : vector<1x32xf32> to vector<32xf32>
    %73 = vector.shape_cast %64 : vector<16x8x32xf32> to vector<128x32xf32>
    %cst_27 = arith.constant dense<0.000000e+00> : vector<128x32xf32>
    %74 = tpu.matmul %73, %65, %cst_27 {dimension_numbers = #tpu.dot_dimension_numbers<[1], [0], [0], [1], [0, 0, 1, 1], [], []>} : vector<128x32xf32>, vector<32x32xf32>, vector<128x32xf32> -> vector<128x32xf32>
    %75 = vector.shape_cast %68 : vector<32xf32> to vector<1x32xf32>
    %76 = vector.broadcast %75 : vector<1x32xf32> to vector<128x32xf32>
    %77 = arith.addf %74, %76 : vector<128x32xf32>
    %78 = math.tanh %77 : vector<128x32xf32>
    %cst_28 = arith.constant dense<0.000000e+00> : vector<128x32xf32>
    %79 = tpu.matmul %78, %66, %cst_28 {dimension_numbers = #tpu.dot_dimension_numbers<[1], [0], [0], [1], [0, 0, 1, 1], [], []>} : vector<128x32xf32>, vector<32x32xf32>, vector<128x32xf32> -> vector<128x32xf32>
    %80 = vector.shape_cast %70 : vector<32xf32> to vector<1x32xf32>
    %81 = vector.broadcast %80 : vector<1x32xf32> to vector<128x32xf32>
    %82 = arith.addf %79, %81 : vector<128x32xf32>
    %83 = math.tanh %82 : vector<128x32xf32>
    %84 = vector.shape_cast %83 : vector<128x32xf32> to vector<16x8x32xf32>
    %85 = vector.shape_cast %72 : vector<32xf32> to vector<1x1x32xf32>
    %86 = vector.broadcast %85 : vector<1x1x32xf32> to vector<16x8x32xf32>
    %87 = arith.mulf %84, %86 : vector<16x8x32xf32>
    %cst_29 = arith.constant dense<0.000000e+00> : vector<16x8xf32>
    %88 = vector.multi_reduction <add>, %87, %cst_29 [2] : vector<16x8x32xf32> to vector<16x8xf32>
    %c4 = arith.constant 4 : index
    %89 = memref.load %arg0[%c4] : memref<8xf32, #tpu.memory_space<smem>>
    %90 = vector.broadcast %89 : f32 to vector<16x8xf32>
    %91 = arith.addf %88, %90 : vector<16x8xf32>
    %92 = math.tanh %91 : vector<16x8xf32>
    %93 = vector.shape_cast %92 : vector<16x8xf32> to vector<2x8x8xf32>
    %94 = vector.shape_cast %20 : vector<2x8xf32> to vector<2x8x1xf32>
    %95 = vector.broadcast %94 : vector<2x8x1xf32> to vector<2x8x8xf32>
    %96 = arith.mulf %93, %95 : vector<2x8x8xf32>
    %97 = tpu.iota {dimensions = array<i32: 1>} : vector<2x8x8xi32>
    %cst_30 = arith.constant 0.000000e+00 : f32
    %98 = vector.broadcast %cst_30 : f32 to vector<2x1x8xf32>
    %c3 = arith.constant 3 : index
    %99 = memref.load %arg0[%c3] : memref<8xf32, #tpu.memory_space<smem>>
    %100 = vector.broadcast %99 : f32 to vector<2x1x8xf32>
    %101 = arith.addf %98, %100 : vector<2x1x8xf32>
    %cst_31 = arith.constant dense<0xFF800000> : vector<2x8xf32>
    %102 = vector.multi_reduction <maximumf>, %96, %cst_31 [1] : vector<2x8x8xf32> to vector<2x8xf32>
    %103 = vector.shape_cast %102 : vector<2x8xf32> to vector<2x1x8xf32>
    %c0_32 = arith.constant 0 : index
    %104 = memref.load %arg0[%c0_32] : memref<8xf32, #tpu.memory_space<smem>>
    %105 = vector.broadcast %104 : f32 to vector<2x1x8xf32>
    %106 = arith.mulf %103, %105 : vector<2x1x8xf32>
    %107 = arith.addf %101, %106 : vector<2x1x8xf32>
    %108 = vector.broadcast %103 : vector<2x1x8xf32> to vector<2x8x8xf32>
    %109 = arith.cmpf oeq, %96, %108 : vector<2x8x8xf32>
    %c8_i32 = arith.constant 8 : i32
    %110 = vector.broadcast %c8_i32 : i32 to vector<2x8x8xi32>
    %111 = arith.select %109, %97, %110 : vector<2x8x8xi1>, vector<2x8x8xi32>
    %cst_33 = arith.constant dense<2147483647> : vector<2x8xi32>
    %112 = vector.multi_reduction <minsi>, %111, %cst_33 [1] : vector<2x8x8xi32> to vector<2x8xi32>
    %113 = vector.shape_cast %112 : vector<2x8xi32> to vector<2x1x8xi32>
    %114 = vector.broadcast %113 : vector<2x1x8xi32> to vector<2x8x8xi32>
    %115 = arith.cmpi eq, %97, %114 : vector<2x8x8xi32>
    %cst_34 = arith.constant -1.000000e+30 : f32
    %116 = vector.broadcast %cst_34 : f32 to vector<2x8x8xf32>
    %117 = arith.select %115, %116, %96 : vector<2x8x8xi1>, vector<2x8x8xf32>
    %cst_35 = arith.constant dense<0xFF800000> : vector<2x8xf32>
    %118 = vector.multi_reduction <maximumf>, %117, %cst_35 [1] : vector<2x8x8xf32> to vector<2x8xf32>
    %119 = vector.shape_cast %118 : vector<2x8xf32> to vector<2x1x8xf32>
    %c1 = arith.constant 1 : index
    %120 = memref.load %arg0[%c1] : memref<8xf32, #tpu.memory_space<smem>>
    %121 = vector.broadcast %120 : f32 to vector<2x1x8xf32>
    %122 = arith.mulf %119, %121 : vector<2x1x8xf32>
    %123 = arith.addf %107, %122 : vector<2x1x8xf32>
    %124 = vector.broadcast %119 : vector<2x1x8xf32> to vector<2x8x8xf32>
    %125 = arith.cmpf oeq, %117, %124 : vector<2x8x8xf32>
    %c8_i32_36 = arith.constant 8 : i32
    %126 = vector.broadcast %c8_i32_36 : i32 to vector<2x8x8xi32>
    %127 = arith.select %125, %97, %126 : vector<2x8x8xi1>, vector<2x8x8xi32>
    %cst_37 = arith.constant dense<2147483647> : vector<2x8xi32>
    %128 = vector.multi_reduction <minsi>, %127, %cst_37 [1] : vector<2x8x8xi32> to vector<2x8xi32>
    %129 = vector.shape_cast %128 : vector<2x8xi32> to vector<2x1x8xi32>
    %130 = vector.broadcast %129 : vector<2x1x8xi32> to vector<2x8x8xi32>
    %131 = arith.cmpi eq, %97, %130 : vector<2x8x8xi32>
    %cst_38 = arith.constant -1.000000e+30 : f32
    %132 = vector.broadcast %cst_38 : f32 to vector<2x8x8xf32>
    %133 = arith.select %131, %132, %117 : vector<2x8x8xi1>, vector<2x8x8xf32>
    %cst_39 = arith.constant dense<0xFF800000> : vector<2x8xf32>
    %134 = vector.multi_reduction <maximumf>, %133, %cst_39 [1] : vector<2x8x8xf32> to vector<2x8xf32>
    %135 = vector.shape_cast %134 : vector<2x8xf32> to vector<2x1x8xf32>
    %c2 = arith.constant 2 : index
    %136 = memref.load %arg0[%c2] : memref<8xf32, #tpu.memory_space<smem>>
    %137 = vector.broadcast %136 : f32 to vector<2x1x8xf32>
    %138 = arith.mulf %135, %137 : vector<2x1x8xf32>
    %139 = arith.addf %123, %138 : vector<2x1x8xf32>
    %cst_40 = arith.constant 0.000000e+00 : f32
    %140 = vector.broadcast %cst_40 : f32 to vector<2x8xf32>
    %141 = arith.cmpf oeq, %3, %140 : vector<2x8xf32>
    %cst_41 = arith.constant -9.99999995E+11 : f32
    %142 = vector.broadcast %cst_41 : f32 to vector<2x8xf32>
    %143 = arith.select %141, %142, %3 : vector<2x8xi1>, vector<2x8xf32>
    %cst_42 = arith.constant dense<0xFF800000> : vector<2xf32>
    %144 = vector.multi_reduction <maximumf>, %143, %cst_42 [1] : vector<2x8xf32> to vector<2xf32>
    %145 = vector.shape_cast %144 : vector<2xf32> to vector<2x1xf32>
    %146 = vector.broadcast %145 : vector<2x1xf32> to vector<2x8xf32>
    %147 = arith.subf %143, %146 : vector<2x8xf32>
    %148 = math.exp %147 : vector<2x8xf32>
    %cst_43 = arith.constant dense<0.000000e+00> : vector<2xf32>
    %149 = vector.multi_reduction <add>, %148, %cst_43 [1] : vector<2x8xf32> to vector<2xf32>
    %150 = vector.shape_cast %149 : vector<2xf32> to vector<2x1xf32>
    %151 = vector.broadcast %150 : vector<2x1xf32> to vector<2x8xf32>
    %152 = arith.divf %148, %151 : vector<2x8xf32>
    %153 = vector.shape_cast %139 : vector<2x1x8xf32> to vector<2x8xf32>
    %154 = arith.mulf %153, %152 : vector<2x8xf32>
    %cst_44 = arith.constant dense<0.000000e+00> : vector<2xf32>
    %155 = vector.multi_reduction <add>, %154, %cst_44 [1] : vector<2x8xf32> to vector<2xf32>
    %156 = vector.shape_cast %155 : vector<2xf32> to vector<2x1xf32>
    %c0_45 = arith.constant 0 : index
    %c0_46 = arith.constant 0 : index
    %157 = vector.load %arg6[%c0_45, %c0_46] : memref<2x1xf32, #tpu.memory_space<vmem>>, vector<2x1xf32>
    tpu.vector_store %arg6[%c0_45, %c0_46], %156 {strides = array<i32>} : memref<2x1xf32, #tpu.memory_space<vmem>>, vector<2x1xf32>,
    return
  }
}

</mosaic_0001>

<llo_original>
// kernel: tpu_custom_call.1
$region0: #{tpu_custom_call.1}
  #allocation0 [shape = 'u32[]', space=smem, size = 0x4, offset = 0x4, fixed_abs, tag = 'smem constant byte address 0x4 - core index']
  #allocation1 [shape = 'u32[144,128]{1,0:T(1,128)}', space=vmem, size = 0x12000, scoped, tag = 'internal scratch']
  %s0 = inlined_call_operand.vmem [shape: f32[8], index: 0, kind: input, shape index: {}]
  %s1 = inlined_call_operand.vmem [shape: f32[2,9], index: 1, kind: input, shape index: {}]
  %s2 = inlined_call_operand.vmem [shape: f32[2,8,32], index: 2, kind: input, shape index: {}]
  %s3 = inlined_call_operand.hbm [shape: f32[2,8,16,32], index: 3, kind: input, shape index: {}]
  %s4 = inlined_call_operand.vmem [shape: f32[2,8], index: 4, kind: input, shape index: {}]
  %s5 = inlined_call_operand.vmem [shape: f32[67,32], index: 5, kind: input, shape index: {}]
  %s6 = inlined_call_operand.vmem [shape: f32[2,1], index: 6, kind: output, shape index: {}]
  %s7 = sld [smem:[#allocation0]]
  $region42: #{tpu_custom_call.1} parent=0
    _
  %s9 = ssub.s32 1, %s7
  %s10 = scalar_select 0, %s9, %s7
  $region1: #{tpu_custom_call.1} parent=0
    #allocation2 [shape = 'u8[512]{0}', space=smem, size = 0x200, scoped, tag = 'input window, operand 0, single buffered']
    #allocation3 [shape = 's32[1]{0}', space=sflag, size = 0x4, scoped, tag = 'scoped memory for tpu_custom_call.1']
    #allocation4 [shape = 's32[1]{0}', space=sflag, size = 0x4, scoped, tag = 'scoped memory for tpu_custom_call.1']
    #allocation5 [shape = 'u8[131072]{0}', space=vmem, size = 0x20000, scoped, tag = 'input window, operand 3, single buffered']
    %11 = vsyncpa [#allocation4], 0
    %12 = vsyncpa [#allocation3], 0
    // Predicated region
    $region2: #{tpu_custom_call.1} parent=1 // pred_check
      _
    $region3: #{tpu_custom_call.1} parent=1 // pred_check_branch
      %14 = sbr.rel (0) target = $region5
    $region4: #{tpu_custom_call.1} parent=1 // pred_region
      %s16 = ssub.s32 16, 16
      %17 = vsyncadd [#allocation4], %s16
      %s19 = sshll.u32 %s0, 4
      %s20 = int_to_ptr.vmem [resolvable:$true] %s19
      %22 = dma.vmem_to_smem %s20, 16, [#allocation2], [#allocation4]
    $region5: #{tpu_custom_call.1} parent=1 // pred_fallthru
      _
    // Predicated region
    $region6: #{tpu_custom_call.1} parent=1 // pred_check
      _
    $region7: #{tpu_custom_call.1} parent=1 // pred_check_branch
      %24 = sbr.rel (0) target = $region9
    $region8: #{tpu_custom_call.1} parent=1 // pred_region
      _
    $region9: #{tpu_custom_call.1} parent=1 // pred_fallthru
      _
    // Predicated region
    $region10: #{tpu_custom_call.1} parent=1 // pred_check
      _
    $region11: #{tpu_custom_call.1} parent=1 // pred_check_branch
      %26 = sbr.rel (0) target = $region13
    $region12: #{tpu_custom_call.1} parent=1 // pred_region
      _
    $region13: #{tpu_custom_call.1} parent=1 // pred_fallthru
      _
    // Predicated region
    $region14: #{tpu_custom_call.1} parent=1 // pred_check
      _
    $region15: #{tpu_custom_call.1} parent=1 // pred_check_branch
      %28 = sbr.rel (0) target = $region17
    $region16: #{tpu_custom_call.1} parent=1 // pred_region
      %s30 = ssub.s32 4096, 4096
      %31 = vsyncadd [#allocation3], %s30
      %s32 = sshll.u32 [#allocation5], 4
      %s33 = int_to_ptr.vmem [resolvable:$true] %s32
      %38 = dma.hbm_to_vmem [thread:$0]  %s3, 4096, %s33, [#allocation3], 128, 128, 8
    $region17: #{tpu_custom_call.1} parent=1 // pred_fallthru
      _
    // Predicated region
    $region18: #{tpu_custom_call.1} parent=1 // pred_check
      _
    $region19: #{tpu_custom_call.1} parent=1 // pred_check_branch
      %40 = sbr.rel (0) target = $region21
    $region20: #{tpu_custom_call.1} parent=1 // pred_region
      _
    $region21: #{tpu_custom_call.1} parent=1 // pred_fallthru
      _
    // Predicated region
    $region22: #{tpu_custom_call.1} parent=1 // pred_check
      _
    $region23: #{tpu_custom_call.1} parent=1 // pred_check_branch
      %42 = sbr.rel (0) target = $region25
    $region24: #{tpu_custom_call.1} parent=1 // pred_region
      _
    $region25: #{tpu_custom_call.1} parent=1 // pred_fallthru
      _
    // Predicated region
    $region26: #{tpu_custom_call.1} parent=1 // pred_check
      _
    $region27: #{tpu_custom_call.1} parent=1 // pred_check_branch
      %44 = sbr.rel (0) target = $region29
    $region28: #{tpu_custom_call.1} parent=1 // pred_region
      %45 = dma.done [#allocation4], 16
    $region29: #{tpu_custom_call.1} parent=1 // pred_fallthru
      _
    // Predicated region
    $region30: #{tpu_custom_call.1} parent=1 // pred_check
      _
    $region31: #{tpu_custom_call.1} parent=1 // pred_check_branch
      %47 = sbr.rel (0) target = $region33
    $region32: #{tpu_custom_call.1} parent=1 // pred_region
      %48 = dma.done [#allocation3], 4096
    $region33: #{tpu_custom_call.1} parent=1 // pred_fallthru
      _
    %49 = sfence
    %v50 = vld [vmem:[%s2] sm:$0xff]
    %v51 = vld [vmem:[%s2 + $0x8] sm:$0xff]
    %v52 = vld [vmem:[#allocation5] sm:$0xff]
    %v53 = vld [vmem:[#allocation5 + $0x8] sm:$0xff]
    %v54 = vld [vmem:[#allocation5 + $0x10] sm:$0xff]
    %v55 = vld [vmem:[#allocation5 + $0x18] sm:$0xff]
    %v56 = vld [vmem:[#allocation5 + $0x20] sm:$0xff]
    %v57 = vld [vmem:[#allocation5 + $0x28] sm:$0xff]
    %v58 = vld [vmem:[#allocation5 + $0x30] sm:$0xff]
    %v59 = vld [vmem:[#allocation5 + $0x38] sm:$0xff]
    %v60 = vld [vmem:[#allocation5 + $0x40] sm:$0xff]
    %v61 = vld [vmem:[#allocation5 + $0x48] sm:$0xff]
    %v62 = vld [vmem:[#allocation5 + $0x50] sm:$0xff]
    %v63 = vld [vmem:[#allocation5 + $0x58] sm:$0xff]
    %v64 = vld [vmem:[#allocation5 + $0x60] sm:$0xff]
    %v65 = vld [vmem:[#allocation5 + $0x68] sm:$0xff]
    %v66 = vld [vmem:[#allocation5 + $0x70] sm:$0xff]
    %v67 = vld [vmem:[#allocation5 + $0x78] sm:$0xff]
    %v68 = vld [vmem:[#allocation5 + $0x80] sm:$0xff]
    %v69 = vld [vmem:[#allocation5 + $0x88] sm:$0xff]
    %v70 = vld [vmem:[#allocation5 + $0x90] sm:$0xff]
    %v71 = vld [vmem:[#allocation5 + $0x98] sm:$0xff]
    %v72 = vld [vmem:[#allocation5 + $0xa0] sm:$0xff]
    %v73 = vld [vmem:[#allocation5 + $0xa8] sm:$0xff]
    %v74 = vld [vmem:[#allocation5 + $0xb0] sm:$0xff]
    %v75 = vld [vmem:[#allocation5 + $0xb8] sm:$0xff]
    %v76 = vld [vmem:[#allocation5 + $0xc0] sm:$0xff]
    %v77 = vld [vmem:[#allocation5 + $0xc8] sm:$0xff]
    %v78 = vld [vmem:[#allocation5 + $0xd0] sm:$0xff]
    %v79 = vld [vmem:[#allocation5 + $0xd8] sm:$0xff]
    %v80 = vld [vmem:[#allocation5 + $0xe0] sm:$0xff]
    %v81 = vld [vmem:[#allocation5 + $0xe8] sm:$0xff]
    %v82 = vld [vmem:[#allocation5 + $0xf0] sm:$0xff]
    %v83 = vld [vmem:[#allocation5 + $0xf8] sm:$0xff]
    %v84 = vld [vmem:[%s1] sm:$0x3]
    %v85 = vld [vmem:[%s4] sm:$0x3]
    %v86 = vlaneseq
    %v87 = vand.u32 %v86, 127
    %v88 = vcvt.s32.f32 %v87
    %v89 = vlaneseq
    %v90 = vshrl.u32 %v89, 7
    %v91 = vsub.s32 0, %v90
    %v92 = vrot.slane %v84, %v91
    %94 = vbcast.lane.b32.xlu0 %v92, 256
    %v95 = vpop.permute.xlu0 %94
    %v96 = vlaneseq
    %v97 = vshrl.u32 %v96, 7
    %v98 = vsub.s32 1, %v97
    %v99 = vrot.slane %v84, %v98
    %101 = vbcast.lane.b32.xlu0 %v99, 256
    %v102 = vpop.permute.xlu0 %101
    %vm103 = vcmp.lt.f32.partialorder %v88, %v95
    %vm104 = vcmp.lt.f32.partialorder %v88, %v102
    %v105 = vsel %vm103, 0.0, 1e+12
    %v106 = vsel %vm104, 0.0, 1e+12
    %108 = vset.pattern.permute.xlu0 8
    %109 = vperm.xlu0 %108, %v84
    %v110 = vpop.permute.xlu0 %109
    %vm112 = vcmp.lt.f32.partialorder %v88, %v110
    %v113 = vsel %vm112, 1.0, 0.0
    %v116 = vcombine.high %v105, %v105
    %v118 = vunpack.c.l.s4 1966171168
    %v119 = vunpack.c.0.s8 %v118
    %v120 = vlaneseq
    %v121 = vshrl.u32 %v120, 7
    %v122 = vsub.s32 %v119, %v121
    %v123 = vrot.slane %v105, %v122
    %v125 = vunpack.c.l.s4 1966171168
    %v126 = vunpack.c.0.s8 %v125
    %v127 = vlaneseq
    %v128 = vshrl.u32 %v127, 7
    %v129 = vsub.s32 %v126, %v128
    %v130 = vrot.slane %v116, %v129
    %v131 = vcombine.high %v123, %v123
    %v132 = vcombine.high %v130, %v130
    %v134 = vunpack.c.l.s4 1966171168
    %v135 = vunpack.c.0.s8 %v134
    %v136 = vlaneseq
    %v137 = vshrl.u32 %v136, 7
    %v138 = vsub.s32 %v135, %v137
    %v139 = vrot.slane %v123, %v138
    %v141 = vunpack.c.l.s4 1966171168
    %v142 = vunpack.c.0.s8 %v141
    %v143 = vlaneseq
    %v144 = vshrl.u32 %v143, 7
    %v145 = vsub.s32 %v142, %v144
    %v146 = vrot.slane %v130, %v145
    %v148 = vunpack.c.l.s4 1966171168
    %v149 = vunpack.c.0.s8 %v148
    %v150 = vlaneseq
    %v151 = vshrl.u32 %v150, 7
    %v152 = vsub.s32 %v149, %v151
    %v153 = vrot.slane %v131, %v152
    %v155 = vunpack.c.l.s4 1966171168
    %v156 = vunpack.c.0.s8 %v155
    %v157 = vlaneseq
    %v158 = vshrl.u32 %v157, 7
    %v159 = vsub.s32 %v156, %v158
    %v160 = vrot.slane %v132, %v159
    %v161 = vcombine.high %v139, %v139
    %v162 = vcombine.high %v146, %v146
    %v163 = vcombine.high %v153, %v153
    %v164 = vcombine.high %v160, %v160
    %v165 = vcombine.high %v106, %v106
    %v167 = vunpack.c.l.s4 1966171168
    %v168 = vunpack.c.0.s8 %v167
    %v169 = vlaneseq
    %v170 = vshrl.u32 %v169, 7
    %v171 = vsub.s32 %v168, %v170
    %v172 = vrot.slane %v106, %v171
    %v174 = vunpack.c.l.s4 1966171168
    %v175 = vunpack.c.0.s8 %v174
    %v176 = vlaneseq
    %v177 = vshrl.u32 %v176, 7
    %v178 = vsub.s32 %v175, %v177
    %v179 = vrot.slane %v165, %v178
    %v180 = vcombine.high %v172, %v172
    %v181 = vcombine.high %v179, %v179
    %v183 = vunpack.c.l.s4 1966171168
    %v184 = vunpack.c.0.s8 %v183
    %v185 = vlaneseq
    %v186 = vshrl.u32 %v185, 7
    %v187 = vsub.s32 %v184, %v186
    %v188 = vrot.slane %v172, %v187
    %v190 = vunpack.c.l.s4 1966171168
    %v191 = vunpack.c.0.s8 %v190
    %v192 = vlaneseq
    %v193 = vshrl.u32 %v192, 7
    %v194 = vsub.s32 %v191, %v193
    %v195 = vrot.slane %v179, %v194
    %v197 = vunpack.c.l.s4 1966171168
    %v198 = vunpack.c.0.s8 %v197
    %v199 = vlaneseq
    %v200 = vshrl.u32 %v199, 7
    %v201 = vsub.s32 %v198, %v200
    %v202 = vrot.slane %v180, %v201
    %v204 = vunpack.c.l.s4 1966171168
    %v205 = vunpack.c.0.s8 %v204
    %v206 = vlaneseq
    %v207 = vshrl.u32 %v206, 7
    %v208 = vsub.s32 %v205, %v207
    %v209 = vrot.slane %v181, %v208
    %v210 = vcombine.high %v188, %v188
    %v211 = vcombine.high %v195, %v195
    %v212 = vcombine.high %v202, %v202
    %v213 = vcombine.high %v209, %v209
    %vm214 = vcmask 261120
    %v216 = vsel %vm214, %v50, 0
    %v219 = vsel %vm214, %v52, 0
    %v222 = vsel %vm214, %v53, 0
    %224 = vmatprep.subr.mxu0 0.0
    %225 = vmatpush1.xpose.msra.mxu0 0.0
    %226 = vmatprep.subr.mxu0 0.0
    %227 = vmatpush1.xpose.msra.mxu0 0.0
    %228 = vmatprep.subr.mxu0 0.0
    %229 = vmatpush1.xpose.msra.mxu0 0.0
    %230 = vmatprep.subr.mxu0 0.0
    %231 = vmatpush1.xpose.msra.mxu0 0.0
    %232 = vmatprep.subr.mxu0 0.0
    %233 = vmatpush1.xpose.msra.mxu0 0.0
    %234 = vmatprep.subr.mxu0 0.0
    %235 = vmatpush1.xpose.msra.mxu0 0.0
    %236 = vmatprep.subr.mxu0 0.0
    %237 = vmatpush1.xpose.msra.mxu0 0.0
    %238 = vmatprep.subr.mxu0 0.0
    %239 = vmatpush1.xpose.msra.mxu0 0.0
    %240 = vmatprep.subr.mxu0 0.0
    %241 = vmatpush1.xpose.msra.mxu0 0.0
    %242 = vmatprep.subr.mxu0 0.0
    %243 = vmatpush1.xpose.msra.mxu0 0.0
    %244 = vmatprep.subr.mxu0 0.0
    %245 = vmatpush1.xpose.msra.mxu0 0.0
    %246 = vmatprep.subr.mxu0 0.0
    %247 = vmatpush1.xpose.msra.mxu0 0.0
    %248 = vmatprep.subr.mxu0 0.0
    %249 = vmatpush1.xpose.msra.mxu0 0.0
    %250 = vmatprep.subr.mxu0 0.0
    %251 = vmatpush1.xpose.msra.mxu0 0.0
    %252 = vmatprep.subr.mxu0 0.0
    %253 = vmatpush1.xpose.msra.mxu0 %v222
    %254 = vmatprep.subr.mxu0 0.0
    %255 = vmatpush1.xpose.msra.mxu0 %v219
    %256 = vmatprep.subr.mxu0 0.0
    %257 = vmatpush2.xpose.msra.mxu0 0.0
    %258 = vmatprep.subr.mxu0 0.0
    %259 = vmatpush2.xpose.msra.mxu0 0.0
    %260 = vmatprep.subr.mxu0 0.0
    %261 = vmatpush2.xpose.msra.mxu0 0.0
    %262 = vmatprep.subr.mxu0 0.0
    %263 = vmatpush2.xpose.msra.mxu0 0.0
    %264 = vmatprep.subr.mxu0 0.0
    %265 = vmatpush2.xpose.msra.mxu0 0.0
    %266 = vmatprep.subr.mxu0 0.0
    %267 = vmatpush2.xpose.msra.mxu0 0.0
    %268 = vmatprep.subr.mxu0 0.0
    %269 = vmatpush2.xpose.msra.mxu0 0.0
    %270 = vmatprep.subr.mxu0 0.0
    %271 = vmatpush2.xpose.msra.mxu0 0.0
    %272 = vmatprep.subr.mxu0 0.0
    %273 = vmatpush2.xpose.msra.mxu0 0.0
    %274 = vmatprep.subr.mxu0 0.0
    %275 = vmatpush2.xpose.msra.mxu0 0.0
    %276 = vmatprep.subr.mxu0 0.0
    %277 = vmatpush2.xpose.msra.mxu0 0.0
    %278 = vmatprep.subr.mxu0 0.0
    %279 = vmatpush2.xpose.msra.mxu0 0.0
    %280 = vmatprep.subr.mxu0 0.0
    %281 = vmatpush2.xpose.msra.mxu0 0.0
    %282 = vmatprep.subr.mxu0 0.0
    %283 = vmatpush2.xpose.msra.mxu0 0.0
    %284 = vmatprep.subr.mxu0 0.0
    %285 = vmatpush2.xpose.msra.mxu0 0.0
    %286 = vmatprep.subr.mxu0 0.0
    %287 = vmatpush2.xpose.msra.mxu0 0.0
    %288 = vmatprep.mubr.f32.mxu0 0.0
    %289 = vmatmul.mubr.f32.gmra.mxu0 %v216
    %v290 = vpop.f32.mrf.mxu0
    %v291 = vadd.f32 0.0, %v290
    %v292 = vpop.f32.mrf.mxu0
    %293 = vdwg.mxu0
    %v295 = vsel %vm214, %v54, 0
    %v298 = vsel %vm214, %v55, 0
    %300 = vmatprep.subr.mxu0 0.0
    %301 = vmatpush1.xpose.msra.mxu0 0.0
    %302 = vmatprep.subr.mxu0 0.0
    %303 = vmatpush1.xpose.msra.mxu0 0.0
    %304 = vmatprep.subr.mxu0 0.0
    %305 = vmatpush1.xpose.msra.mxu0 0.0
    %306 = vmatprep.subr.mxu0 0.0
    %307 = vmatpush1.xpose.msra.mxu0 0.0
    %308 = vmatprep.subr.mxu0 0.0
    %309 = vmatpush1.xpose.msra.mxu0 0.0
    %310 = vmatprep.subr.mxu0 0.0
    %311 = vmatpush1.xpose.msra.mxu0 0.0
    %312 = vmatprep.subr.mxu0 0.0
    %313 = vmatpush1.xpose.msra.mxu0 0.0
    %314 = vmatprep.subr.mxu0 0.0
    %315 = vmatpush1.xpose.msra.mxu0 0.0
    %316 = vmatprep.subr.mxu0 0.0
    %317 = vmatpush1.xpose.msra.mxu0 0.0
    %318 = vmatprep.subr.mxu0 0.0
    %319 = vmatpush1.xpose.msra.mxu0 0.0
    %320 = vmatprep.subr.mxu0 0.0
    %321 = vmatpush1.xpose.msra.mxu0 0.0
    %322 = vmatprep.subr.mxu0 0.0
    %323 = vmatpush1.xpose.msra.mxu0 0.0
    %324 = vmatprep.subr.mxu0 0.0
    %325 = vmatpush1.xpose.msra.mxu0 0.0
    %326 = vmatprep.subr.mxu0 0.0
    %327 = vmatpush1.xpose.msra.mxu0 0.0
    %328 = vmatprep.subr.mxu0 0.0
    %329 = vmatpush1.xpose.msra.mxu0 %v298
    %330 = vmatprep.subr.mxu0 0.0
    %331 = vmatpush1.xpose.msra.mxu0 %v295
    %332 = vmatprep.subr.mxu0 0.0
    %333 = vmatpush2.xpose.msra.mxu0 0.0
    %334 = vmatprep.subr.mxu0 0.0
    %335 = vmatpush2.xpose.msra.mxu0 0.0
    %336 = vmatprep.subr.mxu0 0.0
    %337 = vmatpush2.xpose.msra.mxu0 0.0
    %338 = vmatprep.subr.mxu0 0.0
    %339 = vmatpush2.xpose.msra.mxu0 0.0
    %340 = vmatprep.subr.mxu0 0.0
    %341 = vmatpush2.xpose.msra.mxu0 0.0
    %342 = vmatprep.subr.mxu0 0.0
    %343 = vmatpush2.xpose.msra.mxu0 0.0
    %344 = vmatprep.subr.mxu0 0.0
    %345 = vmatpush2.xpose.msra.mxu0 0.0
    %346 = vmatprep.subr.mxu0 0.0
    %347 = vmatpush2.xpose.msra.mxu0 0.0
    %348 = vmatprep.subr.mxu0 0.0
    %349 = vmatpush2.xpose.msra.mxu0 0.0
    %350 = vmatprep.subr.mxu0 0.0
    %351 = vmatpush2.xpose.msra.mxu0 0.0
    %352 = vmatprep.subr.mxu0 0.0
    %353 = vmatpush2.xpose.msra.mxu0 0.0
    %354 = vmatprep.subr.mxu0 0.0
    %355 = vmatpush2.xpose.msra.mxu0 0.0
    %356 = vmatprep.subr.mxu0 0.0
    %357 = vmatpush2.xpose.msra.mxu0 0.0
    %358 = vmatprep.subr.mxu0 0.0
    %359 = vmatpush2.xpose.msra.mxu0 0.0
    %360 = vmatprep.subr.mxu0 0.0
    %361 = vmatpush2.xpose.msra.mxu0 0.0
    %362 = vmatprep.subr.mxu0 0.0
    %363 = vmatpush2.xpose.msra.mxu0 0.0
    %364 = vmatprep.mubr.f32.mxu0 0.0
    %365 = vmatmul.mubr.f32.gmra.mxu0 %v216
    %v366 = vpop.f32.mrf.mxu0
    %v367 = vadd.f32 0.0, %v366
    %v368 = vpop.f32.mrf.mxu0
    %369 = vdwg.mxu0
    %v371 = vsel %vm214, %v56, 0
    %v374 = vsel %vm214, %v57, 0
    %376 = vmatprep.subr.mxu0 0.0
    %377 = vmatpush1.xpose.msra.mxu0 0.0
    %378 = vmatprep.subr.mxu0 0.0
    %379 = vmatpush1.xpose.msra.mxu0 0.0
    %380 = vmatprep.subr.mxu0 0.0
    %381 = vmatpush1.xpose.msra.mxu0 0.0
    %382 = vmatprep.subr.mxu0 0.0
    %383 = vmatpush1.xpose.msra.mxu0 0.0
    %384 = vmatprep.subr.mxu0 0.0
    %385 = vmatpush1.xpose.msra.mxu0 0.0
    %386 = vmatprep.subr.mxu0 0.0
    %387 = vmatpush1.xpose.msra.mxu0 0.0
    %388 = vmatprep.subr.mxu0 0.0
    %389 = vmatpush1.xpose.msra.mxu0 0.0
    %390 = vmatprep.subr.mxu0 0.0
    %391 = vmatpush1.xpose.msra.mxu0 0.0
    %392 = vmatprep.subr.mxu0 0.0
    %393 = vmatpush1.xpose.msra.mxu0 0.0
    %394 = vmatprep.subr.mxu0 0.0
    %395 = vmatpush1.xpose.msra.mxu0 0.0
    %396 = vmatprep.subr.mxu0 0.0
    %397 = vmatpush1.xpose.msra.mxu0 0.0
    %398 = vmatprep.subr.mxu0 0.0
    %399 = vmatpush1.xpose.msra.mxu0 0.0
    %400 = vmatprep.subr.mxu0 0.0
    %401 = vmatpush1.xpose.msra.mxu0 0.0
    %402 = vmatprep.subr.mxu0 0.0
    %403 = vmatpush1.xpose.msra.mxu0 0.0
    %404 = vmatprep.subr.mxu0 0.0
    %405 = vmatpush1.xpose.msra.mxu0 %v374
    %406 = vmatprep.subr.mxu0 0.0
    %407 = vmatpush1.xpose.msra.mxu0 %v371
    %408 = vmatprep.subr.mxu0 0.0
    %409 = vmatpush2.xpose.msra.mxu0 0.0
    %410 = vmatprep.subr.mxu0 0.0
    %411 = vmatpush2.xpose.msra.mxu0 0.0
    %412 = vmatprep.subr.mxu0 0.0
    %413 = vmatpush2.xpose.msra.mxu0 0.0
    %414 = vmatprep.subr.mxu0 0.0
    %415 = vmatpush2.xpose.msra.mxu0 0.0
    %416 = vmatprep.subr.mxu0 0.0
    %417 = vmatpush2.xpose.msra.mxu0 0.0
    %418 = vmatprep.subr.mxu0 0.0
    %419 = vmatpush2.xpose.msra.mxu0 0.0
    %420 = vmatprep.subr.mxu0 0.0
    %421 = vmatpush2.xpose.msra.mxu0 0.0
    %422 = vmatprep.subr.mxu0 0.0
    %423 = vmatpush2.xpose.msra.mxu0 0.0
    %424 = vmatprep.subr.mxu0 0.0
    %425 = vmatpush2.xpose.msra.mxu0 0.0
    %426 = vmatprep.subr.mxu0 0.0
    %427 = vmatpush2.xpose.msra.mxu0 0.0
    %428 = vmatprep.subr.mxu0 0.0
    %429 = vmatpush2.xpose.msra.mxu0 0.0
    %430 = vmatprep.subr.mxu0 0.0
    %431 = vmatpush2.xpose.msra.mxu0 0.0
    %432 = vmatprep.subr.mxu0 0.0
    %433 = vmatpush2.xpose.msra.mxu0 0.0
    %434 = vmatprep.subr.mxu0 0.0
    %435 = vmatpush2.xpose.msra.mxu0 0.0
    %436 = vmatprep.subr.mxu0 0.0
    %437 = vmatpush2.xpose.msra.mxu0 0.0
    %438 = vmatprep.subr.mxu0 0.0
    %439 = vmatpush2.xpose.msra.mxu0 0.0
    %440 = vmatprep.mubr.f32.mxu0 0.0
    %441 = vmatmul.mubr.f32.gmra.mxu0 %v216
    %v442 = vpop.f32.mrf.mxu0
    %v443 = vadd.f32 0.0, %v442
    %v444 = vpop.f32.mrf.mxu0
    %445 = vdwg.mxu0
    %v447 = vsel %vm214, %v58, 0
    %v450 = vsel %vm214, %v59, 0
    %452 = vmatprep.subr.mxu0 0.0
    %453 = vmatpush1.xpose.msra.mxu0 0.0
    %454 = vmatprep.subr.mxu0 0.0
    %455 = vmatpush1.xpose.msra.mxu0 0.0
    %456 = vmatprep.subr.mxu0 0.0
    %457 = vmatpush1.xpose.msra.mxu0 0.0
    %458 = vmatprep.subr.mxu0 0.0
    %459 = vmatpush1.xpose.msra.mxu0 0.0
    %460 = vmatprep.subr.mxu0 0.0
    %461 = vmatpush1.xpose.msra.mxu0 0.0
    %462 = vmatprep.subr.mxu0 0.0
    %463 = vmatpush1.xpose.msra.mxu0 0.0
    %464 = vmatprep.subr.mxu0 0.0
    %465 = vmatpush1.xpose.msra.mxu0 0.0
    %466 = vmatprep.subr.mxu0 0.0
    %467 = vmatpush1.xpose.msra.mxu0 0.0
    %468 = vmatprep.subr.mxu0 0.0
    %469 = vmatpush1.xpose.msra.mxu0 0.0
    %470 = vmatprep.subr.mxu0 0.0
    %471 = vmatpush1.xpose.msra.mxu0 0.0
    %472 = vmatprep.subr.mxu0 0.0
    %473 = vmatpush1.xpose.msra.mxu0 0.0
    %474 = vmatprep.subr.mxu0 0.0
    %475 = vmatpush1.xpose.msra.mxu0 0.0
    %476 = vmatprep.subr.mxu0 0.0
    %477 = vmatpush1.xpose.msra.mxu0 0.0
    %478 = vmatprep.subr.mxu0 0.0
    %479 = vmatpush1.xpose.msra.mxu0 0.0
    %480 = vmatprep.subr.mxu0 0.0
    %481 = vmatpush1.xpose.msra.mxu0 %v450
    %482 = vmatprep.subr.mxu0 0.0
    %483 = vmatpush1.xpose.msra.mxu0 %v447
    %484 = vmatprep.subr.mxu0 0.0
    %485 = vmatpush2.xpose.msra.mxu0 0.0
    %486 = vmatprep.subr.mxu0 0.0
    %487 = vmatpush2.xpose.msra.mxu0 0.0
    %488 = vmatprep.subr.mxu0 0.0
    %489 = vmatpush2.xpose.msra.mxu0 0.0
    %490 = vmatprep.subr.mxu0 0.0
    %491 = vmatpush2.xpose.msra.mxu0 0.0
    %492 = vmatprep.subr.mxu0 0.0
    %493 = vmatpush2.xpose.msra.mxu0 0.0
    %494 = vmatprep.subr.mxu0 0.0
    %495 = vmatpush2.xpose.msra.mxu0 0.0
    %496 = vmatprep.subr.mxu0 0.0
    %497 = vmatpush2.xpose.msra.mxu0 0.0
    %498 = vmatprep.subr.mxu0 0.0
    %499 = vmatpush2.xpose.msra.mxu0 0.0
    %500 = vmatprep.subr.mxu0 0.0
    %501 = vmatpush2.xpose.msra.mxu0 0.0
    %502 = vmatprep.subr.mxu0 0.0
    %503 = vmatpush2.xpose.msra.mxu0 0.0
    %504 = vmatprep.subr.mxu0 0.0
    %505 = vmatpush2.xpose.msra.mxu0 0.0
    %506 = vmatprep.subr.mxu0 0.0
    %507 = vmatpush2.xpose.msra.mxu0 0.0
    %508 = vmatprep.subr.mxu0 0.0
    %509 = vmatpush2.xpose.msra.mxu0 0.0
    %510 = vmatprep.subr.mxu0 0.0
    %511 = vmatpush2.xpose.msra.mxu0 0.0
    %512 = vmatprep.subr.mxu0 0.0
    %513 = vmatpush2.xpose.msra.mxu0 0.0
    %514 = vmatprep.subr.mxu0 0.0
    %515 = vmatpush2.xpose.msra.mxu0 0.0
    %516 = vmatprep.mubr.f32.mxu0 0.0
    %517 = vmatmul.mubr.f32.gmra.mxu0 %v216
    %v518 = vpop.f32.mrf.mxu0
    %v519 = vadd.f32 0.0, %v518
    %v520 = vpop.f32.mrf.mxu0
    %521 = vdwg.mxu0
    %v523 = vsel %vm214, %v60, 0
    %v526 = vsel %vm214, %v61, 0
    %528 = vmatprep.subr.mxu0 0.0
    %529 = vmatpush1.xpose.msra.mxu0 0.0
    %530 = vmatprep.subr.mxu0 0.0
    %531 = vmatpush1.xpose.msra.mxu0 0.0
    %532 = vmatprep.subr.mxu0 0.0
    %533 = vmatpush1.xpose.msra.mxu0 0.0
    %534 = vmatprep.subr.mxu0 0.0
    %535 = vmatpush1.xpose.msra.mxu0 0.0
    %536 = vmatprep.subr.mxu0 0.0
    %537 = vmatpush1.xpose.msra.mxu0 0.0
    %538 = vmatprep.subr.mxu0 0.0
    %539 = vmatpush1.xpose.msra.mxu0 0.0
    %540 = vmatprep.subr.mxu0 0.0
    %541 = vmatpush1.xpose.msra.mxu0 0.0
    %542 = vmatprep.subr.mxu0 0.0
    %543 = vmatpush1.xpose.msra.mxu0 0.0
    %544 = vmatprep.subr.mxu0 0.0
    %545 = vmatpush1.xpose.msra.mxu0 0.0
    %546 = vmatprep.subr.mxu0 0.0
    %547 = vmatpush1.xpose.msra.mxu0 0.0
    %548 = vmatprep.subr.mxu0 0.0
    %549 = vmatpush1.xpose.msra.mxu0 0.0
    %550 = vmatprep.subr.mxu0 0.0
    %551 = vmatpush1.xpose.msra.mxu0 0.0
    %552 = vmatprep.subr.mxu0 0.0
    %553 = vmatpush1.xpose.msra.mxu0 0.0
    %554 = vmatprep.subr.mxu0 0.0
    %555 = vmatpush1.xpose.msra.mxu0 0.0
    %556 = vmatprep.subr.mxu0 0.0
    %557 = vmatpush1.xpose.msra.mxu0 %v526
    %558 = vmatprep.subr.mxu0 0.0
    %559 = vmatpush1.xpose.msra.mxu0 %v523
    %560 = vmatprep.subr.mxu0 0.0
    %561 = vmatpush2.xpose.msra.mxu0 0.0
    %562 = vmatprep.subr.mxu0 0.0
    %563 = vmatpush2.xpose.msra.mxu0 0.0
    %564 = vmatprep.subr.mxu0 0.0
    %565 = vmatpush2.xpose.msra.mxu0 0.0
    %566 = vmatprep.subr.mxu0 0.0
    %567 = vmatpush2.xpose.msra.mxu0 0.0
    %568 = vmatprep.subr.mxu0 0.0
    %569 = vmatpush2.xpose.msra.mxu0 0.0
    %570 = vmatprep.subr.mxu0 0.0
    %571 = vmatpush2.xpose.msra.mxu0 0.0
    %572 = vmatprep.subr.mxu0 0.0
    %573 = vmatpush2.xpose.msra.mxu0 0.0
    %574 = vmatprep.subr.mxu0 0.0
    %575 = vmatpush2.xpose.msra.mxu0 0.0
    %576 = vmatprep.subr.mxu0 0.0
    %577 = vmatpush2.xpose.msra.mxu0 0.0
    %578 = vmatprep.subr.mxu0 0.0
    %579 = vmatpush2.xpose.msra.mxu0 0.0
    %580 = vmatprep.subr.mxu0 0.0
    %581 = vmatpush2.xpose.msra.mxu0 0.0
    %582 = vmatprep.subr.mxu0 0.0
    %583 = vmatpush2.xpose.msra.mxu0 0.0
    %584 = vmatprep.subr.mxu0 0.0
    %585 = vmatpush2.xpose.msra.mxu0 0.0
    %586 = vmatprep.subr.mxu0 0.0
    %587 = vmatpush2.xpose.msra.mxu0 0.0
    %588 = vmatprep.subr.mxu0 0.0
    %589 = vmatpush2.xpose.msra.mxu0 0.0
    %590 = vmatprep.subr.mxu0 0.0
    %591 = vmatpush2.xpose.msra.mxu0 0.0
    %592 = vmatprep.mubr.f32.mxu0 0.0
    %593 = vmatmul.mubr.f32.gmra.mxu0 %v216
    %v594 = vpop.f32.mrf.mxu0
    %v595 = vadd.f32 0.0, %v594
    %v596 = vpop.f32.mrf.mxu0
    %597 = vdwg.mxu0
    %v599 = vsel %vm214, %v62, 0
    %v602 = vsel %vm214, %v63, 0
    %604 = vmatprep.subr.mxu0 0.0
    %605 = vmatpush1.xpose.msra.mxu0 0.0
    %606 = vmatprep.subr.mxu0 0.0
    %607 = vmatpush1.xpose.msra.mxu0 0.0
    %608 = vmatprep.subr.mxu0 0.0
    %609 = vmatpush1.xpose.msra.mxu0 0.0
    %610 = vmatprep.subr.mxu0 0.0
    %611 = vmatpush1.xpose.msra.mxu0 0.0
    %612 = vmatprep.subr.mxu0 0.0
    %613 = vmatpush1.xpose.msra.mxu0 0.0
    %614 = vmatprep.subr.mxu0 0.0
    %615 = vmatpush1.xpose.msra.mxu0 0.0
    %616 = vmatprep.subr.mxu0 0.0
    %617 = vmatpush1.xpose.msra.mxu0 0.0
    %618 = vmatprep.subr.mxu0 0.0
    %619 = vmatpush1.xpose.msra.mxu0 0.0
    %620 = vmatprep.subr.mxu0 0.0
    %621 = vmatpush1.xpose.msra.mxu0 0.0
    %622 = vmatprep.subr.mxu0 0.0
    %623 = vmatpush1.xpose.msra.mxu0 0.0
    %624 = vmatprep.subr.mxu0 0.0
    %625 = vmatpush1.xpose.msra.mxu0 0.0
    %626 = vmatprep.subr.mxu0 0.0
    %627 = vmatpush1.xpose.msra.mxu0 0.0
    %628 = vmatprep.subr.mxu0 0.0
    %629 = vmatpush1.xpose.msra.mxu0 0.0
    %630 = vmatprep.subr.mxu0 0.0
    %631 = vmatpush1.xpose.msra.mxu0 0.0
    %632 = vmatprep.subr.mxu0 0.0
    %633 = vmatpush1.xpose.msra.mxu0 %v602
    %634 = vmatprep.subr.mxu0 0.0
    %635 = vmatpush1.xpose.msra.mxu0 %v599
    %636 = vmatprep.subr.mxu0 0.0
    %637 = vmatpush2.xpose.msra.mxu0 0.0
    %638 = vmatprep.subr.mxu0 0.0
    %639 = vmatpush2.xpose.msra.mxu0 0.0
    %640 = vmatprep.subr.mxu0 0.0
    %641 = vmatpush2.xpose.msra.mxu0 0.0
    %642 = vmatprep.subr.mxu0 0.0
    %643 = vmatpush2.xpose.msra.mxu0 0.0
    %644 = vmatprep.subr.mxu0 0.0
    %645 = vmatpush2.xpose.msra.mxu0 0.0
    %646 = vmatprep.subr.mxu0 0.0
    %647 = vmatpush2.xpose.msra.mxu0 0.0
    %648 = vmatprep.subr.mxu0 0.0
    %649 = vmatpush2.xpose.msra.mxu0 0.0
    %650 = vmatprep.subr.mxu0 0.0
    %651 = vmatpush2.xpose.msra.mxu0 0.0
    %652 = vmatprep.subr.mxu0 0.0
    %653 = vmatpush2.xpose.msra.mxu0 0.0
    %654 = vmatprep.subr.mxu0 0.0
    %655 = vmatpush2.xpose.msra.mxu0 0.0
    %656 = vmatprep.subr.mxu0 0.0
    %657 = vmatpush2.xpose.msra.mxu0 0.0
    %658 = vmatprep.subr.mxu0 0.0
    %659 = vmatpush2.xpose.msra.mxu0 0.0
    %660 = vmatprep.subr.mxu0 0.0
    %661 = vmatpush2.xpose.msra.mxu0 0.0
    %662 = vmatprep.subr.mxu0 0.0
    %663 = vmatpush2.xpose.msra.mxu0 0.0
    %664 = vmatprep.subr.mxu0 0.0
    %665 = vmatpush2.xpose.msra.mxu0 0.0
    %666 = vmatprep.subr.mxu0 0.0
    %667 = vmatpush2.xpose.msra.mxu0 0.0
    %668 = vmatprep.mubr.f32.mxu0 0.0
    %669 = vmatmul.mubr.f32.gmra.mxu0 %v216
    %v670 = vpop.f32.mrf.mxu0
    %v671 = vadd.f32 0.0, %v670
    %v672 = vpop.f32.mrf.mxu0
    %673 = vdwg.mxu0
    %v675 = vsel %vm214, %v64, 0
    %v678 = vsel %vm214, %v65, 0
    %680 = vmatprep.subr.mxu0 0.0
    %681 = vmatpush1.xpose.msra.mxu0 0.0
    %682 = vmatprep.subr.mxu0 0.0
    %683 = vmatpush1.xpose.msra.mxu0 0.0
    %684 = vmatprep.subr.mxu0 0.0
    %685 = vmatpush1.xpose.msra.mxu0 0.0
    %686 = vmatprep.subr.mxu0 0.0
    %687 = vmatpush1.xpose.msra.mxu0 0.0
    %688 = vmatprep.subr.mxu0 0.0
    %689 = vmatpush1.xpose.msra.mxu0 0.0
    %690 = vmatprep.subr.mxu0 0.0
    %691 = vmatpush1.xpose.msra.mxu0 0.0
    %692 = vmatprep.subr.mxu0 0.0
    %693 = vmatpush1.xpose.msra.mxu0 0.0
    %694 = vmatprep.subr.mxu0 0.0
    %695 = vmatpush1.xpose.msra.mxu0 0.0
    %696 = vmatprep.subr.mxu0 0.0
    %697 = vmatpush1.xpose.msra.mxu0 0.0
    %698 = vmatprep.subr.mxu0 0.0
    %699 = vmatpush1.xpose.msra.mxu0 0.0
    %700 = vmatprep.subr.mxu0 0.0
    %701 = vmatpush1.xpose.msra.mxu0 0.0
    %702 = vmatprep.subr.mxu0 0.0
    %703 = vmatpush1.xpose.msra.mxu0 0.0
    %704 = vmatprep.subr.mxu0 0.0
    %705 = vmatpush1.xpose.msra.mxu0 0.0
    %706 = vmatprep.subr.mxu0 0.0
    %707 = vmatpush1.xpose.msra.mxu0 0.0
    %708 = vmatprep.subr.mxu0 0.0
    %709 = vmatpush1.xpose.msra.mxu0 %v678
    %710 = vmatprep.subr.mxu0 0.0
    %711 = vmatpush1.xpose.msra.mxu0 %v675
    %712 = vmatprep.subr.mxu0 0.0
    %713 = vmatpush2.xpose.msra.mxu0 0.0
    %714 = vmatprep.subr.mxu0 0.0
    %715 = vmatpush2.xpose.msra.mxu0 0.0
    %716 = vmatprep.subr.mxu0 0.0
    %717 = vmatpush2.xpose.msra.mxu0 0.0
    %718 = vmatprep.subr.mxu0 0.0
    %719 = vmatpush2.xpose.msra.mxu0 0.0
    %720 = vmatprep.subr.mxu0 0.0
    %721 = vmatpush2.xpose.msra.mxu0 0.0
    %722 = vmatprep.subr.mxu0 0.0
    %723 = vmatpush2.xpose.msra.mxu0 0.0
    %724 = vmatprep.subr.mxu0 0.0
    %725 = vmatpush2.xpose.msra.mxu0 0.0
    %726 = vmatprep.subr.mxu0 0.0
    %727 = vmatpush2.xpose.msra.mxu0 0.0
    %728 = vmatprep.subr.mxu0 0.0
    %729 = vmatpush2.xpose.msra.mxu0 0.0
    %730 = vmatprep.subr.mxu0 0.0
    %731 = vmatpush2.xpose.msra.mxu0 0.0
    %732 = vmatprep.subr.mxu0 0.0
    %733 = vmatpush2.xpose.msra.mxu0 0.0
    %734 = vmatprep.subr.mxu0 0.0
    %735 = vmatpush2.xpose.msra.mxu0 0.0
    %736 = vmatprep.subr.mxu0 0.0
    %737 = vmatpush2.xpose.msra.mxu0 0.0
    %738 = vmatprep.subr.mxu0 0.0
    %739 = vmatpush2.xpose.msra.mxu0 0.0
    %740 = vmatprep.subr.mxu0 0.0
    %741 = vmatpush2.xpose.msra.mxu0 0.0
    %742 = vmatprep.subr.mxu0 0.0
    %743 = vmatpush2.xpose.msra.mxu0 0.0
    %744 = vmatprep.mubr.f32.mxu0 0.0
    %745 = vmatmul.mubr.f32.gmra.mxu0 %v216
    %v746 = vpop.f32.mrf.mxu0
    %v747 = vadd.f32 0.0, %v746
    %v748 = vpop.f32.mrf.mxu0
    %749 = vdwg.mxu0
    %v751 = vsel %vm214, %v66, 0
    %v754 = vsel %vm214, %v67, 0
    %756 = vmatprep.subr.mxu0 0.0
    %757 = vmatpush1.xpose.msra.mxu0 0.0
    %758 = vmatprep.subr.mxu0 0.0
    %759 = vmatpush1.xpose.msra.mxu0 0.0
    %760 = vmatprep.subr.mxu0 0.0
    %761 = vmatpush1.xpose.msra.mxu0 0.0
    %762 = vmatprep.subr.mxu0 0.0
    %763 = vmatpush1.xpose.msra.mxu0 0.0
    %764 = vmatprep.subr.mxu0 0.0
    %765 = vmatpush1.xpose.msra.mxu0 0.0
    %766 = vmatprep.subr.mxu0 0.0
    %767 = vmatpush1.xpose.msra.mxu0 0.0
    %768 = vmatprep.subr.mxu0 0.0
    %769 = vmatpush1.xpose.msra.mxu0 0.0
    %770 = vmatprep.subr.mxu0 0.0
    %771 = vmatpush1.xpose.msra.mxu0 0.0
    %772 = vmatprep.subr.mxu0 0.0
    %773 = vmatpush1.xpose.msra.mxu0 0.0
    %774 = vmatprep.subr.mxu0 0.0
    %775 = vmatpush1.xpose.msra.mxu0 0.0
    %776 = vmatprep.subr.mxu0 0.0
    %777 = vmatpush1.xpose.msra.mxu0 0.0
    %778 = vmatprep.subr.mxu0 0.0
    %779 = vmatpush1.xpose.msra.mxu0 0.0
    %780 = vmatprep.subr.mxu0 0.0
    %781 = vmatpush1.xpose.msra.mxu0 0.0
    %782 = vmatprep.subr.mxu0 0.0
    %783 = vmatpush1.xpose.msra.mxu0 0.0
    %784 = vmatprep.subr.mxu0 0.0
    %785 = vmatpush1.xpose.msra.mxu0 %v754
    %786 = vmatprep.subr.mxu0 0.0
    %787 = vmatpush1.xpose.msra.mxu0 %v751
    %788 = vmatprep.subr.mxu0 0.0
    %789 = vmatpush2.xpose.msra.mxu0 0.0
    %790 = vmatprep.subr.mxu0 0.0
    %791 = vmatpush2.xpose.msra.mxu0 0.0
    %792 = vmatprep.subr.mxu0 0.0
    %793 = vmatpush2.xpose.msra.mxu0 0.0
    %794 = vmatprep.subr.mxu0 0.0
    %795 = vmatpush2.xpose.msra.mxu0 0.0
    %796 = vmatprep.subr.mxu0 0.0
    %797 = vmatpush2.xpose.msra.mxu0 0.0
    %798 = vmatprep.subr.mxu0 0.0
    %799 = vmatpush2.xpose.msra.mxu0 0.0
    %800 = vmatprep.subr.mxu0 0.0
    %801 = vmatpush2.xpose.msra.mxu0 0.0
    %802 = vmatprep.subr.mxu0 0.0
    %803 = vmatpush2.xpose.msra.mxu0 0.0
    %804 = vmatprep.subr.mxu0 0.0
    %805 = vmatpush2.xpose.msra.mxu0 0.0
    %806 = vmatprep.subr.mxu0 0.0
    %807 = vmatpush2.xpose.msra.mxu0 0.0
    %808 = vmatprep.subr.mxu0 0.0
    %809 = vmatpush2.xpose.msra.mxu0 0.0
    %810 = vmatprep.subr.mxu0 0.0
    %811 = vmatpush2.xpose.msra.mxu0 0.0
    %812 = vmatprep.subr.mxu0 0.0
    %813 = vmatpush2.xpose.msra.mxu0 0.0
    %814 = vmatprep.subr.mxu0 0.0
    %815 = vmatpush2.xpose.msra.mxu0 0.0
    %816 = vmatprep.subr.mxu0 0.0
    %817 = vmatpush2.xpose.msra.mxu0 0.0
    %818 = vmatprep.subr.mxu0 0.0
    %819 = vmatpush2.xpose.msra.mxu0 0.0
    %820 = vmatprep.mubr.f32.mxu0 0.0
    %821 = vmatmul.mubr.f32.gmra.mxu0 %v216
    %v822 = vpop.f32.mrf.mxu0
    %v823 = vadd.f32 0.0, %v822
    %v824 = vpop.f32.mrf.mxu0
    %825 = vdwg.mxu0
    %v827 = vsel %vm214, %v51, 0
    %v830 = vsel %vm214, %v68, 0
    %v833 = vsel %vm214, %v69, 0
    %835 = vmatprep.subr.mxu0 0.0
    %836 = vmatpush1.xpose.msra.mxu0 0.0
    %837 = vmatprep.subr.mxu0 0.0
    %838 = vmatpush1.xpose.msra.mxu0 0.0
    %839 = vmatprep.subr.mxu0 0.0
    %840 = vmatpush1.xpose.msra.mxu0 0.0
    %841 = vmatprep.subr.mxu0 0.0
    %842 = vmatpush1.xpose.msra.mxu0 0.0
    %843 = vmatprep.subr.mxu0 0.0
    %844 = vmatpush1.xpose.msra.mxu0 0.0
    %845 = vmatprep.subr.mxu0 0.0
    %846 = vmatpush1.xpose.msra.mxu0 0.0
    %847 = vmatprep.subr.mxu0 0.0
    %848 = vmatpush1.xpose.msra.mxu0 0.0
    %849 = vmatprep.subr.mxu0 0.0
    %850 = vmatpush1.xpose.msra.mxu0 0.0
    %851 = vmatprep.subr.mxu0 0.0
    %852 = vmatpush1.xpose.msra.mxu0 0.0
    %853 = vmatprep.subr.mxu0 0.0
    %854 = vmatpush1.xpose.msra.mxu0 0.0
    %855 = vmatprep.subr.mxu0 0.0
    %856 = vmatpush1.xpose.msra.mxu0 0.0
    %857 = vmatprep.subr.mxu0 0.0
    %858 = vmatpush1.xpose.msra.mxu0 0.0
    %859 = vmatprep.subr.mxu0 0.0
    %860 = vmatpush1.xpose.msra.mxu0 0.0
    %861 = vmatprep.subr.mxu0 0.0
    %862 = vmatpush1.xpose.msra.mxu0 0.0
    %863 = vmatprep.subr.mxu0 0.0
    %864 = vmatpush1.xpose.msra.mxu0 %v833
    %865 = vmatprep.subr.mxu0 0.0
    %866 = vmatpush1.xpose.msra.mxu0 %v830
    %867 = vmatprep.subr.mxu0 0.0
    %868 = vmatpush2.xpose.msra.mxu0 0.0
    %869 = vmatprep.subr.mxu0 0.0
    %870 = vmatpush2.xpose.msra.mxu0 0.0
    %871 = vmatprep.subr.mxu0 0.0
    %872 = vmatpush2.xpose.msra.mxu0 0.0
    %873 = vmatprep.subr.mxu0 0.0
    %874 = vmatpush2.xpose.msra.mxu0 0.0
    %875 = vmatprep.subr.mxu0 0.0
    %876 = vmatpush2.xpose.msra.mxu0 0.0
    %877 = vmatprep.subr.mxu0 0.0
    %878 = vmatpush2.xpose.msra.mxu0 0.0
    %879 = vmatprep.subr.mxu0 0.0
    %880 = vmatpush2.xpose.msra.mxu0 0.0
    %881 = vmatprep.subr.mxu0 0.0
    %882 = vmatpush2.xpose.msra.mxu0 0.0
    %883 = vmatprep.subr.mxu0 0.0
    %884 = vmatpush2.xpose.msra.mxu0 0.0
    %885 = vmatprep.subr.mxu0 0.0
    %886 = vmatpush2.xpose.msra.mxu0 0.0
    %887 = vmatprep.subr.mxu0 0.0
    %888 = vmatpush2.xpose.msra.mxu0 0.0
    %889 = vmatprep.subr.mxu0 0.0
    %890 = vmatpush2.xpose.msra.mxu0 0.0
    %891 = vmatprep.subr.mxu0 0.0
    %892 = vmatpush2.xpose.msra.mxu0 0.0
    %893 = vmatprep.subr.mxu0 0.0
    %894 = vmatpush2.xpose.msra.mxu0 0.0
    %895 = vmatprep.subr.mxu0 0.0
    %896 = vmatpush2.xpose.msra.mxu0 0.0
    %897 = vmatprep.subr.mxu0 0.0
    %898 = vmatpush2.xpose.msra.mxu0 0.0
    %899 = vmatprep.mubr.f32.mxu0 0.0
    %900 = vmatmul.mubr.f32.gmra.mxu0 %v827
    %v901 = vpop.f32.mrf.mxu0
    %v902 = vadd.f32 0.0, %v901
    %v903 = vpop.f32.mrf.mxu0
    %904 = vdwg.mxu0
    %v906 = vsel %vm214, %v70, 0
    %v909 = vsel %vm214, %v71, 0
    %911 = vmatprep.subr.mxu0 0.0
    %912 = vmatpush1.xpose.msra.mxu0 0.0
    %913 = vmatprep.subr.mxu0 0.0
    %914 = vmatpush1.xpose.msra.mxu0 0.0
    %915 = vmatprep.subr.mxu0 0.0
    %916 = vmatpush1.xpose.msra.mxu0 0.0
    %917 = vmatprep.subr.mxu0 0.0
    %918 = vmatpush1.xpose.msra.mxu0 0.0
    %919 = vmatprep.subr.mxu0 0.0
    %920 = vmatpush1.xpose.msra.mxu0 0.0
    %921 = vmatprep.subr.mxu0 0.0
    %922 = vmatpush1.xpose.msra.mxu0 0.0
    %923 = vmatprep.subr.mxu0 0.0
    %924 = vmatpush1.xpose.msra.mxu0 0.0
    %925 = vmatprep.subr.mxu0 0.0
    %926 = vmatpush1.xpose.msra.mxu0 0.0
    %927 = vmatprep.subr.mxu0 0.0
    %928 = vmatpush1.xpose.msra.mxu0 0.0
    %929 = vmatprep.subr.mxu0 0.0
    %930 = vmatpush1.xpose.msra.mxu0 0.0
    %931 = vmatprep.subr.mxu0 0.0
    %932 = vmatpush1.xpose.msra.mxu0 0.0
    %933 = vmatprep.subr.mxu0 0.0
    %934 = vmatpush1.xpose.msra.mxu0 0.0
    %935 = vmatprep.subr.mxu0 0.0
    %936 = vmatpush1.xpose.msra.mxu0 0.0
    %937 = vmatprep.subr.mxu0 0.0
    %938 = vmatpush1.xpose.msra.mxu0 0.0
    %939 = vmatprep.subr.mxu0 0.0
    %940 = vmatpush1.xpose.msra.mxu0 %v909
    %941 = vmatprep.subr.mxu0 0.0
    %942 = vmatpush1.xpose.msra.mxu0 %v906
    %943 = vmatprep.subr.mxu0 0.0
    %944 = vmatpush2.xpose.msra.mxu0 0.0
    %945 = vmatprep.subr.mxu0 0.0
    %946 = vmatpush2.xpose.msra.mxu0 0.0
    %947 = vmatprep.subr.mxu0 0.0
    %948 = vmatpush2.xpose.msra.mxu0 0.0
    %949 = vmatprep.subr.mxu0 0.0
    %950 = vmatpush2.xpose.msra.mxu0 0.0
    %951 = vmatprep.subr.mxu0 0.0
    %952 = vmatpush2.xpose.msra.mxu0 0.0
    %953 = vmatprep.subr.mxu0 0.0
    %954 = vmatpush2.xpose.msra.mxu0 0.0
    %955 = vmatprep.subr.mxu0 0.0
    %956 = vmatpush2.xpose.msra.mxu0 0.0
    %957 = vmatprep.subr.mxu0 0.0
    %958 = vmatpush2.xpose.msra.mxu0 0.0
    %959 = vmatprep.subr.mxu0 0.0
    %960 = vmatpush2.xpose.msra.mxu0 0.0
    %961 = vmatprep.subr.mxu0 0.0
    %962 = vmatpush2.xpose.msra.mxu0 0.0
    %963 = vmatprep.subr.mxu0 0.0
    %964 = vmatpush2.xpose.msra.mxu0 0.0
    %965 = vmatprep.subr.mxu0 0.0
    %966 = vmatpush2.xpose.msra.mxu0 0.0
    %967 = vmatprep.subr.mxu0 0.0
    %968 = vmatpush2.xpose.msra.mxu0 0.0
    %969 = vmatprep.subr.mxu0 0.0
    %970 = vmatpush2.xpose.msra.mxu0 0.0
    %971 = vmatprep.subr.mxu0 0.0
    %972 = vmatpush2.xpose.msra.mxu0 0.0
    %973 = vmatprep.subr.mxu0 0.0
    %974 = vmatpush2.xpose.msra.mxu0 0.0
    %975 = vmatprep.mubr.f32.mxu0 0.0
    %976 = vmatmul.mubr.f32.gmra.mxu0 %v827
    %v977 = vpop.f32.mrf.mxu0
    %v978 = vadd.f32 0.0, %v977
    %v979 = vpop.f32.mrf.mxu0
    %980 = vdwg.mxu0
    %v982 = vsel %vm214, %v72, 0
    %v985 = vsel %vm214, %v73, 0
    %987 = vmatprep.subr.mxu0 0.0
    %988 = vmatpush1.xpose.msra.mxu0 0.0
    %989 = vmatprep.subr.mxu0 0.0
    %990 = vmatpush1.xpose.msra.mxu0 0.0
    %991 = vmatprep.subr.mxu0 0.0
    %992 = vmatpush1.xpose.msra.mxu0 0.0
    %993 = vmatprep.subr.mxu0 0.0
    %994 = vmatpush1.xpose.msra.mxu0 0.0
    %995 = vmatprep.subr.mxu0 0.0
    %996 = vmatpush1.xpose.msra.mxu0 0.0
    %997 = vmatprep.subr.mxu0 0.0
    %998 = vmatpush1.xpose.msra.mxu0 0.0
    %999 = vmatprep.subr.mxu0 0.0
    %1000 = vmatpush1.xpose.msra.mxu0 0.0
    %1001 = vmatprep.subr.mxu0 0.0
    %1002 = vmatpush1.xpose.msra.mxu0 0.0
    %1003 = vmatprep.subr.mxu0 0.0
    %1004 = vmatpush1.xpose.msra.mxu0 0.0
    %1005 = vmatprep.subr.mxu0 0.0
    %1006 = vmatpush1.xpose.msra.mxu0 0.0
    %1007 = vmatprep.subr.mxu0 0.0
    %1008 = vmatpush1.xpose.msra.mxu0 0.0
    %1009 = vmatprep.subr.mxu0 0.0
    %1010 = vmatpush1.xpose.msra.mxu0 0.0
    %1011 = vmatprep.subr.mxu0 0.0
    %1012 = vmatpush1.xpose.msra.mxu0 0.0
    %1013 = vmatprep.subr.mxu0 0.0
    %1014 = vmatpush1.xpose.msra.mxu0 0.0
    %1015 = vmatprep.subr.mxu0 0.0
    %1016 = vmatpush1.xpose.msra.mxu0 %v985
    %1017 = vmatprep.subr.mxu0 0.0
    %1018 = vmatpush1.xpose.msra.mxu0 %v982
    %1019 = vmatprep.subr.mxu0 0.0
    %1020 = vmatpush2.xpose.msra.mxu0 0.0
    %1021 = vmatprep.subr.mxu0 0.0
    %1022 = vmatpush2.xpose.msra.mxu0 0.0
    %1023 = vmatprep.subr.mxu0 0.0
    %1024 = vmatpush2.xpose.msra.mxu0 0.0
    %1025 = vmatprep.subr.mxu0 0.0
    %1026 = vmatpush2.xpose.msra.mxu0 0.0
    %1027 = vmatprep.subr.mxu0 0.0
    %1028 = vmatpush2.xpose.msra.mxu0 0.0
    %1029 = vmatprep.subr.mxu0 0.0
    %1030 = vmatpush2.xpose.msra.mxu0 0.0
    %1031 = vmatprep.subr.mxu0 0.0
    %1032 = vmatpush2.xpose.msra.mxu0 0.0
    %1033 = vmatprep.subr.mxu0 0.0
    %1034 = vmatpush2.xpose.msra.mxu0 0.0
    %1035 = vmatprep.subr.mxu0 0.0
    %1036 = vmatpush2.xpose.msra.mxu0 0.0
    %1037 = vmatprep.subr.mxu0 0.0
    %1038 = vmatpush2.xpose.msra.mxu0 0.0
    %1039 = vmatprep.subr.mxu0 0.0
    %1040 = vmatpush2.xpose.msra.mxu0 0.0
    %1041 = vmatprep.subr.mxu0 0.0
    %1042 = vmatpush2.xpose.msra.mxu0 0.0
    %1043 = vmatprep.subr.mxu0 0.0
    %1044 = vmatpush2.xpose.msra.mxu0 0.0
    %1045 = vmatprep.subr.mxu0 0.0
    %1046 = vmatpush2.xpose.msra.mxu0 0.0
    %1047 = vmatprep.subr.mxu0 0.0
    %1048 = vmatpush2.xpose.msra.mxu0 0.0
    %1049 = vmatprep.subr.mxu0 0.0
    %1050 = vmatpush2.xpose.msra.mxu0 0.0
    %1051 = vmatprep.mubr.f32.mxu0 0.0
    %1052 = vmatmul.mubr.f32.gmra.mxu0 %v827
    %v1053 = vpop.f32.mrf.mxu0
    %v1054 = vadd.f32 0.0, %v1053
    %v1055 = vpop.f32.mrf.mxu0
    %1056 = vdwg.mxu0
    %v1058 = vsel %vm214, %v74, 0
    %v1061 = vsel %vm214, %v75, 0
    %1063 = vmatprep.subr.mxu0 0.0
    %1064 = vmatpush1.xpose.msra.mxu0 0.0
    %1065 = vmatprep.subr.mxu0 0.0
    %1066 = vmatpush1.xpose.msra.mxu0 0.0
    %1067 = vmatprep.subr.mxu0 0.0
    %1068 = vmatpush1.xpose.msra.mxu0 0.0
    %1069 = vmatprep.subr.mxu0 0.0
    %1070 = vmatpush1.xpose.msra.mxu0 0.0
    %1071 = vmatprep.subr.mxu0 0.0
    %1072 = vmatpush1.xpose.msra.mxu0 0.0
    %1073 = vmatprep.subr.mxu0 0.0
    %1074 = vmatpush1.xpose.msra.mxu0 0.0
    %1075 = vmatprep.subr.mxu0 0.0
    %1076 = vmatpush1.xpose.msra.mxu0 0.0
    %1077 = vmatprep.subr.mxu0 0.0
    %1078 = vmatpush1.xpose.msra.mxu0 0.0
    %1079 = vmatprep.subr.mxu0 0.0
    %1080 = vmatpush1.xpose.msra.mxu0 0.0
    %1081 = vmatprep.subr.mxu0 0.0
    %1082 = vmatpush1.xpose.msra.mxu0 0.0
    %1083 = vmatprep.subr.mxu0 0.0
    %1084 = vmatpush1.xpose.msra.mxu0 0.0
    %1085 = vmatprep.subr.mxu0 0.0
    %1086 = vmatpush1.xpose.msra.mxu0 0.0
    %1087 = vmatprep.subr.mxu0 0.0
    %1088 = vmatpush1.xpose.msra.mxu0 0.0
    %1089 = vmatprep.subr.mxu0 0.0
    %1090 = vmatpush1.xpose.msra.mxu0 0.0
    %1091 = vmatprep.subr.mxu0 0.0
    %1092 = vmatpush1.xpose.msra.mxu0 %v1061
    %1093 = vmatprep.subr.mxu0 0.0
    %1094 = vmatpush1.xpose.msra.mxu0 %v1058
    %1095 = vmatprep.subr.mxu0 0.0
    %1096 = vmatpush2.xpose.msra.mxu0 0.0
    %1097 = vmatprep.subr.mxu0 0.0
    %1098 = vmatpush2.xpose.msra.mxu0 0.0
    %1099 = vmatprep.subr.mxu0 0.0
    %1100 = vmatpush2.xpose.msra.mxu0 0.0
    %1101 = vmatprep.subr.mxu0 0.0
    %1102 = vmatpush2.xpose.msra.mxu0 0.0
    %1103 = vmatprep.subr.mxu0 0.0
    %1104 = vmatpush2.xpose.msra.mxu0 0.0
    %1105 = vmatprep.subr.mxu0 0.0
    %1106 = vmatpush2.xpose.msra.mxu0 0.0
    %1107 = vmatprep.subr.mxu0 0.0
    %1108 = vmatpush2.xpose.msra.mxu0 0.0
    %1109 = vmatprep.subr.mxu0 0.0
    %1110 = vmatpush2.xpose.msra.mxu0 0.0
    %1111 = vmatprep.subr.mxu0 0.0
    %1112 = vmatpush2.xpose.msra.mxu0 0.0
    %1113 = vmatprep.subr.mxu0 0.0
    %1114 = vmatpush2.xpose.msra.mxu0 0.0
    %1115 = vmatprep.subr.mxu0 0.0
    %1116 = vmatpush2.xpose.msra.mxu0 0.0
    %1117 = vmatprep.subr.mxu0 0.0
    %1118 = vmatpush2.xpose.msra.mxu0 0.0
    %1119 = vmatprep.subr.mxu0 0.0
    %1120 = vmatpush2.xpose.msra.mxu0 0.0
    %1121 = vmatprep.subr.mxu0 0.0
    %1122 = vmatpush2.xpose.msra.mxu0 0.0
    %1123 = vmatprep.subr.mxu0 0.0
    %1124 = vmatpush2.xpose.msra.mxu0 0.0
    %1125 = vmatprep.subr.mxu0 0.0
    %1126 = vmatpush2.xpose.msra.mxu0 0.0
    %1127 = vmatprep.mubr.f32.mxu0 0.0
    %1128 = vmatmul.mubr.f32.gmra.mxu0 %v827
    %v1129 = vpop.f32.mrf.mxu0
    %v1130 = vadd.f32 0.0, %v1129
    %v1131 = vpop.f32.mrf.mxu0
    %1132 = vdwg.mxu0
    %v1134 = vsel %vm214, %v76, 0
    %v1137 = vsel %vm214, %v77, 0
    %1139 = vmatprep.subr.mxu0 0.0
    %1140 = vmatpush1.xpose.msra.mxu0 0.0
    %1141 = vmatprep.subr.mxu0 0.0
    %1142 = vmatpush1.xpose.msra.mxu0 0.0
    %1143 = vmatprep.subr.mxu0 0.0
    %1144 = vmatpush1.xpose.msra.mxu0 0.0
    %1145 = vmatprep.subr.mxu0 0.0
    %1146 = vmatpush1.xpose.msra.mxu0 0.0
    %1147 = vmatprep.subr.mxu0 0.0
    %1148 = vmatpush1.xpose.msra.mxu0 0.0
    %1149 = vmatprep.subr.mxu0 0.0
    %1150 = vmatpush1.xpose.msra.mxu0 0.0
    %1151 = vmatprep.subr.mxu0 0.0
    %1152 = vmatpush1.xpose.msra.mxu0 0.0
    %1153 = vmatprep.subr.mxu0 0.0
    %1154 = vmatpush1.xpose.msra.mxu0 0.0
    %1155 = vmatprep.subr.mxu0 0.0
    %1156 = vmatpush1.xpose.msra.mxu0 0.0
    %1157 = vmatprep.subr.mxu0 0.0
    %1158 = vmatpush1.xpose.msra.mxu0 0.0
    %1159 = vmatprep.subr.mxu0 0.0
    %1160 = vmatpush1.xpose.msra.mxu0 0.0
    %1161 = vmatprep.subr.mxu0 0.0
    %1162 = vmatpush1.xpose.msra.mxu0 0.0
    %1163 = vmatprep.subr.mxu0 0.0
    %1164 = vmatpush1.xpose.msra.mxu0 0.0
    %1165 = vmatprep.subr.mxu0 0.0
    %1166 = vmatpush1.xpose.msra.mxu0 0.0
    %1167 = vmatprep.subr.mxu0 0.0
    %1168 = vmatpush1.xpose.msra.mxu0 %v1137
    %1169 = vmatprep.subr.mxu0 0.0
    %1170 = vmatpush1.xpose.msra.mxu0 %v1134
    %1171 = vmatprep.subr.mxu0 0.0
    %1172 = vmatpush2.xpose.msra.mxu0 0.0
    %1173 = vmatprep.subr.mxu0 0.0
    %1174 = vmatpush2.xpose.msra.mxu0 0.0
    %1175 = vmatprep.subr.mxu0 0.0
    %1176 = vmatpush2.xpose.msra.mxu0 0.0
    %1177 = vmatprep.subr.mxu0 0.0
    %1178 = vmatpush2.xpose.msra.mxu0 0.0
    %1179 = vmatprep.subr.mxu0 0.0
    %1180 = vmatpush2.xpose.msra.mxu0 0.0
    %1181 = vmatprep.subr.mxu0 0.0
    %1182 = vmatpush2.xpose.msra.mxu0 0.0
    %1183 = vmatprep.subr.mxu0 0.0
    %1184 = vmatpush2.xpose.msra.mxu0 0.0
    %1185 = vmatprep.subr.mxu0 0.0
    %1186 = vmatpush2.xpose.msra.mxu0 0.0
    %1187 = vmatprep.subr.mxu0 0.0
    %1188 = vmatpush2.xpose.msra.mxu0 0.0
    %1189 = vmatprep.subr.mxu0 0.0
    %1190 = vmatpush2.xpose.msra.mxu0 0.0
    %1191 = vmatprep.subr.mxu0 0.0
    %1192 = vmatpush2.xpose.msra.mxu0 0.0
    %1193 = vmatprep.subr.mxu0 0.0
    %1194 = vmatpush2.xpose.msra.mxu0 0.0
    %1195 = vmatprep.subr.mxu0 0.0
    %1196 = vmatpush2.xpose.msra.mxu0 0.0
    %1197 = vmatprep.subr.mxu0 0.0
    %1198 = vmatpush2.xpose.msra.mxu0 0.0
    %1199 = vmatprep.subr.mxu0 0.0
    %1200 = vmatpush2.xpose.msra.mxu0 0.0
    %1201 = vmatprep.subr.mxu0 0.0
    %1202 = vmatpush2.xpose.msra.mxu0 0.0
    %1203 = vmatprep.mubr.f32.mxu0 0.0
    %1204 = vmatmul.mubr.f32.gmra.mxu0 %v827
    %v1205 = vpop.f32.mrf.mxu0
    %v1206 = vadd.f32 0.0, %v1205
    %v1207 = vpop.f32.mrf.mxu0
    %1208 = vdwg.mxu0
    %v1210 = vsel %vm214, %v78, 0
    %v1213 = vsel %vm214, %v79, 0
    %1215 = vmatprep.subr.mxu0 0.0
    %1216 = vmatpush1.xpose.msra.mxu0 0.0
    %1217 = vmatprep.subr.mxu0 0.0
    %1218 = vmatpush1.xpose.msra.mxu0 0.0
    %1219 = vmatprep.subr.mxu0 0.0
    %1220 = vmatpush1.xpose.msra.mxu0 0.0
    %1221 = vmatprep.subr.mxu0 0.0
    %1222 = vmatpush1.xpose.msra.mxu0 0.0
    %1223 = vmatprep.subr.mxu0 0.0
    %1224 = vmatpush1.xpose.msra.mxu0 0.0
    %1225 = vmatprep.subr.mxu0 0.0
    %1226 = vmatpush1.xpose.msra.mxu0 0.0
    %1227 = vmatprep.subr.mxu0 0.0
    %1228 = vmatpush1.xpose.msra.mxu0 0.0
    %1229 = vmatprep.subr.mxu0 0.0
    %1230 = vmatpush1.xpose.msra.mxu0 0.0
    %1231 = vmatprep.subr.mxu0 0.0
    %1232 = vmatpush1.xpose.msra.mxu0 0.0
    %1233 = vmatprep.subr.mxu0 0.0
    %1234 = vmatpush1.xpose.msra.mxu0 0.0
    %1235 = vmatprep.subr.mxu0 0.0
    %1236 = vmatpush1.xpose.msra.mxu0 0.0
    %1237 = vmatprep.subr.mxu0 0.0
    %1238 = vmatpush1.xpose.msra.mxu0 0.0
    %1239 = vmatprep.subr.mxu0 0.0
    %1240 = vmatpush1.xpose.msra.mxu0 0.0
    %1241 = vmatprep.subr.mxu0 0.0
    %1242 = vmatpush1.xpose.msra.mxu0 0.0
    %1243 = vmatprep.subr.mxu0 0.0
    %1244 = vmatpush1.xpose.msra.mxu0 %v1213
    %1245 = vmatprep.subr.mxu0 0.0
    %1246 = vmatpush1.xpose.msra.mxu0 %v1210
    %1247 = vmatprep.subr.mxu0 0.0
    %1248 = vmatpush2.xpose.msra.mxu0 0.0
    %1249 = vmatprep.subr.mxu0 0.0
    %1250 = vmatpush2.xpose.msra.mxu0 0.0
    %1251 = vmatprep.subr.mxu0 0.0
    %1252 = vmatpush2.xpose.msra.mxu0 0.0
    %1253 = vmatprep.subr.mxu0 0.0
    %1254 = vmatpush2.xpose.msra.mxu0 0.0
    %1255 = vmatprep.subr.mxu0 0.0
    %1256 = vmatpush2.xpose.msra.mxu0 0.0
    %1257 = vmatprep.subr.mxu0 0.0
    %1258 = vmatpush2.xpose.msra.mxu0 0.0
    %1259 = vmatprep.subr.mxu0 0.0
    %1260 = vmatpush2.xpose.msra.mxu0 0.0
    %1261 = vmatprep.subr.mxu0 0.0
    %1262 = vmatpush2.xpose.msra.mxu0 0.0
    %1263 = vmatprep.subr.mxu0 0.0
    %1264 = vmatpush2.xpose.msra.mxu0 0.0
    %1265 = vmatprep.subr.mxu0 0.0
    %1266 = vmatpush2.xpose.msra.mxu0 0.0
    %1267 = vmatprep.subr.mxu0 0.0
    %1268 = vmatpush2.xpose.msra.mxu0 0.0
    %1269 = vmatprep.subr.mxu0 0.0
    %1270 = vmatpush2.xpose.msra.mxu0 0.0
    %1271 = vmatprep.subr.mxu0 0.0
    %1272 = vmatpush2.xpose.msra.mxu0 0.0
    %1273 = vmatprep.subr.mxu0 0.0
    %1274 = vmatpush2.xpose.msra.mxu0 0.0
    %1275 = vmatprep.subr.mxu0 0.0
    %1276 = vmatpush2.xpose.msra.mxu0 0.0
    %1277 = vmatprep.subr.mxu0 0.0
    %1278 = vmatpush2.xpose.msra.mxu0 0.0
    %1279 = vmatprep.mubr.f32.mxu0 0.0
    %1280 = vmatmul.mubr.f32.gmra.mxu0 %v827
    %v1281 = vpop.f32.mrf.mxu0
    %v1282 = vadd.f32 0.0, %v1281
    %v1283 = vpop.f32.mrf.mxu0
    %1284 = vdwg.mxu0
    %v1286 = vsel %vm214, %v80, 0
    %v1289 = vsel %vm214, %v81, 0
    %1291 = vmatprep.subr.mxu0 0.0
    %1292 = vmatpush1.xpose.msra.mxu0 0.0
    %1293 = vmatprep.subr.mxu0 0.0
    %1294 = vmatpush1.xpose.msra.mxu0 0.0
    %1295 = vmatprep.subr.mxu0 0.0
    %1296 = vmatpush1.xpose.msra.mxu0 0.0
    %1297 = vmatprep.subr.mxu0 0.0
    %1298 = vmatpush1.xpose.msra.mxu0 0.0
    %1299 = vmatprep.subr.mxu0 0.0
    %1300 = vmatpush1.xpose.msra.mxu0 0.0
    %1301 = vmatprep.subr.mxu0 0.0
    %1302 = vmatpush1.xpose.msra.mxu0 0.0
    %1303 = vmatprep.subr.mxu0 0.0
    %1304 = vmatpush1.xpose.msra.mxu0 0.0
    %1305 = vmatprep.subr.mxu0 0.0
    %1306 = vmatpush1.xpose.msra.mxu0 0.0
    %1307 = vmatprep.subr.mxu0 0.0
    %1308 = vmatpush1.xpose.msra.mxu0 0.0
    %1309 = vmatprep.subr.mxu0 0.0
    %1310 = vmatpush1.xpose.msra.mxu0 0.0
    %1311 = vmatprep.subr.mxu0 0.0
    %1312 = vmatpush1.xpose.msra.mxu0 0.0
    %1313 = vmatprep.subr.mxu0 0.0
    %1314 = vmatpush1.xpose.msra.mxu0 0.0
    %1315 = vmatprep.subr.mxu0 0.0
    %1316 = vmatpush1.xpose.msra.mxu0 0.0
    %1317 = vmatprep.subr.mxu0 0.0
    %1318 = vmatpush1.xpose.msra.mxu0 0.0
    %1319 = vmatprep.subr.mxu0 0.0
    %1320 = vmatpush1.xpose.msra.mxu0 %v1289
    %1321 = vmatprep.subr.mxu0 0.0
    %1322 = vmatpush1.xpose.msra.mxu0 %v1286
    %1323 = vmatprep.subr.mxu0 0.0
    %1324 = vmatpush2.xpose.msra.mxu0 0.0
    %1325 = vmatprep.subr.mxu0 0.0
    %1326 = vmatpush2.xpose.msra.mxu0 0.0
    %1327 = vmatprep.subr.mxu0 0.0
    %1328 = vmatpush2.xpose.msra.mxu0 0.0
    %1329 = vmatprep.subr.mxu0 0.0
    %1330 = vmatpush2.xpose.msra.mxu0 0.0
    %1331 = vmatprep.subr.mxu0 0.0
    %1332 = vmatpush2.xpose.msra.mxu0 0.0
    %1333 = vmatprep.subr.mxu0 0.0
    %1334 = vmatpush2.xpose.msra.mxu0 0.0
    %1335 = vmatprep.subr.mxu0 0.0
    %1336 = vmatpush2.xpose.msra.mxu0 0.0
    %1337 = vmatprep.subr.mxu0 0.0
    %1338 = vmatpush2.xpose.msra.mxu0 0.0
    %1339 = vmatprep.subr.mxu0 0.0
    %1340 = vmatpush2.xpose.msra.mxu0 0.0
    %1341 = vmatprep.subr.mxu0 0.0
    %1342 = vmatpush2.xpose.msra.mxu0 0.0
    %1343 = vmatprep.subr.mxu0 0.0
    %1344 = vmatpush2.xpose.msra.mxu0 0.0
    %1345 = vmatprep.subr.mxu0 0.0
    %1346 = vmatpush2.xpose.msra.mxu0 0.0
    %1347 = vmatprep.subr.mxu0 0.0
    %1348 = vmatpush2.xpose.msra.mxu0 0.0
    %1349 = vmatprep.subr.mxu0 0.0
    %1350 = vmatpush2.xpose.msra.mxu0 0.0
    %1351 = vmatprep.subr.mxu0 0.0
    %1352 = vmatpush2.xpose.msra.mxu0 0.0
    %1353 = vmatprep.subr.mxu0 0.0
    %1354 = vmatpush2.xpose.msra.mxu0 0.0
    %1355 = vmatprep.mubr.f32.mxu0 0.0
    %1356 = vmatmul.mubr.f32.gmra.mxu0 %v827
    %v1357 = vpop.f32.mrf.mxu0
    %v1358 = vadd.f32 0.0, %v1357
    %v1359 = vpop.f32.mrf.mxu0
    %1360 = vdwg.mxu0
    %v1362 = vsel %vm214, %v82, 0
    %v1365 = vsel %vm214, %v83, 0
    %1367 = vmatprep.subr.mxu0 0.0
    %1368 = vmatpush1.xpose.msra.mxu0 0.0
    %1369 = vmatprep.subr.mxu0 0.0
    %1370 = vmatpush1.xpose.msra.mxu0 0.0
    %1371 = vmatprep.subr.mxu0 0.0
    %1372 = vmatpush1.xpose.msra.mxu0 0.0
    %1373 = vmatprep.subr.mxu0 0.0
    %1374 = vmatpush1.xpose.msra.mxu0 0.0
    %1375 = vmatprep.subr.mxu0 0.0
    %1376 = vmatpush1.xpose.msra.mxu0 0.0
    %1377 = vmatprep.subr.mxu0 0.0
    %1378 = vmatpush1.xpose.msra.mxu0 0.0
    %1379 = vmatprep.subr.mxu0 0.0
    %1380 = vmatpush1.xpose.msra.mxu0 0.0
    %1381 = vmatprep.subr.mxu0 0.0
    %1382 = vmatpush1.xpose.msra.mxu0 0.0
    %1383 = vmatprep.subr.mxu0 0.0
    %1384 = vmatpush1.xpose.msra.mxu0 0.0
    %1385 = vmatprep.subr.mxu0 0.0
    %1386 = vmatpush1.xpose.msra.mxu0 0.0
    %1387 = vmatprep.subr.mxu0 0.0
    %1388 = vmatpush1.xpose.msra.mxu0 0.0
    %1389 = vmatprep.subr.mxu0 0.0
    %1390 = vmatpush1.xpose.msra.mxu0 0.0
    %1391 = vmatprep.subr.mxu0 0.0
    %1392 = vmatpush1.xpose.msra.mxu0 0.0
    %1393 = vmatprep.subr.mxu0 0.0
    %1394 = vmatpush1.xpose.msra.mxu0 0.0
    %1395 = vmatprep.subr.mxu0 0.0
    %1396 = vmatpush1.xpose.msra.mxu0 %v1365
    %1397 = vmatprep.subr.mxu0 0.0
    %1398 = vmatpush1.xpose.msra.mxu0 %v1362
    %1399 = vmatprep.subr.mxu0 0.0
    %1400 = vmatpush2.xpose.msra.mxu0 0.0
    %1401 = vmatprep.subr.mxu0 0.0
    %1402 = vmatpush2.xpose.msra.mxu0 0.0
    %1403 = vmatprep.subr.mxu0 0.0
    %1404 = vmatpush2.xpose.msra.mxu0 0.0
    %1405 = vmatprep.subr.mxu0 0.0
    %1406 = vmatpush2.xpose.msra.mxu0 0.0
    %1407 = vmatprep.subr.mxu0 0.0
    %1408 = vmatpush2.xpose.msra.mxu0 0.0
    %1409 = vmatprep.subr.mxu0 0.0
    %1410 = vmatpush2.xpose.msra.mxu0 0.0
    %1411 = vmatprep.subr.mxu0 0.0
    %1412 = vmatpush2.xpose.msra.mxu0 0.0
    %1413 = vmatprep.subr.mxu0 0.0
    %1414 = vmatpush2.xpose.msra.mxu0 0.0
    %1415 = vmatprep.subr.mxu0 0.0
    %1416 = vmatpush2.xpose.msra.mxu0 0.0
    %1417 = vmatprep.subr.mxu0 0.0
    %1418 = vmatpush2.xpose.msra.mxu0 0.0
    %1419 = vmatprep.subr.mxu0 0.0
    %1420 = vmatpush2.xpose.msra.mxu0 0.0
    %1421 = vmatprep.subr.mxu0 0.0
    %1422 = vmatpush2.xpose.msra.mxu0 0.0
    %1423 = vmatprep.subr.mxu0 0.0
    %1424 = vmatpush2.xpose.msra.mxu0 0.0
    %1425 = vmatprep.subr.mxu0 0.0
    %1426 = vmatpush2.xpose.msra.mxu0 0.0
    %1427 = vmatprep.subr.mxu0 0.0
    %1428 = vmatpush2.xpose.msra.mxu0 0.0
    %1429 = vmatprep.subr.mxu0 0.0
    %1430 = vmatpush2.xpose.msra.mxu0 0.0
    %1431 = vmatprep.mubr.f32.mxu0 0.0
    %1432 = vmatmul.mubr.f32.gmra.mxu0 %v827
    %v1433 = vpop.f32.mrf.mxu0
    %v1434 = vadd.f32 0.0, %v1433
    %v1435 = vpop.f32.mrf.mxu0
    %1436 = vdwg.mxu0
    %v1437 = vlaneseq
    %v1438 = vshrl.u32 %v1437, 7
    %v1439 = vsub.s32 0, %v1438
    %v1440 = vrot.slane %v139, %v1439
    %v1441 = vlaneseq
    %v1442 = vshrl.u32 %v1441, 7
    %v1443 = vsub.s32 0, %v1442
    %v1444 = vrot.slane %v153, %v1443
    %v1445 = vlaneseq
    %v1446 = vshrl.u32 %v1445, 7
    %v1447 = vsub.s32 0, %v1446
    %v1448 = vrot.slane %v161, %v1447
    %v1449 = vlaneseq
    %v1450 = vshrl.u32 %v1449, 7
    %v1451 = vsub.s32 0, %v1450
    %v1452 = vrot.slane %v163, %v1451
    %v1453 = vlaneseq
    %v1454 = vshrl.u32 %v1453, 7
    %v1455 = vsub.s32 0, %v1454
    %v1456 = vrot.slane %v146, %v1455
    %v1457 = vlaneseq
    %v1458 = vshrl.u32 %v1457, 7
    %v1459 = vsub.s32 0, %v1458
    %v1460 = vrot.slane %v160, %v1459
    %v1461 = vlaneseq
    %v1462 = vshrl.u32 %v1461, 7
    %v1463 = vsub.s32 0, %v1462
    %v1464 = vrot.slane %v162, %v1463
    %v1465 = vlaneseq
    %v1466 = vshrl.u32 %v1465, 7
    %v1467 = vsub.s32 0, %v1466
    %v1468 = vrot.slane %v164, %v1467
    %v1469 = vlaneseq
    %v1470 = vshrl.u32 %v1469, 7
    %v1471 = vsub.s32 0, %v1470
    %v1472 = vrot.slane %v188, %v1471
    %v1473 = vlaneseq
    %v1474 = vshrl.u32 %v1473, 7
    %v1475 = vsub.s32 0, %v1474
    %v1476 = vrot.slane %v202, %v1475
    %v1477 = vlaneseq
    %v1478 = vshrl.u32 %v1477, 7
    %v1479 = vsub.s32 0, %v1478
    %v1480 = vrot.slane %v210, %v1479
    %v1481 = vlaneseq
    %v1482 = vshrl.u32 %v1481, 7
    %v1483 = vsub.s32 0, %v1482
    %v1484 = vrot.slane %v212, %v1483
    %v1485 = vlaneseq
    %v1486 = vshrl.u32 %v1485, 7
    %v1487 = vsub.s32 0, %v1486
    %v1488 = vrot.slane %v195, %v1487
    %v1489 = vlaneseq
    %v1490 = vshrl.u32 %v1489, 7
    %v1491 = vsub.s32 0, %v1490
    %v1492 = vrot.slane %v209, %v1491
    %v1493 = vlaneseq
    %v1494 = vshrl.u32 %v1493, 7
    %v1495 = vsub.s32 0, %v1494
    %v1496 = vrot.slane %v211, %v1495
    %v1497 = vlaneseq
    %v1498 = vshrl.u32 %v1497, 7
    %v1499 = vsub.s32 0, %v1498
    %v1500 = vrot.slane %v213, %v1499
    %v1517 = vsub.f32 %v291, %v1440
    %v1518 = vsub.f32 %v367, %v1444
    %v1519 = vsub.f32 %v443, %v1448
    %v1520 = vsub.f32 %v519, %v1452
    %v1521 = vsub.f32 %v595, %v1456
    %v1522 = vsub.f32 %v671, %v1460
    %v1523 = vsub.f32 %v747, %v1464
    %v1524 = vsub.f32 %v823, %v1468
    %v1525 = vsub.f32 %v902, %v1472
    %v1526 = vsub.f32 %v978, %v1476
    %v1527 = vsub.f32 %v1054, %v1480
    %v1528 = vsub.f32 %v1130, %v1484
    %v1529 = vsub.f32 %v1206, %v1488
    %v1530 = vsub.f32 %v1282, %v1492
    %v1531 = vsub.f32 %v1358, %v1496
    %v1532 = vsub.f32 %v1434, %v1500
    %vm1533 = vcmask 130048
    %v1534 = vsel %vm1533, %v1517, -inf
    %1535 = vmax.xlane.f32.xlu0 %v1534
    %v1536 = vpop.xlane.xlu0 %1535
    %v1537 = vsel %vm1533, %v1518, -inf
    %1538 = vmax.xlane.f32.xlu0 %v1537
    %v1539 = vpop.xlane.xlu0 %1538
    %v1540 = vsel %vm1533, %v1519, -inf
    %1541 = vmax.xlane.f32.xlu0 %v1540
    %v1542 = vpop.xlane.xlu0 %1541
    %v1543 = vsel %vm1533, %v1520, -inf
    %1544 = vmax.xlane.f32.xlu0 %v1543
    %v1545 = vpop.xlane.xlu0 %1544
    %v1546 = vsel %vm1533, %v1521, -inf
    %1547 = vmax.xlane.f32.xlu0 %v1546
    %v1548 = vpop.xlane.xlu0 %1547
    %v1549 = vsel %vm1533, %v1522, -inf
    %1550 = vmax.xlane.f32.xlu0 %v1549
    %v1551 = vpop.xlane.xlu0 %1550
    %v1552 = vsel %vm1533, %v1523, -inf
    %1553 = vmax.xlane.f32.xlu0 %v1552
    %v1554 = vpop.xlane.xlu0 %1553
    %v1555 = vsel %vm1533, %v1524, -inf
    %1556 = vmax.xlane.f32.xlu0 %v1555
    %v1557 = vpop.xlane.xlu0 %1556
    %v1558 = vsel %vm1533, %v1525, -inf
    %1559 = vmax.xlane.f32.xlu0 %v1558
    %v1560 = vpop.xlane.xlu0 %1559
    %v1561 = vsel %vm1533, %v1526, -inf
    %1562 = vmax.xlane.f32.xlu0 %v1561
    %v1563 = vpop.xlane.xlu0 %1562
    %v1564 = vsel %vm1533, %v1527, -inf
    %1565 = vmax.xlane.f32.xlu0 %v1564
    %v1566 = vpop.xlane.xlu0 %1565
    %v1567 = vsel %vm1533, %v1528, -inf
    %1568 = vmax.xlane.f32.xlu0 %v1567
    %v1569 = vpop.xlane.xlu0 %1568
    %v1570 = vsel %vm1533, %v1529, -inf
    %1571 = vmax.xlane.f32.xlu0 %v1570
    %v1572 = vpop.xlane.xlu0 %1571
    %v1573 = vsel %vm1533, %v1530, -inf
    %1574 = vmax.xlane.f32.xlu0 %v1573
    %v1575 = vpop.xlane.xlu0 %1574
    %v1576 = vsel %vm1533, %v1531, -inf
    %1577 = vmax.xlane.f32.xlu0 %v1576
    %v1578 = vpop.xlane.xlu0 %1577
    %v1579 = vsel %vm1533, %v1532, -inf
    %1580 = vmax.xlane.f32.xlu0 %v1579
    %v1581 = vpop.xlane.xlu0 %1580
    %v1582 = vsub.f32 %v1517, %v1536
    %v1583 = vsub.f32 %v1518, %v1539
    %v1584 = vsub.f32 %v1519, %v1542
    %v1585 = vsub.f32 %v1520, %v1545
    %v1586 = vsub.f32 %v1521, %v1548
    %v1587 = vsub.f32 %v1522, %v1551
    %v1588 = vsub.f32 %v1523, %v1554
    %v1589 = vsub.f32 %v1524, %v1557
    %v1590 = vsub.f32 %v1525, %v1560
    %v1591 = vsub.f32 %v1526, %v1563
    %v1592 = vsub.f32 %v1527, %v1566
    %v1593 = vsub.f32 %v1528, %v1569
    %v1594 = vsub.f32 %v1529, %v1572
    %v1595 = vsub.f32 %v1530, %v1575
    %v1596 = vsub.f32 %v1531, %v1578
    %v1597 = vsub.f32 %v1532, %v1581
    %v1598 = vmul.f32 %v1582, 1.442695
    %v1599 = vpow.pop %v1598
    %v1600 = vmul.f32 %v1583, 1.442695
    %v1601 = vpow.pop %v1600
    %v1602 = vmul.f32 %v1584, 1.442695
    %v1603 = vpow.pop %v1602
    %v1604 = vmul.f32 %v1585, 1.442695
    %v1605 = vpow.pop %v1604
    %v1606 = vmul.f32 %v1586, 1.442695
    %v1607 = vpow.pop %v1606
    %v1608 = vmul.f32 %v1587, 1.442695
    %v1609 = vpow.pop %v1608
    %v1610 = vmul.f32 %v1588, 1.442695
    %v1611 = vpow.pop %v1610
    %v1612 = vmul.f32 %v1589, 1.442695
    %v1613 = vpow.pop %v1612
    %v1614 = vmul.f32 %v1590, 1.442695
    %v1615 = vpow.pop %v1614
    %v1616 = vmul.f32 %v1591, 1.442695
    %v1617 = vpow.pop %v1616
    %v1618 = vmul.f32 %v1592, 1.442695
    %v1619 = vpow.pop %v1618
    %v1620 = vmul.f32 %v1593, 1.442695
    %v1621 = vpow.pop %v1620
    %v1622 = vmul.f32 %v1594, 1.442695
    %v1623 = vpow.pop %v1622
    %v1624 = vmul.f32 %v1595, 1.442695
    %v1625 = vpow.pop %v1624
    %v1626 = vmul.f32 %v1596, 1.442695
    %v1627 = vpow.pop %v1626
    %v1628 = vmul.f32 %v1597, 1.442695
    %v1629 = vpow.pop %v1628
    %v1630 = vsel %vm1533, %v1599, 0.0
    %1631 = vadd.xlane.f32.xlu0 %v1630
    %v1632 = vpop.xlane.xlu0 %1631
    %v1633 = vsel %vm1533, %v1601, 0.0
    %1634 = vadd.xlane.f32.xlu0 %v1633
    %v1635 = vpop.xlane.xlu0 %1634
    %v1636 = vsel %vm1533, %v1603, 0.0
    %1637 = vadd.xlane.f32.xlu0 %v1636
    %v1638 = vpop.xlane.xlu0 %1637
    %v1639 = vsel %vm1533, %v1605, 0.0
    %1640 = vadd.xlane.f32.xlu0 %v1639
    %v1641 = vpop.xlane.xlu0 %1640
    %v1642 = vsel %vm1533, %v1607, 0.0
    %1643 = vadd.xlane.f32.xlu0 %v1642
    %v1644 = vpop.xlane.xlu0 %1643
    %v1645 = vsel %vm1533, %v1609, 0.0
    %1646 = vadd.xlane.f32.xlu0 %v1645
    %v1647 = vpop.xlane.xlu0 %1646
    %v1648 = vsel %vm1533, %v1611, 0.0
    %1649 = vadd.xlane.f32.xlu0 %v1648
    %v1650 = vpop.xlane.xlu0 %1649
    %v1651 = vsel %vm1533, %v1613, 0.0
    %1652 = vadd.xlane.f32.xlu0 %v1651
    %v1653 = vpop.xlane.xlu0 %1652
    %v1654 = vsel %vm1533, %v1615, 0.0
    %1655 = vadd.xlane.f32.xlu0 %v1654
    %v1656 = vpop.xlane.xlu0 %1655
    %v1657 = vsel %vm1533, %v1617, 0.0
    %1658 = vadd.xlane.f32.xlu0 %v1657
    %v1659 = vpop.xlane.xlu0 %1658
    %v1660 = vsel %vm1533, %v1619, 0.0
    %1661 = vadd.xlane.f32.xlu0 %v1660
    %v1662 = vpop.xlane.xlu0 %1661
    %v1663 = vsel %vm1533, %v1621, 0.0
    %1664 = vadd.xlane.f32.xlu0 %v1663
    %v1665 = vpop.xlane.xlu0 %1664
    %v1666 = vsel %vm1533, %v1623, 0.0
    %1667 = vadd.xlane.f32.xlu0 %v1666
    %v1668 = vpop.xlane.xlu0 %1667
    %v1669 = vsel %vm1533, %v1625, 0.0
    %1670 = vadd.xlane.f32.xlu0 %v1669
    %v1671 = vpop.xlane.xlu0 %1670
    %v1672 = vsel %vm1533, %v1627, 0.0
    %1673 = vadd.xlane.f32.xlu0 %v1672
    %v1674 = vpop.xlane.xlu0 %1673
    %v1675 = vsel %vm1533, %v1629, 0.0
    %1676 = vadd.xlane.f32.xlu0 %v1675
    %v1677 = vpop.xlane.xlu0 %1676
    %v1678 = vrcp.pop %v1632
    %v1679 = vrcp.pop %v1635
    %v1680 = vrcp.pop %v1638
    %v1681 = vrcp.pop %v1641
    %v1682 = vrcp.pop %v1644
    %v1683 = vrcp.pop %v1647
    %v1684 = vrcp.pop %v1650
    %v1685 = vrcp.pop %v1653
    %v1686 = vrcp.pop %v1656
    %v1687 = vrcp.pop %v1659
    %v1688 = vrcp.pop %v1662
    %v1689 = vrcp.pop %v1665
    %v1690 = vrcp.pop %v1668
    %v1691 = vrcp.pop %v1671
    %v1692 = vrcp.pop %v1674
    %v1693 = vrcp.pop %v1677
    %v1694 = vmul.f32 %v1599, %v1678
    %v1695 = vmul.f32 %v1601, %v1679
    %v1696 = vmul.f32 %v1603, %v1680
    %v1697 = vmul.f32 %v1605, %v1681
    %v1698 = vmul.f32 %v1607, %v1682
    %v1699 = vmul.f32 %v1609, %v1683
    %v1700 = vmul.f32 %v1611, %v1684
    %v1701 = vmul.f32 %v1613, %v1685
    %v1702 = vmul.f32 %v1615, %v1686
    %v1703 = vmul.f32 %v1617, %v1687
    %v1704 = vmul.f32 %v1619, %v1688
    %v1705 = vmul.f32 %v1621, %v1689
    %v1706 = vmul.f32 %v1623, %v1690
    %v1707 = vmul.f32 %v1625, %v1691
    %v1708 = vmul.f32 %v1627, %v1692
    %v1709 = vmul.f32 %v1629, %v1693
    %v1711 = vsel %vm1533, %v1694, 0
    %1713 = vmatprep.subr.mxu0 0.0
    %1714 = vmatpush1.msra.mxu0 0.0
    %1715 = vmatprep.subr.mxu0 0.0
    %1716 = vmatpush1.msra.mxu0 0.0
    %1717 = vmatprep.subr.mxu0 0.0
    %1718 = vmatpush1.msra.mxu0 0.0
    %1719 = vmatprep.subr.mxu0 0.0
    %1720 = vmatpush1.msra.mxu0 0.0
    %1721 = vmatprep.subr.mxu0 0.0
    %1722 = vmatpush1.msra.mxu0 0.0
    %1723 = vmatprep.subr.mxu0 0.0
    %1724 = vmatpush1.msra.mxu0 0.0
    %1725 = vmatprep.subr.mxu0 0.0
    %1726 = vmatpush1.msra.mxu0 0.0
    %1727 = vmatprep.subr.mxu0 0.0
    %1728 = vmatpush1.msra.mxu0 0.0
    %1729 = vmatprep.subr.mxu0 0.0
    %1730 = vmatpush1.msra.mxu0 0.0
    %1731 = vmatprep.subr.mxu0 0.0
    %1732 = vmatpush1.msra.mxu0 0.0
    %1733 = vmatprep.subr.mxu0 0.0
    %1734 = vmatpush1.msra.mxu0 0.0
    %1735 = vmatprep.subr.mxu0 0.0
    %1736 = vmatpush1.msra.mxu0 0.0
    %1737 = vmatprep.subr.mxu0 0.0
    %1738 = vmatpush1.msra.mxu0 0.0
    %1739 = vmatprep.subr.mxu0 0.0
    %1740 = vmatpush1.msra.mxu0 0.0
    %1741 = vmatprep.subr.mxu0 0.0
    %1742 = vmatpush1.msra.mxu0 %v53
    %1743 = vmatprep.subr.mxu0 0.0
    %1744 = vmatpush1.msra.mxu0 %v52
    %1745 = vmatprep.subr.mxu0 0.0
    %1746 = vmatpush2.msra.mxu0 0.0
    %1747 = vmatprep.subr.mxu0 0.0
    %1748 = vmatpush2.msra.mxu0 0.0
    %1749 = vmatprep.subr.mxu0 0.0
    %1750 = vmatpush2.msra.mxu0 0.0
    %1751 = vmatprep.subr.mxu0 0.0
    %1752 = vmatpush2.msra.mxu0 0.0
    %1753 = vmatprep.subr.mxu0 0.0
    %1754 = vmatpush2.msra.mxu0 0.0
    %1755 = vmatprep.subr.mxu0 0.0
    %1756 = vmatpush2.msra.mxu0 0.0
    %1757 = vmatprep.subr.mxu0 0.0
    %1758 = vmatpush2.msra.mxu0 0.0
    %1759 = vmatprep.subr.mxu0 0.0
    %1760 = vmatpush2.msra.mxu0 0.0
    %1761 = vmatprep.subr.mxu0 0.0
    %1762 = vmatpush2.msra.mxu0 0.0
    %1763 = vmatprep.subr.mxu0 0.0
    %1764 = vmatpush2.msra.mxu0 0.0
    %1765 = vmatprep.subr.mxu0 0.0
    %1766 = vmatpush2.msra.mxu0 0.0
    %1767 = vmatprep.subr.mxu0 0.0
    %1768 = vmatpush2.msra.mxu0 0.0
    %1769 = vmatprep.subr.mxu0 0.0
    %1770 = vmatpush2.msra.mxu0 0.0
    %1771 = vmatprep.subr.mxu0 0.0
    %1772 = vmatpush2.msra.mxu0 0.0
    %1773 = vmatprep.subr.mxu0 0.0
    %1774 = vmatpush2.msra.mxu0 0.0
    %1775 = vmatprep.subr.mxu0 0.0
    %1776 = vmatpush2.msra.mxu0 0.0
    %1777 = vmatprep.mubr.f32.mxu0 0.0
    %1778 = vmatmul.mubr.f32.gmra.mxu0 %v1711
    %v1779 = vpop.f32.mrf.mxu0
    %v1780 = vadd.f32 0.0, %v1779
    %v1781 = vpop.f32.mrf.mxu0
    %1782 = vdwg.mxu0
    %v1784 = vsel %vm1533, %v1695, 0
    %1786 = vmatprep.subr.mxu0 0.0
    %1787 = vmatpush1.msra.mxu0 0.0
    %1788 = vmatprep.subr.mxu0 0.0
    %1789 = vmatpush1.msra.mxu0 0.0
    %1790 = vmatprep.subr.mxu0 0.0
    %1791 = vmatpush1.msra.mxu0 0.0
    %1792 = vmatprep.subr.mxu0 0.0
    %1793 = vmatpush1.msra.mxu0 0.0
    %1794 = vmatprep.subr.mxu0 0.0
    %1795 = vmatpush1.msra.mxu0 0.0
    %1796 = vmatprep.subr.mxu0 0.0
    %1797 = vmatpush1.msra.mxu0 0.0
    %1798 = vmatprep.subr.mxu0 0.0
    %1799 = vmatpush1.msra.mxu0 0.0
    %1800 = vmatprep.subr.mxu0 0.0
    %1801 = vmatpush1.msra.mxu0 0.0
    %1802 = vmatprep.subr.mxu0 0.0
    %1803 = vmatpush1.msra.mxu0 0.0
    %1804 = vmatprep.subr.mxu0 0.0
    %1805 = vmatpush1.msra.mxu0 0.0
    %1806 = vmatprep.subr.mxu0 0.0
    %1807 = vmatpush1.msra.mxu0 0.0
    %1808 = vmatprep.subr.mxu0 0.0
    %1809 = vmatpush1.msra.mxu0 0.0
    %1810 = vmatprep.subr.mxu0 0.0
    %1811 = vmatpush1.msra.mxu0 0.0
    %1812 = vmatprep.subr.mxu0 0.0
    %1813 = vmatpush1.msra.mxu0 0.0
    %1814 = vmatprep.subr.mxu0 0.0
    %1815 = vmatpush1.msra.mxu0 %v55
    %1816 = vmatprep.subr.mxu0 0.0
    %1817 = vmatpush1.msra.mxu0 %v54
    %1818 = vmatprep.subr.mxu0 0.0
    %1819 = vmatpush2.msra.mxu0 0.0
    %1820 = vmatprep.subr.mxu0 0.0
    %1821 = vmatpush2.msra.mxu0 0.0
    %1822 = vmatprep.subr.mxu0 0.0
    %1823 = vmatpush2.msra.mxu0 0.0
    %1824 = vmatprep.subr.mxu0 0.0
    %1825 = vmatpush2.msra.mxu0 0.0
    %1826 = vmatprep.subr.mxu0 0.0
    %1827 = vmatpush2.msra.mxu0 0.0
    %1828 = vmatprep.subr.mxu0 0.0
    %1829 = vmatpush2.msra.mxu0 0.0
    %1830 = vmatprep.subr.mxu0 0.0
    %1831 = vmatpush2.msra.mxu0 0.0
    %1832 = vmatprep.subr.mxu0 0.0
    %1833 = vmatpush2.msra.mxu0 0.0
    %1834 = vmatprep.subr.mxu0 0.0
    %1835 = vmatpush2.msra.mxu0 0.0
    %1836 = vmatprep.subr.mxu0 0.0
    %1837 = vmatpush2.msra.mxu0 0.0
    %1838 = vmatprep.subr.mxu0 0.0
    %1839 = vmatpush2.msra.mxu0 0.0
    %1840 = vmatprep.subr.mxu0 0.0
    %1841 = vmatpush2.msra.mxu0 0.0
    %1842 = vmatprep.subr.mxu0 0.0
    %1843 = vmatpush2.msra.mxu0 0.0
    %1844 = vmatprep.subr.mxu0 0.0
    %1845 = vmatpush2.msra.mxu0 0.0
    %1846 = vmatprep.subr.mxu0 0.0
    %1847 = vmatpush2.msra.mxu0 0.0
    %1848 = vmatprep.subr.mxu0 0.0
    %1849 = vmatpush2.msra.mxu0 0.0
    %1850 = vmatprep.mubr.f32.mxu0 0.0
    %1851 = vmatmul.mubr.f32.gmra.mxu0 %v1784
    %v1852 = vpop.f32.mrf.mxu0
    %v1853 = vadd.f32 0.0, %v1852
    %v1854 = vpop.f32.mrf.mxu0
    %1855 = vdwg.mxu0
    %v1857 = vsel %vm1533, %v1696, 0
    %1859 = vmatprep.subr.mxu0 0.0
    %1860 = vmatpush1.msra.mxu0 0.0
    %1861 = vmatprep.subr.mxu0 0.0
    %1862 = vmatpush1.msra.mxu0 0.0
    %1863 = vmatprep.subr.mxu0 0.0
    %1864 = vmatpush1.msra.mxu0 0.0
    %1865 = vmatprep.subr.mxu0 0.0
    %1866 = vmatpush1.msra.mxu0 0.0
    %1867 = vmatprep.subr.mxu0 0.0
    %1868 = vmatpush1.msra.mxu0 0.0
    %1869 = vmatprep.subr.mxu0 0.0
    %1870 = vmatpush1.msra.mxu0 0.0
    %1871 = vmatprep.subr.mxu0 0.0
    %1872 = vmatpush1.msra.mxu0 0.0
    %1873 = vmatprep.subr.mxu0 0.0
    %1874 = vmatpush1.msra.mxu0 0.0
    %1875 = vmatprep.subr.mxu0 0.0
    %1876 = vmatpush1.msra.mxu0 0.0
    %1877 = vmatprep.subr.mxu0 0.0
    %1878 = vmatpush1.msra.mxu0 0.0
    %1879 = vmatprep.subr.mxu0 0.0
    %1880 = vmatpush1.msra.mxu0 0.0
    %1881 = vmatprep.subr.mxu0 0.0
    %1882 = vmatpush1.msra.mxu0 0.0
    %1883 = vmatprep.subr.mxu0 0.0
    %1884 = vmatpush1.msra.mxu0 0.0
    %1885 = vmatprep.subr.mxu0 0.0
    %1886 = vmatpush1.msra.mxu0 0.0
    %1887 = vmatprep.subr.mxu0 0.0
    %1888 = vmatpush1.msra.mxu0 %v57
    %1889 = vmatprep.subr.mxu0 0.0
    %1890 = vmatpush1.msra.mxu0 %v56
    %1891 = vmatprep.subr.mxu0 0.0
    %1892 = vmatpush2.msra.mxu0 0.0
    %1893 = vmatprep.subr.mxu0 0.0
    %1894 = vmatpush2.msra.mxu0 0.0
    %1895 = vmatprep.subr.mxu0 0.0
    %1896 = vmatpush2.msra.mxu0 0.0
    %1897 = vmatprep.subr.mxu0 0.0
    %1898 = vmatpush2.msra.mxu0 0.0
    %1899 = vmatprep.subr.mxu0 0.0
    %1900 = vmatpush2.msra.mxu0 0.0
    %1901 = vmatprep.subr.mxu0 0.0
    %1902 = vmatpush2.msra.mxu0 0.0
    %1903 = vmatprep.subr.mxu0 0.0
    %1904 = vmatpush2.msra.mxu0 0.0
    %1905 = vmatprep.subr.mxu0 0.0
    %1906 = vmatpush2.msra.mxu0 0.0
    %1907 = vmatprep.subr.mxu0 0.0
    %1908 = vmatpush2.msra.mxu0 0.0
    %1909 = vmatprep.subr.mxu0 0.0
    %1910 = vmatpush2.msra.mxu0 0.0
    %1911 = vmatprep.subr.mxu0 0.0
    %1912 = vmatpush2.msra.mxu0 0.0
    %1913 = vmatprep.subr.mxu0 0.0
    %1914 = vmatpush2.msra.mxu0 0.0
    %1915 = vmatprep.subr.mxu0 0.0
    %1916 = vmatpush2.msra.mxu0 0.0
    %1917 = vmatprep.subr.mxu0 0.0
    %1918 = vmatpush2.msra.mxu0 0.0
    %1919 = vmatprep.subr.mxu0 0.0
    %1920 = vmatpush2.msra.mxu0 0.0
    %1921 = vmatprep.subr.mxu0 0.0
    %1922 = vmatpush2.msra.mxu0 0.0
    %1923 = vmatprep.mubr.f32.mxu0 0.0
    %1924 = vmatmul.mubr.f32.gmra.mxu0 %v1857
    %v1925 = vpop.f32.mrf.mxu0
    %v1926 = vadd.f32 0.0, %v1925
    %v1927 = vpop.f32.mrf.mxu0
    %1928 = vdwg.mxu0
    %v1930 = vsel %vm1533, %v1697, 0
    %1932 = vmatprep.subr.mxu0 0.0
    %1933 = vmatpush1.msra.mxu0 0.0
    %1934 = vmatprep.subr.mxu0 0.0
    %1935 = vmatpush1.msra.mxu0 0.0
    %1936 = vmatprep.subr.mxu0 0.0
    %1937 = vmatpush1.msra.mxu0 0.0
    %1938 = vmatprep.subr.mxu0 0.0
    %1939 = vmatpush1.msra.mxu0 0.0
    %1940 = vmatprep.subr.mxu0 0.0
    %1941 = vmatpush1.msra.mxu0 0.0
    %1942 = vmatprep.subr.mxu0 0.0
    %1943 = vmatpush1.msra.mxu0 0.0
    %1944 = vmatprep.subr.mxu0 0.0
    %1945 = vmatpush1.msra.mxu0 0.0
    %1946 = vmatprep.subr.mxu0 0.0
    %1947 = vmatpush1.msra.mxu0 0.0
    %1948 = vmatprep.subr.mxu0 0.0
    %1949 = vmatpush1.msra.mxu0 0.0
    %1950 = vmatprep.subr.mxu0 0.0
    %1951 = vmatpush1.msra.mxu0 0.0
    %1952 = vmatprep.subr.mxu0 0.0
    %1953 = vmatpush1.msra.mxu0 0.0
    %1954 = vmatprep.subr.mxu0 0.0
    %1955 = vmatpush1.msra.mxu0 0.0
    %1956 = vmatprep.subr.mxu0 0.0
    %1957 = vmatpush1.msra.mxu0 0.0
    %1958 = vmatprep.subr.mxu0 0.0
    %1959 = vmatpush1.msra.mxu0 0.0
    %1960 = vmatprep.subr.mxu0 0.0
    %1961 = vmatpush1.msra.mxu0 %v59
    %1962 = vmatprep.subr.mxu0 0.0
    %1963 = vmatpush1.msra.mxu0 %v58
    %1964 = vmatprep.subr.mxu0 0.0
    %1965 = vmatpush2.msra.mxu0 0.0
    %1966 = vmatprep.subr.mxu0 0.0
    %1967 = vmatpush2.msra.mxu0 0.0
    %1968 = vmatprep.subr.mxu0 0.0
    %1969 = vmatpush2.msra.mxu0 0.0
    %1970 = vmatprep.subr.mxu0 0.0
    %1971 = vmatpush2.msra.mxu0 0.0
    %1972 = vmatprep.subr.mxu0 0.0
    %1973 = vmatpush2.msra.mxu0 0.0
    %1974 = vmatprep.subr.mxu0 0.0
    %1975 = vmatpush2.msra.mxu0 0.0
    %1976 = vmatprep.subr.mxu0 0.0
    %1977 = vmatpush2.msra.mxu0 0.0
    %1978 = vmatprep.subr.mxu0 0.0
    %1979 = vmatpush2.msra.mxu0 0.0
    %1980 = vmatprep.subr.mxu0 0.0
    %1981 = vmatpush2.msra.mxu0 0.0
    %1982 = vmatprep.subr.mxu0 0.0
    %1983 = vmatpush2.msra.mxu0 0.0
    %1984 = vmatprep.subr.mxu0 0.0
    %1985 = vmatpush2.msra.mxu0 0.0
    %1986 = vmatprep.subr.mxu0 0.0
    %1987 = vmatpush2.msra.mxu0 0.0
    %1988 = vmatprep.subr.mxu0 0.0
    %1989 = vmatpush2.msra.mxu0 0.0
    %1990 = vmatprep.subr.mxu0 0.0
    %1991 = vmatpush2.msra.mxu0 0.0
    %1992 = vmatprep.subr.mxu0 0.0
    %1993 = vmatpush2.msra.mxu0 0.0
    %1994 = vmatprep.subr.mxu0 0.0
    %1995 = vmatpush2.msra.mxu0 0.0
    %1996 = vmatprep.mubr.f32.mxu0 0.0
    %1997 = vmatmul.mubr.f32.gmra.mxu0 %v1930
    %v1998 = vpop.f32.mrf.mxu0
    %v1999 = vadd.f32 0.0, %v1998
    %v2000 = vpop.f32.mrf.mxu0
    %2001 = vdwg.mxu0
    %v2003 = vsel %vm1533, %v1698, 0
    %2005 = vmatprep.subr.mxu0 0.0
    %2006 = vmatpush1.msra.mxu0 0.0
    %2007 = vmatprep.subr.mxu0 0.0
    %2008 = vmatpush1.msra.mxu0 0.0
    %2009 = vmatprep.subr.mxu0 0.0
    %2010 = vmatpush1.msra.mxu0 0.0
    %2011 = vmatprep.subr.mxu0 0.0
    %2012 = vmatpush1.msra.mxu0 0.0
    %2013 = vmatprep.subr.mxu0 0.0
    %2014 = vmatpush1.msra.mxu0 0.0
    %2015 = vmatprep.subr.mxu0 0.0
    %2016 = vmatpush1.msra.mxu0 0.0
    %2017 = vmatprep.subr.mxu0 0.0
    %2018 = vmatpush1.msra.mxu0 0.0
    %2019 = vmatprep.subr.mxu0 0.0
    %2020 = vmatpush1.msra.mxu0 0.0
    %2021 = vmatprep.subr.mxu0 0.0
    %2022 = vmatpush1.msra.mxu0 0.0
    %2023 = vmatprep.subr.mxu0 0.0
    %2024 = vmatpush1.msra.mxu0 0.0
    %2025 = vmatprep.subr.mxu0 0.0
    %2026 = vmatpush1.msra.mxu0 0.0
    %2027 = vmatprep.subr.mxu0 0.0
    %2028 = vmatpush1.msra.mxu0 0.0
    %2029 = vmatprep.subr.mxu0 0.0
    %2030 = vmatpush1.msra.mxu0 0.0
    %2031 = vmatprep.subr.mxu0 0.0
    %2032 = vmatpush1.msra.mxu0 0.0
    %2033 = vmatprep.subr.mxu0 0.0
    %2034 = vmatpush1.msra.mxu0 %v61
    %2035 = vmatprep.subr.mxu0 0.0
    %2036 = vmatpush1.msra.mxu0 %v60
    %2037 = vmatprep.subr.mxu0 0.0
    %2038 = vmatpush2.msra.mxu0 0.0
    %2039 = vmatprep.subr.mxu0 0.0
    %2040 = vmatpush2.msra.mxu0 0.0
    %2041 = vmatprep.subr.mxu0 0.0
    %2042 = vmatpush2.msra.mxu0 0.0
    %2043 = vmatprep.subr.mxu0 0.0
    %2044 = vmatpush2.msra.mxu0 0.0
    %2045 = vmatprep.subr.mxu0 0.0
    %2046 = vmatpush2.msra.mxu0 0.0
    %2047 = vmatprep.subr.mxu0 0.0
    %2048 = vmatpush2.msra.mxu0 0.0
    %2049 = vmatprep.subr.mxu0 0.0
    %2050 = vmatpush2.msra.mxu0 0.0
    %2051 = vmatprep.subr.mxu0 0.0
    %2052 = vmatpush2.msra.mxu0 0.0
    %2053 = vmatprep.subr.mxu0 0.0
    %2054 = vmatpush2.msra.mxu0 0.0
    %2055 = vmatprep.subr.mxu0 0.0
    %2056 = vmatpush2.msra.mxu0 0.0
    %2057 = vmatprep.subr.mxu0 0.0
    %2058 = vmatpush2.msra.mxu0 0.0
    %2059 = vmatprep.subr.mxu0 0.0
    %2060 = vmatpush2.msra.mxu0 0.0
    %2061 = vmatprep.subr.mxu0 0.0
    %2062 = vmatpush2.msra.mxu0 0.0
    %2063 = vmatprep.subr.mxu0 0.0
    %2064 = vmatpush2.msra.mxu0 0.0
    %2065 = vmatprep.subr.mxu0 0.0
    %2066 = vmatpush2.msra.mxu0 0.0
    %2067 = vmatprep.subr.mxu0 0.0
    %2068 = vmatpush2.msra.mxu0 0.0
    %2069 = vmatprep.mubr.f32.mxu0 0.0
    %2070 = vmatmul.mubr.f32.gmra.mxu0 %v2003
    %v2071 = vpop.f32.mrf.mxu0
    %v2072 = vadd.f32 0.0, %v2071
    %v2073 = vpop.f32.mrf.mxu0
    %2074 = vdwg.mxu0
    %v2076 = vsel %vm1533, %v1699, 0
    %2078 = vmatprep.subr.mxu0 0.0
    %2079 = vmatpush1.msra.mxu0 0.0
    %2080 = vmatprep.subr.mxu0 0.0
    %2081 = vmatpush1.msra.mxu0 0.0
    %2082 = vmatprep.subr.mxu0 0.0
    %2083 = vmatpush1.msra.mxu0 0.0
    %2084 = vmatprep.subr.mxu0 0.0
    %2085 = vmatpush1.msra.mxu0 0.0
    %2086 = vmatprep.subr.mxu0 0.0
    %2087 = vmatpush1.msra.mxu0 0.0
    %2088 = vmatprep.subr.mxu0 0.0
    %2089 = vmatpush1.msra.mxu0 0.0
    %2090 = vmatprep.subr.mxu0 0.0
    %2091 = vmatpush1.msra.mxu0 0.0
    %2092 = vmatprep.subr.mxu0 0.0
    %2093 = vmatpush1.msra.mxu0 0.0
    %2094 = vmatprep.subr.mxu0 0.0
    %2095 = vmatpush1.msra.mxu0 0.0
    %2096 = vmatprep.subr.mxu0 0.0
    %2097 = vmatpush1.msra.mxu0 0.0
    %2098 = vmatprep.subr.mxu0 0.0
    %2099 = vmatpush1.msra.mxu0 0.0
    %2100 = vmatprep.subr.mxu0 0.0
    %2101 = vmatpush1.msra.mxu0 0.0
    %2102 = vmatprep.subr.mxu0 0.0
    %2103 = vmatpush1.msra.mxu0 0.0
    %2104 = vmatprep.subr.mxu0 0.0
    %2105 = vmatpush1.msra.mxu0 0.0
    %2106 = vmatprep.subr.mxu0 0.0
    %2107 = vmatpush1.msra.mxu0 %v63
    %2108 = vmatprep.subr.mxu0 0.0
    %2109 = vmatpush1.msra.mxu0 %v62
    %2110 = vmatprep.subr.mxu0 0.0
    %2111 = vmatpush2.msra.mxu0 0.0
    %2112 = vmatprep.subr.mxu0 0.0
    %2113 = vmatpush2.msra.mxu0 0.0
    %2114 = vmatprep.subr.mxu0 0.0
    %2115 = vmatpush2.msra.mxu0 0.0
    %2116 = vmatprep.subr.mxu0 0.0
    %2117 = vmatpush2.msra.mxu0 0.0
    %2118 = vmatprep.subr.mxu0 0.0
    %2119 = vmatpush2.msra.mxu0 0.0
    %2120 = vmatprep.subr.mxu0 0.0
    %2121 = vmatpush2.msra.mxu0 0.0
    %2122 = vmatprep.subr.mxu0 0.0
    %2123 = vmatpush2.msra.mxu0 0.0
    %2124 = vmatprep.subr.mxu0 0.0
    %2125 = vmatpush2.msra.mxu0 0.0
    %2126 = vmatprep.subr.mxu0 0.0
    %2127 = vmatpush2.msra.mxu0 0.0
    %2128 = vmatprep.subr.mxu0 0.0
    %2129 = vmatpush2.msra.mxu0 0.0
    %2130 = vmatprep.subr.mxu0 0.0
    %2131 = vmatpush2.msra.mxu0 0.0
    %2132 = vmatprep.subr.mxu0 0.0
    %2133 = vmatpush2.msra.mxu0 0.0
    %2134 = vmatprep.subr.mxu0 0.0
    %2135 = vmatpush2.msra.mxu0 0.0
    %2136 = vmatprep.subr.mxu0 0.0
    %2137 = vmatpush2.msra.mxu0 0.0
    %2138 = vmatprep.subr.mxu0 0.0
    %2139 = vmatpush2.msra.mxu0 0.0
    %2140 = vmatprep.subr.mxu0 0.0
    %2141 = vmatpush2.msra.mxu0 0.0
    %2142 = vmatprep.mubr.f32.mxu0 0.0
    %2143 = vmatmul.mubr.f32.gmra.mxu0 %v2076
    %v2144 = vpop.f32.mrf.mxu0
    %v2145 = vadd.f32 0.0, %v2144
    %v2146 = vpop.f32.mrf.mxu0
    %2147 = vdwg.mxu0
    %v2149 = vsel %vm1533, %v1700, 0
    %2151 = vmatprep.subr.mxu0 0.0
    %2152 = vmatpush1.msra.mxu0 0.0
    %2153 = vmatprep.subr.mxu0 0.0
    %2154 = vmatpush1.msra.mxu0 0.0
    %2155 = vmatprep.subr.mxu0 0.0
    %2156 = vmatpush1.msra.mxu0 0.0
    %2157 = vmatprep.subr.mxu0 0.0
    %2158 = vmatpush1.msra.mxu0 0.0
    %2159 = vmatprep.subr.mxu0 0.0
    %2160 = vmatpush1.msra.mxu0 0.0
    %2161 = vmatprep.subr.mxu0 0.0
    %2162 = vmatpush1.msra.mxu0 0.0
    %2163 = vmatprep.subr.mxu0 0.0
    %2164 = vmatpush1.msra.mxu0 0.0
    %2165 = vmatprep.subr.mxu0 0.0
    %2166 = vmatpush1.msra.mxu0 0.0
    %2167 = vmatprep.subr.mxu0 0.0
    %2168 = vmatpush1.msra.mxu0 0.0
    %2169 = vmatprep.subr.mxu0 0.0
    %2170 = vmatpush1.msra.mxu0 0.0
    %2171 = vmatprep.subr.mxu0 0.0
    %2172 = vmatpush1.msra.mxu0 0.0
    %2173 = vmatprep.subr.mxu0 0.0
    %2174 = vmatpush1.msra.mxu0 0.0
    %2175 = vmatprep.subr.mxu0 0.0
    %2176 = vmatpush1.msra.mxu0 0.0
    %2177 = vmatprep.subr.mxu0 0.0
    %2178 = vmatpush1.msra.mxu0 0.0
    %2179 = vmatprep.subr.mxu0 0.0
    %2180 = vmatpush1.msra.mxu0 %v65
    %2181 = vmatprep.subr.mxu0 0.0
    %2182 = vmatpush1.msra.mxu0 %v64
    %2183 = vmatprep.subr.mxu0 0.0
    %2184 = vmatpush2.msra.mxu0 0.0
    %2185 = vmatprep.subr.mxu0 0.0
    %2186 = vmatpush2.msra.mxu0 0.0
    %2187 = vmatprep.subr.mxu0 0.0
    %2188 = vmatpush2.msra.mxu0 0.0
    %2189 = vmatprep.subr.mxu0 0.0
    %2190 = vmatpush2.msra.mxu0 0.0
    %2191 = vmatprep.subr.mxu0 0.0
    %2192 = vmatpush2.msra.mxu0 0.0
    %2193 = vmatprep.subr.mxu0 0.0
    %2194 = vmatpush2.msra.mxu0 0.0
    %2195 = vmatprep.subr.mxu0 0.0
    %2196 = vmatpush2.msra.mxu0 0.0
    %2197 = vmatprep.subr.mxu0 0.0
    %2198 = vmatpush2.msra.mxu0 0.0
    %2199 = vmatprep.subr.mxu0 0.0
    %2200 = vmatpush2.msra.mxu0 0.0
    %2201 = vmatprep.subr.mxu0 0.0
    %2202 = vmatpush2.msra.mxu0 0.0
    %2203 = vmatprep.subr.mxu0 0.0
    %2204 = vmatpush2.msra.mxu0 0.0
    %2205 = vmatprep.subr.mxu0 0.0
    %2206 = vmatpush2.msra.mxu0 0.0
    %2207 = vmatprep.subr.mxu0 0.0
    %2208 = vmatpush2.msra.mxu0 0.0
    %2209 = vmatprep.subr.mxu0 0.0
    %2210 = vmatpush2.msra.mxu0 0.0
    %2211 = vmatprep.subr.mxu0 0.0
    %2212 = vmatpush2.msra.mxu0 0.0
    %2213 = vmatprep.subr.mxu0 0.0
    %2214 = vmatpush2.msra.mxu0 0.0
    %2215 = vmatprep.mubr.f32.mxu0 0.0
    %2216 = vmatmul.mubr.f32.gmra.mxu0 %v2149
    %v2217 = vpop.f32.mrf.mxu0
    %v2218 = vadd.f32 0.0, %v2217
    %v2219 = vpop.f32.mrf.mxu0
    %2220 = vdwg.mxu0
    %v2222 = vsel %vm1533, %v1701, 0
    %2224 = vmatprep.subr.mxu0 0.0
    %2225 = vmatpush1.msra.mxu0 0.0
    %2226 = vmatprep.subr.mxu0 0.0
    %2227 = vmatpush1.msra.mxu0 0.0
    %2228 = vmatprep.subr.mxu0 0.0
    %2229 = vmatpush1.msra.mxu0 0.0
    %2230 = vmatprep.subr.mxu0 0.0
    %2231 = vmatpush1.msra.mxu0 0.0
    %2232 = vmatprep.subr.mxu0 0.0
    %2233 = vmatpush1.msra.mxu0 0.0
    %2234 = vmatprep.subr.mxu0 0.0
    %2235 = vmatpush1.msra.mxu0 0.0
    %2236 = vmatprep.subr.mxu0 0.0
    %2237 = vmatpush1.msra.mxu0 0.0
    %2238 = vmatprep.subr.mxu0 0.0
    %2239 = vmatpush1.msra.mxu0 0.0
    %2240 = vmatprep.subr.mxu0 0.0
    %2241 = vmatpush1.msra.mxu0 0.0
    %2242 = vmatprep.subr.mxu0 0.0
    %2243 = vmatpush1.msra.mxu0 0.0
    %2244 = vmatprep.subr.mxu0 0.0
    %2245 = vmatpush1.msra.mxu0 0.0
    %2246 = vmatprep.subr.mxu0 0.0
    %2247 = vmatpush1.msra.mxu0 0.0
    %2248 = vmatprep.subr.mxu0 0.0
    %2249 = vmatpush1.msra.mxu0 0.0
    %2250 = vmatprep.subr.mxu0 0.0
    %2251 = vmatpush1.msra.mxu0 0.0
    %2252 = vmatprep.subr.mxu0 0.0
    %2253 = vmatpush1.msra.mxu0 %v67
    %2254 = vmatprep.subr.mxu0 0.0
    %2255 = vmatpush1.msra.mxu0 %v66
    %2256 = vmatprep.subr.mxu0 0.0
    %2257 = vmatpush2.msra.mxu0 0.0
    %2258 = vmatprep.subr.mxu0 0.0
    %2259 = vmatpush2.msra.mxu0 0.0
    %2260 = vmatprep.subr.mxu0 0.0
    %2261 = vmatpush2.msra.mxu0 0.0
    %2262 = vmatprep.subr.mxu0 0.0
    %2263 = vmatpush2.msra.mxu0 0.0
    %2264 = vmatprep.subr.mxu0 0.0
    %2265 = vmatpush2.msra.mxu0 0.0
    %2266 = vmatprep.subr.mxu0 0.0
    %2267 = vmatpush2.msra.mxu0 0.0
    %2268 = vmatprep.subr.mxu0 0.0
    %2269 = vmatpush2.msra.mxu0 0.0
    %2270 = vmatprep.subr.mxu0 0.0
    %2271 = vmatpush2.msra.mxu0 0.0
    %2272 = vmatprep.subr.mxu0 0.0
    %2273 = vmatpush2.msra.mxu0 0.0
    %2274 = vmatprep.subr.mxu0 0.0
    %2275 = vmatpush2.msra.mxu0 0.0
    %2276 = vmatprep.subr.mxu0 0.0
    %2277 = vmatpush2.msra.mxu0 0.0
    %2278 = vmatprep.subr.mxu0 0.0
    %2279 = vmatpush2.msra.mxu0 0.0
    %2280 = vmatprep.subr.mxu0 0.0
    %2281 = vmatpush2.msra.mxu0 0.0
    %2282 = vmatprep.subr.mxu0 0.0
    %2283 = vmatpush2.msra.mxu0 0.0
    %2284 = vmatprep.subr.mxu0 0.0
    %2285 = vmatpush2.msra.mxu0 0.0
    %2286 = vmatprep.subr.mxu0 0.0
    %2287 = vmatpush2.msra.mxu0 0.0
    %2288 = vmatprep.mubr.f32.mxu0 0.0
    %2289 = vmatmul.mubr.f32.gmra.mxu0 %v2222
    %v2290 = vpop.f32.mrf.mxu0
    %v2291 = vadd.f32 0.0, %v2290
    %v2292 = vpop.f32.mrf.mxu0
    %2293 = vdwg.mxu0
    %v2295 = vsel %vm1533, %v1702, 0
    %2297 = vmatprep.subr.mxu0 0.0
    %2298 = vmatpush1.msra.mxu0 0.0
    %2299 = vmatprep.subr.mxu0 0.0
    %2300 = vmatpush1.msra.mxu0 0.0
    %2301 = vmatprep.subr.mxu0 0.0
    %2302 = vmatpush1.msra.mxu0 0.0
    %2303 = vmatprep.subr.mxu0 0.0
    %2304 = vmatpush1.msra.mxu0 0.0
    %2305 = vmatprep.subr.mxu0 0.0
    %2306 = vmatpush1.msra.mxu0 0.0
    %2307 = vmatprep.subr.mxu0 0.0
    %2308 = vmatpush1.msra.mxu0 0.0
    %2309 = vmatprep.subr.mxu0 0.0
    %2310 = vmatpush1.msra.mxu0 0.0
    %2311 = vmatprep.subr.mxu0 0.0
    %2312 = vmatpush1.msra.mxu0 0.0
    %2313 = vmatprep.subr.mxu0 0.0
    %2314 = vmatpush1.msra.mxu0 0.0
    %2315 = vmatprep.subr.mxu0 0.0
    %2316 = vmatpush1.msra.mxu0 0.0
    %2317 = vmatprep.subr.mxu0 0.0
    %2318 = vmatpush1.msra.mxu0 0.0
    %2319 = vmatprep.subr.mxu0 0.0
    %2320 = vmatpush1.msra.mxu0 0.0
    %2321 = vmatprep.subr.mxu0 0.0
    %2322 = vmatpush1.msra.mxu0 0.0
    %2323 = vmatprep.subr.mxu0 0.0
    %2324 = vmatpush1.msra.mxu0 0.0
    %2325 = vmatprep.subr.mxu0 0.0
    %2326 = vmatpush1.msra.mxu0 %v69
    %2327 = vmatprep.subr.mxu0 0.0
    %2328 = vmatpush1.msra.mxu0 %v68
    %2329 = vmatprep.subr.mxu0 0.0
    %2330 = vmatpush2.msra.mxu0 0.0
    %2331 = vmatprep.subr.mxu0 0.0
    %2332 = vmatpush2.msra.mxu0 0.0
    %2333 = vmatprep.subr.mxu0 0.0
    %2334 = vmatpush2.msra.mxu0 0.0
    %2335 = vmatprep.subr.mxu0 0.0
    %2336 = vmatpush2.msra.mxu0 0.0
    %2337 = vmatprep.subr.mxu0 0.0
    %2338 = vmatpush2.msra.mxu0 0.0
    %2339 = vmatprep.subr.mxu0 0.0
    %2340 = vmatpush2.msra.mxu0 0.0
    %2341 = vmatprep.subr.mxu0 0.0
    %2342 = vmatpush2.msra.mxu0 0.0
    %2343 = vmatprep.subr.mxu0 0.0
    %2344 = vmatpush2.msra.mxu0 0.0
    %2345 = vmatprep.subr.mxu0 0.0
    %2346 = vmatpush2.msra.mxu0 0.0
    %2347 = vmatprep.subr.mxu0 0.0
    %2348 = vmatpush2.msra.mxu0 0.0
    %2349 = vmatprep.subr.mxu0 0.0
    %2350 = vmatpush2.msra.mxu0 0.0
    %2351 = vmatprep.subr.mxu0 0.0
    %2352 = vmatpush2.msra.mxu0 0.0
    %2353 = vmatprep.subr.mxu0 0.0
    %2354 = vmatpush2.msra.mxu0 0.0
    %2355 = vmatprep.subr.mxu0 0.0
    %2356 = vmatpush2.msra.mxu0 0.0
    %2357 = vmatprep.subr.mxu0 0.0
    %2358 = vmatpush2.msra.mxu0 0.0
    %2359 = vmatprep.subr.mxu0 0.0
    %2360 = vmatpush2.msra.mxu0 0.0
    %2361 = vmatprep.mubr.f32.mxu0 0.0
    %2362 = vmatmul.mubr.f32.gmra.mxu0 %v2295
    %v2363 = vpop.f32.mrf.mxu0
    %v2364 = vadd.f32 0.0, %v2363
    %v2365 = vpop.f32.mrf.mxu0
    %2366 = vdwg.mxu0
    %v2368 = vsel %vm1533, %v1703, 0
    %2370 = vmatprep.subr.mxu0 0.0
    %2371 = vmatpush1.msra.mxu0 0.0
    %2372 = vmatprep.subr.mxu0 0.0
    %2373 = vmatpush1.msra.mxu0 0.0
    %2374 = vmatprep.subr.mxu0 0.0
    %2375 = vmatpush1.msra.mxu0 0.0
    %2376 = vmatprep.subr.mxu0 0.0
    %2377 = vmatpush1.msra.mxu0 0.0
    %2378 = vmatprep.subr.mxu0 0.0
    %2379 = vmatpush1.msra.mxu0 0.0
    %2380 = vmatprep.subr.mxu0 0.0
    %2381 = vmatpush1.msra.mxu0 0.0
    %2382 = vmatprep.subr.mxu0 0.0
    %2383 = vmatpush1.msra.mxu0 0.0
    %2384 = vmatprep.subr.mxu0 0.0
    %2385 = vmatpush1.msra.mxu0 0.0
    %2386 = vmatprep.subr.mxu0 0.0
    %2387 = vmatpush1.msra.mxu0 0.0
    %2388 = vmatprep.subr.mxu0 0.0
    %2389 = vmatpush1.msra.mxu0 0.0
    %2390 = vmatprep.subr.mxu0 0.0
    %2391 = vmatpush1.msra.mxu0 0.0
    %2392 = vmatprep.subr.mxu0 0.0
    %2393 = vmatpush1.msra.mxu0 0.0
    %2394 = vmatprep.subr.mxu0 0.0
    %2395 = vmatpush1.msra.mxu0 0.0
    %2396 = vmatprep.subr.mxu0 0.0
    %2397 = vmatpush1.msra.mxu0 0.0
    %2398 = vmatprep.subr.mxu0 0.0
    %2399 = vmatpush1.msra.mxu0 %v71
    %2400 = vmatprep.subr.mxu0 0.0
    %2401 = vmatpush1.msra.mxu0 %v70
    %2402 = vmatprep.subr.mxu0 0.0
    %2403 = vmatpush2.msra.mxu0 0.0
    %2404 = vmatprep.subr.mxu0 0.0
    %2405 = vmatpush2.msra.mxu0 0.0
    %2406 = vmatprep.subr.mxu0 0.0
    %2407 = vmatpush2.msra.mxu0 0.0
    %2408 = vmatprep.subr.mxu0 0.0
    %2409 = vmatpush2.msra.mxu0 0.0
    %2410 = vmatprep.subr.mxu0 0.0
    %2411 = vmatpush2.msra.mxu0 0.0
    %2412 = vmatprep.subr.mxu0 0.0
    %2413 = vmatpush2.msra.mxu0 0.0
    %2414 = vmatprep.subr.mxu0 0.0
    %2415 = vmatpush2.msra.mxu0 0.0
    %2416 = vmatprep.subr.mxu0 0.0
    %2417 = vmatpush2.msra.mxu0 0.0
    %2418 = vmatprep.subr.mxu0 0.0
    %2419 = vmatpush2.msra.mxu0 0.0
    %2420 = vmatprep.subr.mxu0 0.0
    %2421 = vmatpush2.msra.mxu0 0.0
    %2422 = vmatprep.subr.mxu0 0.0
    %2423 = vmatpush2.msra.mxu0 0.0
    %2424 = vmatprep.subr.mxu0 0.0
    %2425 = vmatpush2.msra.mxu0 0.0
    %2426 = vmatprep.subr.mxu0 0.0
    %2427 = vmatpush2.msra.mxu0 0.0
    %2428 = vmatprep.subr.mxu0 0.0
    %2429 = vmatpush2.msra.mxu0 0.0
    %2430 = vmatprep.subr.mxu0 0.0
    %2431 = vmatpush2.msra.mxu0 0.0
    %2432 = vmatprep.subr.mxu0 0.0
    %2433 = vmatpush2.msra.mxu0 0.0
    %2434 = vmatprep.mubr.f32.mxu0 0.0
    %2435 = vmatmul.mubr.f32.gmra.mxu0 %v2368
    %v2436 = vpop.f32.mrf.mxu0
    %v2437 = vadd.f32 0.0, %v2436
    %v2438 = vpop.f32.mrf.mxu0
    %2439 = vdwg.mxu0
    %v2441 = vsel %vm1533, %v1704, 0
    %2443 = vmatprep.subr.mxu0 0.0
    %2444 = vmatpush1.msra.mxu0 0.0
    %2445 = vmatprep.subr.mxu0 0.0
    %2446 = vmatpush1.msra.mxu0 0.0
    %2447 = vmatprep.subr.mxu0 0.0
    %2448 = vmatpush1.msra.mxu0 0.0
    %2449 = vmatprep.subr.mxu0 0.0
    %2450 = vmatpush1.msra.mxu0 0.0
    %2451 = vmatprep.subr.mxu0 0.0
    %2452 = vmatpush1.msra.mxu0 0.0
    %2453 = vmatprep.subr.mxu0 0.0
    %2454 = vmatpush1.msra.mxu0 0.0
    %2455 = vmatprep.subr.mxu0 0.0
    %2456 = vmatpush1.msra.mxu0 0.0
    %2457 = vmatprep.subr.mxu0 0.0
    %2458 = vmatpush1.msra.mxu0 0.0
    %2459 = vmatprep.subr.mxu0 0.0
    %2460 = vmatpush1.msra.mxu0 0.0
    %2461 = vmatprep.subr.mxu0 0.0
    %2462 = vmatpush1.msra.mxu0 0.0
    %2463 = vmatprep.subr.mxu0 0.0
    %2464 = vmatpush1.msra.mxu0 0.0
    %2465 = vmatprep.subr.mxu0 0.0
    %2466 = vmatpush1.msra.mxu0 0.0
    %2467 = vmatprep.subr.mxu0 0.0
    %2468 = vmatpush1.msra.mxu0 0.0
    %2469 = vmatprep.subr.mxu0 0.0
    %2470 = vmatpush1.msra.mxu0 0.0
    %2471 = vmatprep.subr.mxu0 0.0
    %2472 = vmatpush1.msra.mxu0 %v73
    %2473 = vmatprep.subr.mxu0 0.0
    %2474 = vmatpush1.msra.mxu0 %v72
    %2475 = vmatprep.subr.mxu0 0.0
    %2476 = vmatpush2.msra.mxu0 0.0
    %2477 = vmatprep.subr.mxu0 0.0
    %2478 = vmatpush2.msra.mxu0 0.0
    %2479 = vmatprep.subr.mxu0 0.0
    %2480 = vmatpush2.msra.mxu0 0.0
    %2481 = vmatprep.subr.mxu0 0.0
    %2482 = vmatpush2.msra.mxu0 0.0
    %2483 = vmatprep.subr.mxu0 0.0
    %2484 = vmatpush2.msra.mxu0 0.0
    %2485 = vmatprep.subr.mxu0 0.0
    %2486 = vmatpush2.msra.mxu0 0.0
    %2487 = vmatprep.subr.mxu0 0.0
    %2488 = vmatpush2.msra.mxu0 0.0
    %2489 = vmatprep.subr.mxu0 0.0
    %2490 = vmatpush2.msra.mxu0 0.0
    %2491 = vmatprep.subr.mxu0 0.0
    %2492 = vmatpush2.msra.mxu0 0.0
    %2493 = vmatprep.subr.mxu0 0.0
    %2494 = vmatpush2.msra.mxu0 0.0
    %2495 = vmatprep.subr.mxu0 0.0
    %2496 = vmatpush2.msra.mxu0 0.0
    %2497 = vmatprep.subr.mxu0 0.0
    %2498 = vmatpush2.msra.mxu0 0.0
    %2499 = vmatprep.subr.mxu0 0.0
    %2500 = vmatpush2.msra.mxu0 0.0
    %2501 = vmatprep.subr.mxu0 0.0
    %2502 = vmatpush2.msra.mxu0 0.0
    %2503 = vmatprep.subr.mxu0 0.0
    %2504 = vmatpush2.msra.mxu0 0.0
    %2505 = vmatprep.subr.mxu0 0.0
    %2506 = vmatpush2.msra.mxu0 0.0
    %2507 = vmatprep.mubr.f32.mxu0 0.0
    %2508 = vmatmul.mubr.f32.gmra.mxu0 %v2441
    %v2509 = vpop.f32.mrf.mxu0
    %v2510 = vadd.f32 0.0, %v2509
    %v2511 = vpop.f32.mrf.mxu0
    %2512 = vdwg.mxu0
    %v2514 = vsel %vm1533, %v1705, 0
    %2516 = vmatprep.subr.mxu0 0.0
    %2517 = vmatpush1.msra.mxu0 0.0
    %2518 = vmatprep.subr.mxu0 0.0
    %2519 = vmatpush1.msra.mxu0 0.0
    %2520 = vmatprep.subr.mxu0 0.0
    %2521 = vmatpush1.msra.mxu0 0.0
    %2522 = vmatprep.subr.mxu0 0.0
    %2523 = vmatpush1.msra.mxu0 0.0
    %2524 = vmatprep.subr.mxu0 0.0
    %2525 = vmatpush1.msra.mxu0 0.0
    %2526 = vmatprep.subr.mxu0 0.0
    %2527 = vmatpush1.msra.mxu0 0.0
    %2528 = vmatprep.subr.mxu0 0.0
    %2529 = vmatpush1.msra.mxu0 0.0
    %2530 = vmatprep.subr.mxu0 0.0
    %2531 = vmatpush1.msra.mxu0 0.0
    %2532 = vmatprep.subr.mxu0 0.0
    %2533 = vmatpush1.msra.mxu0 0.0
    %2534 = vmatprep.subr.mxu0 0.0
    %2535 = vmatpush1.msra.mxu0 0.0
    %2536 = vmatprep.subr.mxu0 0.0
    %2537 = vmatpush1.msra.mxu0 0.0
    %2538 = vmatprep.subr.mxu0 0.0
    %2539 = vmatpush1.msra.mxu0 0.0
    %2540 = vmatprep.subr.mxu0 0.0
    %2541 = vmatpush1.msra.mxu0 0.0
    %2542 = vmatprep.subr.mxu0 0.0
    %2543 = vmatpush1.msra.mxu0 0.0
    %2544 = vmatprep.subr.mxu0 0.0
    %2545 = vmatpush1.msra.mxu0 %v75
    %2546 = vmatprep.subr.mxu0 0.0
    %2547 = vmatpush1.msra.mxu0 %v74
    %2548 = vmatprep.subr.mxu0 0.0
    %2549 = vmatpush2.msra.mxu0 0.0
    %2550 = vmatprep.subr.mxu0 0.0
    %2551 = vmatpush2.msra.mxu0 0.0
    %2552 = vmatprep.subr.mxu0 0.0
    %2553 = vmatpush2.msra.mxu0 0.0
    %2554 = vmatprep.subr.mxu0 0.0
    %2555 = vmatpush2.msra.mxu0 0.0
    %2556 = vmatprep.subr.mxu0 0.0
    %2557 = vmatpush2.msra.mxu0 0.0
    %2558 = vmatprep.subr.mxu0 0.0
    %2559 = vmatpush2.msra.mxu0 0.0
    %2560 = vmatprep.subr.mxu0 0.0
    %2561 = vmatpush2.msra.mxu0 0.0
    %2562 = vmatprep.subr.mxu0 0.0
    %2563 = vmatpush2.msra.mxu0 0.0
    %2564 = vmatprep.subr.mxu0 0.0
    %2565 = vmatpush2.msra.mxu0 0.0
    %2566 = vmatprep.subr.mxu0 0.0
    %2567 = vmatpush2.msra.mxu0 0.0
    %2568 = vmatprep.subr.mxu0 0.0
    %2569 = vmatpush2.msra.mxu0 0.0
    %2570 = vmatprep.subr.mxu0 0.0
    %2571 = vmatpush2.msra.mxu0 0.0
    %2572 = vmatprep.subr.mxu0 0.0
    %2573 = vmatpush2.msra.mxu0 0.0
    %2574 = vmatprep.subr.mxu0 0.0
    %2575 = vmatpush2.msra.mxu0 0.0
    %2576 = vmatprep.subr.mxu0 0.0
    %2577 = vmatpush2.msra.mxu0 0.0
    %2578 = vmatprep.subr.mxu0 0.0
    %2579 = vmatpush2.msra.mxu0 0.0
    %2580 = vmatprep.mubr.f32.mxu0 0.0
    %2581 = vmatmul.mubr.f32.gmra.mxu0 %v2514
    %v2582 = vpop.f32.mrf.mxu0
    %v2583 = vadd.f32 0.0, %v2582
    %v2584 = vpop.f32.mrf.mxu0
    %2585 = vdwg.mxu0
    %v2587 = vsel %vm1533, %v1706, 0
    %2589 = vmatprep.subr.mxu0 0.0
    %2590 = vmatpush1.msra.mxu0 0.0
    %2591 = vmatprep.subr.mxu0 0.0
    %2592 = vmatpush1.msra.mxu0 0.0
    %2593 = vmatprep.subr.mxu0 0.0
    %2594 = vmatpush1.msra.mxu0 0.0
    %2595 = vmatprep.subr.mxu0 0.0
    %2596 = vmatpush1.msra.mxu0 0.0
    %2597 = vmatprep.subr.mxu0 0.0
    %2598 = vmatpush1.msra.mxu0 0.0
    %2599 = vmatprep.subr.mxu0 0.0
    %2600 = vmatpush1.msra.mxu0 0.0
    %2601 = vmatprep.subr.mxu0 0.0
    %2602 = vmatpush1.msra.mxu0 0.0
    %2603 = vmatprep.subr.mxu0 0.0
    %2604 = vmatpush1.msra.mxu0 0.0
    %2605 = vmatprep.subr.mxu0 0.0
    %2606 = vmatpush1.msra.mxu0 0.0
    %2607 = vmatprep.subr.mxu0 0.0
    %2608 = vmatpush1.msra.mxu0 0.0
    %2609 = vmatprep.subr.mxu0 0.0
    %2610 = vmatpush1.msra.mxu0 0.0
    %2611 = vmatprep.subr.mxu0 0.0
    %2612 = vmatpush1.msra.mxu0 0.0
    %2613 = vmatprep.subr.mxu0 0.0
    %2614 = vmatpush1.msra.mxu0 0.0
    %2615 = vmatprep.subr.mxu0 0.0
    %2616 = vmatpush1.msra.mxu0 0.0
    %2617 = vmatprep.subr.mxu0 0.0
    %2618 = vmatpush1.msra.mxu0 %v77
    %2619 = vmatprep.subr.mxu0 0.0
    %2620 = vmatpush1.msra.mxu0 %v76
    %2621 = vmatprep.subr.mxu0 0.0
    %2622 = vmatpush2.msra.mxu0 0.0
    %2623 = vmatprep.subr.mxu0 0.0
    %2624 = vmatpush2.msra.mxu0 0.0
    %2625 = vmatprep.subr.mxu0 0.0
    %2626 = vmatpush2.msra.mxu0 0.0
    %2627 = vmatprep.subr.mxu0 0.0
    %2628 = vmatpush2.msra.mxu0 0.0
    %2629 = vmatprep.subr.mxu0 0.0
    %2630 = vmatpush2.msra.mxu0 0.0
    %2631 = vmatprep.subr.mxu0 0.0
    %2632 = vmatpush2.msra.mxu0 0.0
    %2633 = vmatprep.subr.mxu0 0.0
    %2634 = vmatpush2.msra.mxu0 0.0
    %2635 = vmatprep.subr.mxu0 0.0
    %2636 = vmatpush2.msra.mxu0 0.0
    %2637 = vmatprep.subr.mxu0 0.0
    %2638 = vmatpush2.msra.mxu0 0.0
    %2639 = vmatprep.subr.mxu0 0.0
    %2640 = vmatpush2.msra.mxu0 0.0
    %2641 = vmatprep.subr.mxu0 0.0
    %2642 = vmatpush2.msra.mxu0 0.0
    %2643 = vmatprep.subr.mxu0 0.0
    %2644 = vmatpush2.msra.mxu0 0.0
    %2645 = vmatprep.subr.mxu0 0.0
    %2646 = vmatpush2.msra.mxu0 0.0
    %2647 = vmatprep.subr.mxu0 0.0
    %2648 = vmatpush2.msra.mxu0 0.0
    %2649 = vmatprep.subr.mxu0 0.0
    %2650 = vmatpush2.msra.mxu0 0.0
    %2651 = vmatprep.subr.mxu0 0.0
    %2652 = vmatpush2.msra.mxu0 0.0
    %2653 = vmatprep.mubr.f32.mxu0 0.0
    %2654 = vmatmul.mubr.f32.gmra.mxu0 %v2587
    %v2655 = vpop.f32.mrf.mxu0
    %v2656 = vadd.f32 0.0, %v2655
    %v2657 = vpop.f32.mrf.mxu0
    %2658 = vdwg.mxu0
    %v2660 = vsel %vm1533, %v1707, 0
    %2662 = vmatprep.subr.mxu0 0.0
    %2663 = vmatpush1.msra.mxu0 0.0
    %2664 = vmatprep.subr.mxu0 0.0
    %2665 = vmatpush1.msra.mxu0 0.0
    %2666 = vmatprep.subr.mxu0 0.0
    %2667 = vmatpush1.msra.mxu0 0.0
    %2668 = vmatprep.subr.mxu0 0.0
    %2669 = vmatpush1.msra.mxu0 0.0
    %2670 = vmatprep.subr.mxu0 0.0
    %2671 = vmatpush1.msra.mxu0 0.0
    %2672 = vmatprep.subr.mxu0 0.0
    %2673 = vmatpush1.msra.mxu0 0.0
    %2674 = vmatprep.subr.mxu0 0.0
    %2675 = vmatpush1.msra.mxu0 0.0
    %2676 = vmatprep.subr.mxu0 0.0
    %2677 = vmatpush1.msra.mxu0 0.0
    %2678 = vmatprep.subr.mxu0 0.0
    %2679 = vmatpush1.msra.mxu0 0.0
    %2680 = vmatprep.subr.mxu0 0.0
    %2681 = vmatpush1.msra.mxu0 0.0
    %2682 = vmatprep.subr.mxu0 0.0
    %2683 = vmatpush1.msra.mxu0 0.0
    %2684 = vmatprep.subr.mxu0 0.0
    %2685 = vmatpush1.msra.mxu0 0.0
    %2686 = vmatprep.subr.mxu0 0.0
    %2687 = vmatpush1.msra.mxu0 0.0
    %2688 = vmatprep.subr.mxu0 0.0
    %2689 = vmatpush1.msra.mxu0 0.0
    %2690 = vmatprep.subr.mxu0 0.0
    %2691 = vmatpush1.msra.mxu0 %v79
    %2692 = vmatprep.subr.mxu0 0.0
    %2693 = vmatpush1.msra.mxu0 %v78
    %2694 = vmatprep.subr.mxu0 0.0
    %2695 = vmatpush2.msra.mxu0 0.0
    %2696 = vmatprep.subr.mxu0 0.0
    %2697 = vmatpush2.msra.mxu0 0.0
    %2698 = vmatprep.subr.mxu0 0.0
    %2699 = vmatpush2.msra.mxu0 0.0
    %2700 = vmatprep.subr.mxu0 0.0
    %2701 = vmatpush2.msra.mxu0 0.0
    %2702 = vmatprep.subr.mxu0 0.0
    %2703 = vmatpush2.msra.mxu0 0.0
    %2704 = vmatprep.subr.mxu0 0.0
    %2705 = vmatpush2.msra.mxu0 0.0
    %2706 = vmatprep.subr.mxu0 0.0
    %2707 = vmatpush2.msra.mxu0 0.0
    %2708 = vmatprep.subr.mxu0 0.0
    %2709 = vmatpush2.msra.mxu0 0.0
    %2710 = vmatprep.subr.mxu0 0.0
    %2711 = vmatpush2.msra.mxu0 0.0
    %2712 = vmatprep.subr.mxu0 0.0
    %2713 = vmatpush2.msra.mxu0 0.0
    %2714 = vmatprep.subr.mxu0 0.0
    %2715 = vmatpush2.msra.mxu0 0.0
    %2716 = vmatprep.subr.mxu0 0.0
    %2717 = vmatpush2.msra.mxu0 0.0
    %2718 = vmatprep.subr.mxu0 0.0
    %2719 = vmatpush2.msra.mxu0 0.0
    %2720 = vmatprep.subr.mxu0 0.0
    %2721 = vmatpush2.msra.mxu0 0.0
    %2722 = vmatprep.subr.mxu0 0.0
    %2723 = vmatpush2.msra.mxu0 0.0
    %2724 = vmatprep.subr.mxu0 0.0
    %2725 = vmatpush2.msra.mxu0 0.0
    %2726 = vmatprep.mubr.f32.mxu0 0.0
    %2727 = vmatmul.mubr.f32.gmra.mxu0 %v2660
    %v2728 = vpop.f32.mrf.mxu0
    %v2729 = vadd.f32 0.0, %v2728
    %v2730 = vpop.f32.mrf.mxu0
    %2731 = vdwg.mxu0
    %v2733 = vsel %vm1533, %v1708, 0
    %2735 = vmatprep.subr.mxu0 0.0
    %2736 = vmatpush1.msra.mxu0 0.0
    %2737 = vmatprep.subr.mxu0 0.0
    %2738 = vmatpush1.msra.mxu0 0.0
    %2739 = vmatprep.subr.mxu0 0.0
    %2740 = vmatpush1.msra.mxu0 0.0
    %2741 = vmatprep.subr.mxu0 0.0
    %2742 = vmatpush1.msra.mxu0 0.0
    %2743 = vmatprep.subr.mxu0 0.0
    %2744 = vmatpush1.msra.mxu0 0.0
    %2745 = vmatprep.subr.mxu0 0.0
    %2746 = vmatpush1.msra.mxu0 0.0
    %2747 = vmatprep.subr.mxu0 0.0
    %2748 = vmatpush1.msra.mxu0 0.0
    %2749 = vmatprep.subr.mxu0 0.0
    %2750 = vmatpush1.msra.mxu0 0.0
    %2751 = vmatprep.subr.mxu0 0.0
    %2752 = vmatpush1.msra.mxu0 0.0
    %2753 = vmatprep.subr.mxu0 0.0
    %2754 = vmatpush1.msra.mxu0 0.0
    %2755 = vmatprep.subr.mxu0 0.0
    %2756 = vmatpush1.msra.mxu0 0.0
    %2757 = vmatprep.subr.mxu0 0.0
    %2758 = vmatpush1.msra.mxu0 0.0
    %2759 = vmatprep.subr.mxu0 0.0
    %2760 = vmatpush1.msra.mxu0 0.0
    %2761 = vmatprep.subr.mxu0 0.0
    %2762 = vmatpush1.msra.mxu0 0.0
    %2763 = vmatprep.subr.mxu0 0.0
    %2764 = vmatpush1.msra.mxu0 %v81
    %2765 = vmatprep.subr.mxu0 0.0
    %2766 = vmatpush1.msra.mxu0 %v80
    %2767 = vmatprep.subr.mxu0 0.0
    %2768 = vmatpush2.msra.mxu0 0.0
    %2769 = vmatprep.subr.mxu0 0.0
    %2770 = vmatpush2.msra.mxu0 0.0
    %2771 = vmatprep.subr.mxu0 0.0
    %2772 = vmatpush2.msra.mxu0 0.0
    %2773 = vmatprep.subr.mxu0 0.0
    %2774 = vmatpush2.msra.mxu0 0.0
    %2775 = vmatprep.subr.mxu0 0.0
    %2776 = vmatpush2.msra.mxu0 0.0
    %2777 = vmatprep.subr.mxu0 0.0
    %2778 = vmatpush2.msra.mxu0 0.0
    %2779 = vmatprep.subr.mxu0 0.0
    %2780 = vmatpush2.msra.mxu0 0.0
    %2781 = vmatprep.subr.mxu0 0.0
    %2782 = vmatpush2.msra.mxu0 0.0
    %2783 = vmatprep.subr.mxu0 0.0
    %2784 = vmatpush2.msra.mxu0 0.0
    %2785 = vmatprep.subr.mxu0 0.0
    %2786 = vmatpush2.msra.mxu0 0.0
    %2787 = vmatprep.subr.mxu0 0.0
    %2788 = vmatpush2.msra.mxu0 0.0
    %2789 = vmatprep.subr.mxu0 0.0
    %2790 = vmatpush2.msra.mxu0 0.0
    %2791 = vmatprep.subr.mxu0 0.0
    %2792 = vmatpush2.msra.mxu0 0.0
    %2793 = vmatprep.subr.mxu0 0.0
    %2794 = vmatpush2.msra.mxu0 0.0
    %2795 = vmatprep.subr.mxu0 0.0
    %2796 = vmatpush2.msra.mxu0 0.0
    %2797 = vmatprep.subr.mxu0 0.0
    %2798 = vmatpush2.msra.mxu0 0.0
    %2799 = vmatprep.mubr.f32.mxu0 0.0
    %2800 = vmatmul.mubr.f32.gmra.mxu0 %v2733
    %v2801 = vpop.f32.mrf.mxu0
    %v2802 = vadd.f32 0.0, %v2801
    %v2803 = vpop.f32.mrf.mxu0
    %2804 = vdwg.mxu0
    %v2806 = vsel %vm1533, %v1709, 0
    %2808 = vmatprep.subr.mxu0 0.0
    %2809 = vmatpush1.msra.mxu0 0.0
    %2810 = vmatprep.subr.mxu0 0.0
    %2811 = vmatpush1.msra.mxu0 0.0
    %2812 = vmatprep.subr.mxu0 0.0
    %2813 = vmatpush1.msra.mxu0 0.0
    %2814 = vmatprep.subr.mxu0 0.0
    %2815 = vmatpush1.msra.mxu0 0.0
    %2816 = vmatprep.subr.mxu0 0.0
    %2817 = vmatpush1.msra.mxu0 0.0
    %2818 = vmatprep.subr.mxu0 0.0
    %2819 = vmatpush1.msra.mxu0 0.0
    %2820 = vmatprep.subr.mxu0 0.0
    %2821 = vmatpush1.msra.mxu0 0.0
    %2822 = vmatprep.subr.mxu0 0.0
    %2823 = vmatpush1.msra.mxu0 0.0
    %2824 = vmatprep.subr.mxu0 0.0
    %2825 = vmatpush1.msra.mxu0 0.0
    %2826 = vmatprep.subr.mxu0 0.0
    %2827 = vmatpush1.msra.mxu0 0.0
    %2828 = vmatprep.subr.mxu0 0.0
    %2829 = vmatpush1.msra.mxu0 0.0
    %2830 = vmatprep.subr.mxu0 0.0
    %2831 = vmatpush1.msra.mxu0 0.0
    %2832 = vmatprep.subr.mxu0 0.0
    %2833 = vmatpush1.msra.mxu0 0.0
    %2834 = vmatprep.subr.mxu0 0.0
    %2835 = vmatpush1.msra.mxu0 0.0
    %2836 = vmatprep.subr.mxu0 0.0
    %2837 = vmatpush1.msra.mxu0 %v83
    %2838 = vmatprep.subr.mxu0 0.0
    %2839 = vmatpush1.msra.mxu0 %v82
    %2840 = vmatprep.subr.mxu0 0.0
    %2841 = vmatpush2.msra.mxu0 0.0
    %2842 = vmatprep.subr.mxu0 0.0
    %2843 = vmatpush2.msra.mxu0 0.0
    %2844 = vmatprep.subr.mxu0 0.0
    %2845 = vmatpush2.msra.mxu0 0.0
    %2846 = vmatprep.subr.mxu0 0.0
    %2847 = vmatpush2.msra.mxu0 0.0
    %2848 = vmatprep.subr.mxu0 0.0
    %2849 = vmatpush2.msra.mxu0 0.0
    %2850 = vmatprep.subr.mxu0 0.0
    %2851 = vmatpush2.msra.mxu0 0.0
    %2852 = vmatprep.subr.mxu0 0.0
    %2853 = vmatpush2.msra.mxu0 0.0
    %2854 = vmatprep.subr.mxu0 0.0
    %2855 = vmatpush2.msra.mxu0 0.0
    %2856 = vmatprep.subr.mxu0 0.0
    %2857 = vmatpush2.msra.mxu0 0.0
    %2858 = vmatprep.subr.mxu0 0.0
    %2859 = vmatpush2.msra.mxu0 0.0
    %2860 = vmatprep.subr.mxu0 0.0
    %2861 = vmatpush2.msra.mxu0 0.0
    %2862 = vmatprep.subr.mxu0 0.0
    %2863 = vmatpush2.msra.mxu0 0.0
    %2864 = vmatprep.subr.mxu0 0.0
    %2865 = vmatpush2.msra.mxu0 0.0
    %2866 = vmatprep.subr.mxu0 0.0
    %2867 = vmatpush2.msra.mxu0 0.0
    %2868 = vmatprep.subr.mxu0 0.0
    %2869 = vmatpush2.msra.mxu0 0.0
    %2870 = vmatprep.subr.mxu0 0.0
    %2871 = vmatpush2.msra.mxu0 0.0
    %2872 = vmatprep.mubr.f32.mxu0 0.0
    %2873 = vmatmul.mubr.f32.gmra.mxu0 %v2806
    %v2874 = vpop.f32.mrf.mxu0
    %v2875 = vadd.f32 0.0, %v2874
    %v2876 = vpop.f32.mrf.mxu0
    %2877 = vdwg.mxu0
    %v2878 = vmul.f32 %v1780, %v1780
    %v2879 = vmul.f32 %v1853, %v1853
    %v2880 = vmul.f32 %v1926, %v1926
    %v2881 = vmul.f32 %v1999, %v1999
    %v2882 = vmul.f32 %v2072, %v2072
    %v2883 = vmul.f32 %v2145, %v2145
    %v2884 = vmul.f32 %v2218, %v2218
    %v2885 = vmul.f32 %v2291, %v2291
    %v2886 = vmul.f32 %v2364, %v2364
    %v2887 = vmul.f32 %v2437, %v2437
    %v2888 = vmul.f32 %v2510, %v2510
    %v2889 = vmul.f32 %v2583, %v2583
    %v2890 = vmul.f32 %v2656, %v2656
    %v2891 = vmul.f32 %v2729, %v2729
    %v2892 = vmul.f32 %v2802, %v2802
    %v2893 = vmul.f32 %v2875, %v2875
    %v2894 = vsel %vm214, %v2878, 0.0
    %2895 = vadd.xlane.f32.xlu0 %v2894
    %v2896 = vpop.xlane.xlu0 %2895
    %v2897 = vsel %vm214, %v2879, 0.0
    %2898 = vadd.xlane.f32.xlu0 %v2897
    %v2899 = vpop.xlane.xlu0 %2898
    %v2900 = vsel %vm214, %v2880, 0.0
    %2901 = vadd.xlane.f32.xlu0 %v2900
    %v2902 = vpop.xlane.xlu0 %2901
    %v2903 = vsel %vm214, %v2881, 0.0
    %2904 = vadd.xlane.f32.xlu0 %v2903
    %v2905 = vpop.xlane.xlu0 %2904
    %v2906 = vsel %vm214, %v2882, 0.0
    %2907 = vadd.xlane.f32.xlu0 %v2906
    %v2908 = vpop.xlane.xlu0 %2907
    %v2909 = vsel %vm214, %v2883, 0.0
    %2910 = vadd.xlane.f32.xlu0 %v2909
    %v2911 = vpop.xlane.xlu0 %2910
    %v2912 = vsel %vm214, %v2884, 0.0
    %2913 = vadd.xlane.f32.xlu0 %v2912
    %v2914 = vpop.xlane.xlu0 %2913
    %v2915 = vsel %vm214, %v2885, 0.0
    %2916 = vadd.xlane.f32.xlu0 %v2915
    %v2917 = vpop.xlane.xlu0 %2916
    %v2918 = vsel %vm214, %v2886, 0.0
    %2919 = vadd.xlane.f32.xlu0 %v2918
    %v2920 = vpop.xlane.xlu0 %2919
    %v2921 = vsel %vm214, %v2887, 0.0
    %2922 = vadd.xlane.f32.xlu0 %v2921
    %v2923 = vpop.xlane.xlu0 %2922
    %v2924 = vsel %vm214, %v2888, 0.0
    %2925 = vadd.xlane.f32.xlu0 %v2924
    %v2926 = vpop.xlane.xlu0 %2925
    %v2927 = vsel %vm214, %v2889, 0.0
    %2928 = vadd.xlane.f32.xlu0 %v2927
    %v2929 = vpop.xlane.xlu0 %2928
    %v2930 = vsel %vm214, %v2890, 0.0
    %2931 = vadd.xlane.f32.xlu0 %v2930
    %v2932 = vpop.xlane.xlu0 %2931
    %v2933 = vsel %vm214, %v2891, 0.0
    %2934 = vadd.xlane.f32.xlu0 %v2933
    %v2935 = vpop.xlane.xlu0 %2934
    %v2936 = vsel %vm214, %v2892, 0.0
    %2937 = vadd.xlane.f32.xlu0 %v2936
    %v2938 = vpop.xlane.xlu0 %2937
    %v2939 = vsel %vm214, %v2893, 0.0
    %2940 = vadd.xlane.f32.xlu0 %v2939
    %v2941 = vpop.xlane.xlu0 %2940
    %v2942 = vrsqrt.pop %v2896
    %v2943 = vrsqrt.pop %v2899
    %v2944 = vrsqrt.pop %v2902
    %v2945 = vrsqrt.pop %v2905
    %v2946 = vrsqrt.pop %v2908
    %v2947 = vrsqrt.pop %v2911
    %v2948 = vrsqrt.pop %v2914
    %v2949 = vrsqrt.pop %v2917
    %v2950 = vrsqrt.pop %v2920
    %v2951 = vrsqrt.pop %v2923
    %v2952 = vrsqrt.pop %v2926
    %v2953 = vrsqrt.pop %v2929
    %v2954 = vrsqrt.pop %v2932
    %v2955 = vrsqrt.pop %v2935
    %v2956 = vrsqrt.pop %v2938
    %v2957 = vrsqrt.pop %v2941
    %v2958 = vmul.f32 %v1780, %v2942
    %v2959 = vmul.f32 %v1853, %v2943
    %v2960 = vmul.f32 %v1926, %v2944
    %v2961 = vmul.f32 %v1999, %v2945
    %v2962 = vmul.f32 %v2072, %v2946
    %v2963 = vmul.f32 %v2145, %v2947
    %v2964 = vmul.f32 %v2218, %v2948
    %v2965 = vmul.f32 %v2291, %v2949
    %v2966 = vmul.f32 %v2364, %v2950
    %v2967 = vmul.f32 %v2437, %v2951
    %v2968 = vmul.f32 %v2510, %v2952
    %v2969 = vmul.f32 %v2583, %v2953
    %v2970 = vmul.f32 %v2656, %v2954
    %v2971 = vmul.f32 %v2729, %v2955
    %v2972 = vmul.f32 %v2802, %v2956
    %v2973 = vmul.f32 %v2875, %v2957
    %vm2974 = vcmp.ne.f32.partialorder %v2958, %v2958
    %vm2975 = vcmp.ne.f32.partialorder %v2959, %v2959
    %vm2976 = vcmp.ne.f32.partialorder %v2960, %v2960
    %vm2977 = vcmp.ne.f32.partialorder %v2961, %v2961
    %vm2978 = vcmp.ne.f32.partialorder %v2962, %v2962
    %vm2979 = vcmp.ne.f32.partialorder %v2963, %v2963
    %vm2980 = vcmp.ne.f32.partialorder %v2964, %v2964
    %vm2981 = vcmp.ne.f32.partialorder %v2965, %v2965
    %vm2982 = vcmp.ne.f32.partialorder %v2966, %v2966
    %vm2983 = vcmp.ne.f32.partialorder %v2967, %v2967
    %vm2984 = vcmp.ne.f32.partialorder %v2968, %v2968
    %vm2985 = vcmp.ne.f32.partialorder %v2969, %v2969
    %vm2986 = vcmp.ne.f32.partialorder %v2970, %v2970
    %vm2987 = vcmp.ne.f32.partialorder %v2971, %v2971
    %vm2988 = vcmp.ne.f32.partialorder %v2972, %v2972
    %vm2989 = vcmp.ne.f32.partialorder %v2973, %v2973
    %v2990 = vsel %vm2974, 0.0, %v2958
    %v2991 = vsel %vm2975, 0.0, %v2959
    %v2992 = vsel %vm2976, 0.0, %v2960
    %v2993 = vsel %vm2977, 0.0, %v2961
    %v2994 = vsel %vm2978, 0.0, %v2962
    %v2995 = vsel %vm2979, 0.0, %v2963
    %v2996 = vsel %vm2980, 0.0, %v2964
    %v2997 = vsel %vm2981, 0.0, %v2965
    %v2998 = vsel %vm2982, 0.0, %v2966
    %v2999 = vsel %vm2983, 0.0, %v2967
    %v3000 = vsel %vm2984, 0.0, %v2968
    %v3001 = vsel %vm2985, 0.0, %v2969
    %v3002 = vsel %vm2986, 0.0, %v2970
    %v3003 = vsel %vm2987, 0.0, %v2971
    %v3004 = vsel %vm2988, 0.0, %v2972
    %v3005 = vsel %vm2989, 0.0, %v2973
    %v3006 = vmul.f32 %v50, %v50
    %v3007 = vmul.f32 %v51, %v51
    %v3008 = vsel %vm214, %v3006, 0.0
    %3009 = vadd.xlane.f32.xlu0 %v3008
    %v3010 = vpop.xlane.xlu0 %3009
    %v3011 = vsel %vm214, %v3007, 0.0
    %3012 = vadd.xlane.f32.xlu0 %v3011
    %v3013 = vpop.xlane.xlu0 %3012
    %v3014 = vrsqrt.pop %v3010
    %v3015 = vrsqrt.pop %v3013
    %v3016 = vmul.f32 %v50, %v3014
    %v3017 = vmul.f32 %v51, %v3015
    %vm3018 = vcmp.ne.f32.partialorder %v3016, %v3016
    %vm3019 = vcmp.ne.f32.partialorder %v3017, %v3017
    %v3020 = vsel %vm3018, 0.0, %v3016
    %v3021 = vsel %vm3019, 0.0, %v3017
    %v3022 = vmul.f32 %v3020, %v2990
    %v3023 = vmul.f32 %v3020, %v2991
    %v3024 = vmul.f32 %v3020, %v2992
    %v3025 = vmul.f32 %v3020, %v2993
    %v3026 = vmul.f32 %v3020, %v2994
    %v3027 = vmul.f32 %v3020, %v2995
    %v3028 = vmul.f32 %v3020, %v2996
    %v3029 = vmul.f32 %v3020, %v2997
    %v3030 = vmul.f32 %v3021, %v2998
    %v3031 = vmul.f32 %v3021, %v2999
    %v3032 = vmul.f32 %v3021, %v3000
    %v3033 = vmul.f32 %v3021, %v3001
    %v3034 = vmul.f32 %v3021, %v3002
    %v3035 = vmul.f32 %v3021, %v3003
    %v3036 = vmul.f32 %v3021, %v3004
    %v3037 = vmul.f32 %v3021, %v3005
    %v3038 = vld [vmem:[%s5] sm:$0xff]
    %v3039 = vld [vmem:[%s5 + $0x8] sm:$0xff]
    %v3040 = vld [vmem:[%s5 + $0x10] sm:$0xff]
    %v3041 = vld [vmem:[%s5 + $0x18] sm:$0xff]
    %v3042 = vld [vmem:[%s5 + $0x20] sm:$0xff]
    %v3043 = vld [vmem:[%s5 + $0x28] sm:$0xff]
    %v3044 = vld [vmem:[%s5 + $0x30] sm:$0xff]
    %v3045 = vld [vmem:[%s5 + $0x38] sm:$0xff]
    %v3046 = vld [vmem:[%s5 + $0x40] sm:$0x1]
    %v3047 = vld [vmem:[%s5 + $0x41] sm:$0x1]
    %v3048 = vld [vmem:[%s5 + $0x42] sm:$0x1]
    %v3049 = vlaneseq
    %v3050 = vshrl.u32 %v3049, 7
    %v3051 = vsub.s32 0, %v3050
    %v3052 = vrot.slane %v3046, %v3051
    %v3054 = vsel %vm214, %v3022, 0
    %v3057 = vsel %vm214, %v3023, 0
    %v3060 = vsel %vm214, %v3024, 0
    %v3063 = vsel %vm214, %v3025, 0
    %v3066 = vsel %vm214, %v3026, 0
    %v3069 = vsel %vm214, %v3027, 0
    %v3072 = vsel %vm214, %v3028, 0
    %v3075 = vsel %vm214, %v3029, 0
    %v3078 = vsel %vm214, %v3030, 0
    %v3081 = vsel %vm214, %v3031, 0
    %v3084 = vsel %vm214, %v3032, 0
    %v3087 = vsel %vm214, %v3033, 0
    %v3090 = vsel %vm214, %v3034, 0
    %v3093 = vsel %vm214, %v3035, 0
    %v3096 = vsel %vm214, %v3036, 0
    %v3099 = vsel %vm214, %v3037, 0
    %3101 = vmatprep.subr.mxu0 0.0
    %3102 = vmatpush1.msra.mxu0 0.0
    %3103 = vmatprep.subr.mxu0 0.0
    %3104 = vmatpush1.msra.mxu0 0.0
    %3105 = vmatprep.subr.mxu0 0.0
    %3106 = vmatpush1.msra.mxu0 0.0
    %3107 = vmatprep.subr.mxu0 0.0
    %3108 = vmatpush1.msra.mxu0 0.0
    %3109 = vmatprep.subr.mxu0 0.0
    %3110 = vmatpush1.msra.mxu0 0.0
    %3111 = vmatprep.subr.mxu0 0.0
    %3112 = vmatpush1.msra.mxu0 0.0
    %3113 = vmatprep.subr.mxu0 0.0
    %3114 = vmatpush1.msra.mxu0 0.0
    %3115 = vmatprep.subr.mxu0 0.0
    %3116 = vmatpush1.msra.mxu0 0.0
    %3117 = vmatprep.subr.mxu0 0.0
    %3118 = vmatpush1.msra.mxu0 0.0
    %3119 = vmatprep.subr.mxu0 0.0
    %3120 = vmatpush1.msra.mxu0 0.0
    %3121 = vmatprep.subr.mxu0 0.0
    %3122 = vmatpush1.msra.mxu0 0.0
    %3123 = vmatprep.subr.mxu0 0.0
    %3124 = vmatpush1.msra.mxu0 0.0
    %3125 = vmatprep.subr.mxu0 0.0
    %3126 = vmatpush1.msra.mxu0 %v3041
    %3127 = vmatprep.subr.mxu0 0.0
    %3128 = vmatpush1.msra.mxu0 %v3040
    %3129 = vmatprep.subr.mxu0 0.0
    %3130 = vmatpush1.msra.mxu0 %v3039
    %3131 = vmatprep.subr.mxu0 0.0
    %3132 = vmatpush1.msra.mxu0 %v3038
    %3133 = vmatprep.subr.mxu0 0.0
    %3134 = vmatpush2.msra.mxu0 0.0
    %3135 = vmatprep.subr.mxu0 0.0
    %3136 = vmatpush2.msra.mxu0 0.0
    %3137 = vmatprep.subr.mxu0 0.0
    %3138 = vmatpush2.msra.mxu0 0.0
    %3139 = vmatprep.subr.mxu0 0.0
    %3140 = vmatpush2.msra.mxu0 0.0
    %3141 = vmatprep.subr.mxu0 0.0
    %3142 = vmatpush2.msra.mxu0 0.0
    %3143 = vmatprep.subr.mxu0 0.0
    %3144 = vmatpush2.msra.mxu0 0.0
    %3145 = vmatprep.subr.mxu0 0.0
    %3146 = vmatpush2.msra.mxu0 0.0
    %3147 = vmatprep.subr.mxu0 0.0
    %3148 = vmatpush2.msra.mxu0 0.0
    %3149 = vmatprep.subr.mxu0 0.0
    %3150 = vmatpush2.msra.mxu0 0.0
    %3151 = vmatprep.subr.mxu0 0.0
    %3152 = vmatpush2.msra.mxu0 0.0
    %3153 = vmatprep.subr.mxu0 0.0
    %3154 = vmatpush2.msra.mxu0 0.0
    %3155 = vmatprep.subr.mxu0 0.0
    %3156 = vmatpush2.msra.mxu0 0.0
    %3157 = vmatprep.subr.mxu0 0.0
    %3158 = vmatpush2.msra.mxu0 0.0
    %3159 = vmatprep.subr.mxu0 0.0
    %3160 = vmatpush2.msra.mxu0 0.0
    %3161 = vmatprep.subr.mxu0 0.0
    %3162 = vmatpush2.msra.mxu0 0.0
    %3163 = vmatprep.subr.mxu0 0.0
    %3164 = vmatpush2.msra.mxu0 0.0
    %3165 = vmatprep.mubr.f32.mxu0 0.0
    %3166 = vmatmul.mubr.f32.gmra.mxu0 %v3054
    %v3167 = vpop.f32.mrf.mxu0
    %v3168 = vadd.f32 %v3052, %v3167
    %v3169 = vpop.f32.mrf.mxu0
    %3170 = vmatprep.mubr.f32.mxu0 0.0
    %3171 = vmatmul.mubr.f32.gmra.mxu0 %v3057
    %v3172 = vpop.f32.mrf.mxu0
    %v3173 = vadd.f32 %v3052, %v3172
    %v3174 = vpop.f32.mrf.mxu0
    %3175 = vmatprep.mubr.f32.mxu0 0.0
    %3176 = vmatmul.mubr.f32.gmra.mxu0 %v3060
    %v3177 = vpop.f32.mrf.mxu0
    %v3178 = vadd.f32 %v3052, %v3177
    %v3179 = vpop.f32.mrf.mxu0
    %3180 = vmatprep.mubr.f32.mxu0 0.0
    %3181 = vmatmul.mubr.f32.gmra.mxu0 %v3063
    %v3182 = vpop.f32.mrf.mxu0
    %v3183 = vadd.f32 %v3052, %v3182
    %v3184 = vpop.f32.mrf.mxu0
    %3185 = vmatprep.mubr.f32.mxu0 0.0
    %3186 = vmatmul.mubr.f32.gmra.mxu0 %v3066
    %v3187 = vpop.f32.mrf.mxu0
    %v3188 = vadd.f32 %v3052, %v3187
    %v3189 = vpop.f32.mrf.mxu0
    %3190 = vmatprep.mubr.f32.mxu0 0.0
    %3191 = vmatmul.mubr.f32.gmra.mxu0 %v3069
    %v3192 = vpop.f32.mrf.mxu0
    %v3193 = vadd.f32 %v3052, %v3192
    %v3194 = vpop.f32.mrf.mxu0
    %3195 = vmatprep.mubr.f32.mxu0 0.0
    %3196 = vmatmul.mubr.f32.gmra.mxu0 %v3072
    %v3197 = vpop.f32.mrf.mxu0
    %v3198 = vadd.f32 %v3052, %v3197
    %v3199 = vpop.f32.mrf.mxu0
    %3200 = vmatprep.mubr.f32.mxu0 0.0
    %3201 = vmatmul.mubr.f32.gmra.mxu0 %v3075
    %v3202 = vpop.f32.mrf.mxu0
    %v3203 = vadd.f32 %v3052, %v3202
    %v3204 = vpop.f32.mrf.mxu0
    %3205 = vmatprep.mubr.f32.mxu0 0.0
    %3206 = vmatmul.mubr.f32.gmra.mxu0 %v3078
    %v3207 = vpop.f32.mrf.mxu0
    %v3208 = vadd.f32 %v3052, %v3207
    %v3209 = vpop.f32.mrf.mxu0
    %3210 = vmatprep.mubr.f32.mxu0 0.0
    %3211 = vmatmul.mubr.f32.gmra.mxu0 %v3081
    %v3212 = vpop.f32.mrf.mxu0
    %v3213 = vadd.f32 %v3052, %v3212
    %v3214 = vpop.f32.mrf.mxu0
    %3215 = vmatprep.mubr.f32.mxu0 0.0
    %3216 = vmatmul.mubr.f32.gmra.mxu0 %v3084
    %v3217 = vpop.f32.mrf.mxu0
    %v3218 = vadd.f32 %v3052, %v3217
    %v3219 = vpop.f32.mrf.mxu0
    %3220 = vmatprep.mubr.f32.mxu0 0.0
    %3221 = vmatmul.mubr.f32.gmra.mxu0 %v3087
    %v3222 = vpop.f32.mrf.mxu0
    %v3223 = vadd.f32 %v3052, %v3222
    %v3224 = vpop.f32.mrf.mxu0
    %3225 = vmatprep.mubr.f32.mxu0 0.0
    %3226 = vmatmul.mubr.f32.gmra.mxu0 %v3090
    %v3227 = vpop.f32.mrf.mxu0
    %v3228 = vadd.f32 %v3052, %v3227
    %v3229 = vpop.f32.mrf.mxu0
    %3230 = vmatprep.mubr.f32.mxu0 0.0
    %3231 = vmatmul.mubr.f32.gmra.mxu0 %v3093
    %v3232 = vpop.f32.mrf.mxu0
    %v3233 = vadd.f32 %v3052, %v3232
    %v3234 = vpop.f32.mrf.mxu0
    %3235 = vmatprep.mubr.f32.mxu0 0.0
    %3236 = vmatmul.mubr.f32.gmra.mxu0 %v3096
    %v3237 = vpop.f32.mrf.mxu0
    %v3238 = vadd.f32 %v3052, %v3237
    %v3239 = vpop.f32.mrf.mxu0
    %3240 = vmatprep.mubr.f32.mxu0 0.0
    %3241 = vmatmul.mubr.f32.gmra.mxu0 %v3099
    %v3242 = vpop.f32.mrf.mxu0
    %v3243 = vadd.f32 %v3052, %v3242
    %v3244 = vpop.f32.mrf.mxu0
    %3245 = vdwg.mxu0
    %v3246 = vtanh.pop %v3168
    %v3247 = vtanh.pop %v3173
    %v3248 = vtanh.pop %v3178
    %v3249 = vtanh.pop %v3183
    %v3250 = vtanh.pop %v3188
    %v3251 = vtanh.pop %v3193
    %v3252 = vtanh.pop %v3198
    %v3253 = vtanh.pop %v3203
    %v3254 = vtanh.pop %v3208
    %v3255 = vtanh.pop %v3213
    %v3256 = vtanh.pop %v3218
    %v3257 = vtanh.pop %v3223
    %v3258 = vtanh.pop %v3228
    %v3259 = vtanh.pop %v3233
    %v3260 = vtanh.pop %v3238
    %v3261 = vtanh.pop %v3243
    %v3262 = vlaneseq
    %v3263 = vshrl.u32 %v3262, 7
    %v3264 = vsub.s32 0, %v3263
    %v3265 = vrot.slane %v3047, %v3264
    %v3267 = vsel %vm214, %v3246, 0
    %v3270 = vsel %vm214, %v3247, 0
    %v3273 = vsel %vm214, %v3248, 0
    %v3276 = vsel %vm214, %v3249, 0
    %v3279 = vsel %vm214, %v3250, 0
    %v3282 = vsel %vm214, %v3251, 0
    %v3285 = vsel %vm214, %v3252, 0
    %v3288 = vsel %vm214, %v3253, 0
    %v3291 = vsel %vm214, %v3254, 0
    %v3294 = vsel %vm214, %v3255, 0
    %v3297 = vsel %vm214, %v3256, 0
    %v3300 = vsel %vm214, %v3257, 0
    %v3303 = vsel %vm214, %v3258, 0
    %v3306 = vsel %vm214, %v3259, 0
    %v3309 = vsel %vm214, %v3260, 0
    %v3312 = vsel %vm214, %v3261, 0
    %3314 = vmatprep.subr.mxu0 0.0
    %3315 = vmatpush1.msra.mxu0 0.0
    %3316 = vmatprep.subr.mxu0 0.0
    %3317 = vmatpush1.msra.mxu0 0.0
    %3318 = vmatprep.subr.mxu0 0.0
    %3319 = vmatpush1.msra.mxu0 0.0
    %3320 = vmatprep.subr.mxu0 0.0
    %3321 = vmatpush1.msra.mxu0 0.0
    %3322 = vmatprep.subr.mxu0 0.0
    %3323 = vmatpush1.msra.mxu0 0.0
    %3324 = vmatprep.subr.mxu0 0.0
    %3325 = vmatpush1.msra.mxu0 0.0
    %3326 = vmatprep.subr.mxu0 0.0
    %3327 = vmatpush1.msra.mxu0 0.0
    %3328 = vmatprep.subr.mxu0 0.0
    %3329 = vmatpush1.msra.mxu0 0.0
    %3330 = vmatprep.subr.mxu0 0.0
    %3331 = vmatpush1.msra.mxu0 0.0
    %3332 = vmatprep.subr.mxu0 0.0
    %3333 = vmatpush1.msra.mxu0 0.0
    %3334 = vmatprep.subr.mxu0 0.0
    %3335 = vmatpush1.msra.mxu0 0.0
    %3336 = vmatprep.subr.mxu0 0.0
    %3337 = vmatpush1.msra.mxu0 0.0
    %3338 = vmatprep.subr.mxu0 0.0
    %3339 = vmatpush1.msra.mxu0 %v3045
    %3340 = vmatprep.subr.mxu0 0.0
    %3341 = vmatpush1.msra.mxu0 %v3044
    %3342 = vmatprep.subr.mxu0 0.0
    %3343 = vmatpush1.msra.mxu0 %v3043
    %3344 = vmatprep.subr.mxu0 0.0
    %3345 = vmatpush1.msra.mxu0 %v3042
    %3346 = vmatprep.subr.mxu0 0.0
    %3347 = vmatpush2.msra.mxu0 0.0
    %3348 = vmatprep.subr.mxu0 0.0
    %3349 = vmatpush2.msra.mxu0 0.0
    %3350 = vmatprep.subr.mxu0 0.0
    %3351 = vmatpush2.msra.mxu0 0.0
    %3352 = vmatprep.subr.mxu0 0.0
    %3353 = vmatpush2.msra.mxu0 0.0
    %3354 = vmatprep.subr.mxu0 0.0
    %3355 = vmatpush2.msra.mxu0 0.0
    %3356 = vmatprep.subr.mxu0 0.0
    %3357 = vmatpush2.msra.mxu0 0.0
    %3358 = vmatprep.subr.mxu0 0.0
    %3359 = vmatpush2.msra.mxu0 0.0
    %3360 = vmatprep.subr.mxu0 0.0
    %3361 = vmatpush2.msra.mxu0 0.0
    %3362 = vmatprep.subr.mxu0 0.0
    %3363 = vmatpush2.msra.mxu0 0.0
    %3364 = vmatprep.subr.mxu0 0.0
    %3365 = vmatpush2.msra.mxu0 0.0
    %3366 = vmatprep.subr.mxu0 0.0
    %3367 = vmatpush2.msra.mxu0 0.0
    %3368 = vmatprep.subr.mxu0 0.0
    %3369 = vmatpush2.msra.mxu0 0.0
    %3370 = vmatprep.subr.mxu0 0.0
    %3371 = vmatpush2.msra.mxu0 0.0
    %3372 = vmatprep.subr.mxu0 0.0
    %3373 = vmatpush2.msra.mxu0 0.0
    %3374 = vmatprep.subr.mxu0 0.0
    %3375 = vmatpush2.msra.mxu0 0.0
    %3376 = vmatprep.subr.mxu0 0.0
    %3377 = vmatpush2.msra.mxu0 0.0
    %3378 = vmatprep.mubr.f32.mxu0 0.0
    %3379 = vmatmul.mubr.f32.gmra.mxu0 %v3267
    %v3380 = vpop.f32.mrf.mxu0
    %v3381 = vadd.f32 %v3265, %v3380
    %v3382 = vpop.f32.mrf.mxu0
    %3383 = vmatprep.mubr.f32.mxu0 0.0
    %3384 = vmatmul.mubr.f32.gmra.mxu0 %v3270
    %v3385 = vpop.f32.mrf.mxu0
    %v3386 = vadd.f32 %v3265, %v3385
    %v3387 = vpop.f32.mrf.mxu0
    %3388 = vmatprep.mubr.f32.mxu0 0.0
    %3389 = vmatmul.mubr.f32.gmra.mxu0 %v3273
    %v3390 = vpop.f32.mrf.mxu0
    %v3391 = vadd.f32 %v3265, %v3390
    %v3392 = vpop.f32.mrf.mxu0
    %3393 = vmatprep.mubr.f32.mxu0 0.0
    %3394 = vmatmul.mubr.f32.gmra.mxu0 %v3276
    %v3395 = vpop.f32.mrf.mxu0
    %v3396 = vadd.f32 %v3265, %v3395
    %v3397 = vpop.f32.mrf.mxu0
    %3398 = vmatprep.mubr.f32.mxu0 0.0
    %3399 = vmatmul.mubr.f32.gmra.mxu0 %v3279
    %v3400 = vpop.f32.mrf.mxu0
    %v3401 = vadd.f32 %v3265, %v3400
    %v3402 = vpop.f32.mrf.mxu0
    %3403 = vmatprep.mubr.f32.mxu0 0.0
    %3404 = vmatmul.mubr.f32.gmra.mxu0 %v3282
    %v3405 = vpop.f32.mrf.mxu0
    %v3406 = vadd.f32 %v3265, %v3405
    %v3407 = vpop.f32.mrf.mxu0
    %3408 = vmatprep.mubr.f32.mxu0 0.0
    %3409 = vmatmul.mubr.f32.gmra.mxu0 %v3285
    %v3410 = vpop.f32.mrf.mxu0
    %v3411 = vadd.f32 %v3265, %v3410
    %v3412 = vpop.f32.mrf.mxu0
    %3413 = vmatprep.mubr.f32.mxu0 0.0
    %3414 = vmatmul.mubr.f32.gmra.mxu0 %v3288
    %v3415 = vpop.f32.mrf.mxu0
    %v3416 = vadd.f32 %v3265, %v3415
    %v3417 = vpop.f32.mrf.mxu0
    %3418 = vmatprep.mubr.f32.mxu0 0.0
    %3419 = vmatmul.mubr.f32.gmra.mxu0 %v3291
    %v3420 = vpop.f32.mrf.mxu0
    %v3421 = vadd.f32 %v3265, %v3420
    %v3422 = vpop.f32.mrf.mxu0
    %3423 = vmatprep.mubr.f32.mxu0 0.0
    %3424 = vmatmul.mubr.f32.gmra.mxu0 %v3294
    %v3425 = vpop.f32.mrf.mxu0
    %v3426 = vadd.f32 %v3265, %v3425
    %v3427 = vpop.f32.mrf.mxu0
    %3428 = vmatprep.mubr.f32.mxu0 0.0
    %3429 = vmatmul.mubr.f32.gmra.mxu0 %v3297
    %v3430 = vpop.f32.mrf.mxu0
    %v3431 = vadd.f32 %v3265, %v3430
    %v3432 = vpop.f32.mrf.mxu0
    %3433 = vmatprep.mubr.f32.mxu0 0.0
    %3434 = vmatmul.mubr.f32.gmra.mxu0 %v3300
    %v3435 = vpop.f32.mrf.mxu0
    %v3436 = vadd.f32 %v3265, %v3435
    %v3437 = vpop.f32.mrf.mxu0
    %3438 = vmatprep.mubr.f32.mxu0 0.0
    %3439 = vmatmul.mubr.f32.gmra.mxu0 %v3303
    %v3440 = vpop.f32.mrf.mxu0
    %v3441 = vadd.f32 %v3265, %v3440
    %v3442 = vpop.f32.mrf.mxu0
    %3443 = vmatprep.mubr.f32.mxu0 0.0
    %3444 = vmatmul.mubr.f32.gmra.mxu0 %v3306
    %v3445 = vpop.f32.mrf.mxu0
    %v3446 = vadd.f32 %v3265, %v3445
    %v3447 = vpop.f32.mrf.mxu0
    %3448 = vmatprep.mubr.f32.mxu0 0.0
    %3449 = vmatmul.mubr.f32.gmra.mxu0 %v3309
    %v3450 = vpop.f32.mrf.mxu0
    %v3451 = vadd.f32 %v3265, %v3450
    %v3452 = vpop.f32.mrf.mxu0
    %3453 = vmatprep.mubr.f32.mxu0 0.0
    %3454 = vmatmul.mubr.f32.gmra.mxu0 %v3312
    %v3455 = vpop.f32.mrf.mxu0
    %v3456 = vadd.f32 %v3265, %v3455
    %v3457 = vpop.f32.mrf.mxu0
    %3458 = vdwg.mxu0
    %v3459 = vtanh.pop %v3381
    %v3460 = vtanh.pop %v3386
    %v3461 = vtanh.pop %v3391
    %v3462 = vtanh.pop %v3396
    %v3463 = vtanh.pop %v3401
    %v3464 = vtanh.pop %v3406
    %v3465 = vtanh.pop %v3411
    %v3466 = vtanh.pop %v3416
    %v3467 = vtanh.pop %v3421
    %v3468 = vtanh.pop %v3426
    %v3469 = vtanh.pop %v3431
    %v3470 = vtanh.pop %v3436
    %v3471 = vtanh.pop %v3441
    %v3472 = vtanh.pop %v3446
    %v3473 = vtanh.pop %v3451
    %v3474 = vtanh.pop %v3456
    %v3475 = vlaneseq
    %v3476 = vshrl.u32 %v3475, 7
    %v3477 = vsub.s32 0, %v3476
    %v3478 = vrot.slane %v3048, %v3477
    %v3479 = vmul.f32 %v3459, %v3478
    %v3480 = vmul.f32 %v3460, %v3478
    %v3481 = vmul.f32 %v3461, %v3478
    %v3482 = vmul.f32 %v3462, %v3478
    %v3483 = vmul.f32 %v3463, %v3478
    %v3484 = vmul.f32 %v3464, %v3478
    %v3485 = vmul.f32 %v3465, %v3478
    %v3486 = vmul.f32 %v3466, %v3478
    %v3487 = vmul.f32 %v3467, %v3478
    %v3488 = vmul.f32 %v3468, %v3478
    %v3489 = vmul.f32 %v3469, %v3478
    %v3490 = vmul.f32 %v3470, %v3478
    %v3491 = vmul.f32 %v3471, %v3478
    %v3492 = vmul.f32 %v3472, %v3478
    %v3493 = vmul.f32 %v3473, %v3478
    %v3494 = vmul.f32 %v3474, %v3478
    %v3495 = vsel %vm214, %v3479, 0.0
    %3496 = vadd.xlane.f32.xlu0 %v3495
    %v3497 = vpop.xlane.xlu0 %3496
    %v3498 = vsel %vm214, %v3480, 0.0
    %3499 = vadd.xlane.f32.xlu0 %v3498
    %v3500 = vpop.xlane.xlu0 %3499
    %v3501 = vsel %vm214, %v3481, 0.0
    %3502 = vadd.xlane.f32.xlu0 %v3501
    %v3503 = vpop.xlane.xlu0 %3502
    %v3504 = vsel %vm214, %v3482, 0.0
    %3505 = vadd.xlane.f32.xlu0 %v3504
    %v3506 = vpop.xlane.xlu0 %3505
    %v3507 = vsel %vm214, %v3483, 0.0
    %3508 = vadd.xlane.f32.xlu0 %v3507
    %v3509 = vpop.xlane.xlu0 %3508
    %v3510 = vsel %vm214, %v3484, 0.0
    %3511 = vadd.xlane.f32.xlu0 %v3510
    %v3512 = vpop.xlane.xlu0 %3511
    %v3513 = vsel %vm214, %v3485, 0.0
    %3514 = vadd.xlane.f32.xlu0 %v3513
    %v3515 = vpop.xlane.xlu0 %3514
    %v3516 = vsel %vm214, %v3486, 0.0
    %3517 = vadd.xlane.f32.xlu0 %v3516
    %v3518 = vpop.xlane.xlu0 %3517
    %v3519 = vsel %vm214, %v3487, 0.0
    %3520 = vadd.xlane.f32.xlu0 %v3519
    %v3521 = vpop.xlane.xlu0 %3520
    %v3522 = vsel %vm214, %v3488, 0.0
    %3523 = vadd.xlane.f32.xlu0 %v3522
    %v3524 = vpop.xlane.xlu0 %3523
    %v3525 = vsel %vm214, %v3489, 0.0
    %3526 = vadd.xlane.f32.xlu0 %v3525
    %v3527 = vpop.xlane.xlu0 %3526
    %v3528 = vsel %vm214, %v3490, 0.0
    %3529 = vadd.xlane.f32.xlu0 %v3528
    %v3530 = vpop.xlane.xlu0 %3529
    %v3531 = vsel %vm214, %v3491, 0.0
    %3532 = vadd.xlane.f32.xlu0 %v3531
    %v3533 = vpop.xlane.xlu0 %3532
    %v3534 = vsel %vm214, %v3492, 0.0
    %3535 = vadd.xlane.f32.xlu0 %v3534
    %v3536 = vpop.xlane.xlu0 %3535
    %v3537 = vsel %vm214, %v3493, 0.0
    %3538 = vadd.xlane.f32.xlu0 %v3537
    %v3539 = vpop.xlane.xlu0 %3538
    %v3540 = vsel %vm214, %v3494, 0.0
    %3541 = vadd.xlane.f32.xlu0 %v3540
    %v3542 = vpop.xlane.xlu0 %3541
    %s3543 = sld [smem:[#allocation2 + $0x4]]
    %v3544 = vstv %s3543
    %v3545 = vadd.f32 %v3497, %v3544
    %v3546 = vadd.f32 %v3500, %v3544
    %v3547 = vadd.f32 %v3503, %v3544
    %v3548 = vadd.f32 %v3506, %v3544
    %v3549 = vadd.f32 %v3509, %v3544
    %v3550 = vadd.f32 %v3512, %v3544
    %v3551 = vadd.f32 %v3515, %v3544
    %v3552 = vadd.f32 %v3518, %v3544
    %v3553 = vadd.f32 %v3521, %v3544
    %v3554 = vadd.f32 %v3524, %v3544
    %v3555 = vadd.f32 %v3527, %v3544
    %v3556 = vadd.f32 %v3530, %v3544
    %v3557 = vadd.f32 %v3533, %v3544
    %v3558 = vadd.f32 %v3536, %v3544
    %v3559 = vadd.f32 %v3539, %v3544
    %v3560 = vadd.f32 %v3542, %v3544
    %v3561 = vtanh.pop %v3545
    %v3562 = vtanh.pop %v3546
    %v3563 = vtanh.pop %v3547
    %v3564 = vtanh.pop %v3548
    %v3565 = vtanh.pop %v3549
    %v3566 = vtanh.pop %v3550
    %v3567 = vtanh.pop %v3551
    %v3568 = vtanh.pop %v3552
    %v3569 = vtanh.pop %v3553
    %v3570 = vtanh.pop %v3554
    %v3571 = vtanh.pop %v3555
    %v3572 = vtanh.pop %v3556
    %v3573 = vtanh.pop %v3557
    %v3574 = vtanh.pop %v3558
    %v3575 = vtanh.pop %v3559
    %v3576 = vtanh.pop %v3560
    %v3577 = vlaneseq
    %v3578 = vshrl.u32 %v3577, 7
    %v3579 = vsub.s32 0, %v3578
    %v3580 = vrot.slane %v113, %v3579
    %3582 = vbcast.lane.b32.xlu0 %v3580, 256
    %v3583 = vpop.permute.xlu0 %3582
    %v3584 = vlaneseq
    %v3585 = vshrl.u32 %v3584, 7
    %v3586 = vsub.s32 1, %v3585
    %v3587 = vrot.slane %v113, %v3586
    %3589 = vbcast.lane.b32.xlu0 %v3587, 256
    %v3590 = vpop.permute.xlu0 %3589
    %v3593 = vlaneseq
    %v3594 = vshrl.u32 %v3593, 7
    %v3595 = vsub.s32 0, %v3594
    %v3596 = vrot.slane %v3583, %v3595
    %v3597 = vlaneseq
    %v3598 = vshrl.u32 %v3597, 7
    %v3599 = vsub.s32 1, %v3598
    %v3600 = vrot.slane %v3583, %v3599
    %v3601 = vlaneseq
    %v3602 = vshrl.u32 %v3601, 7
    %v3603 = vsub.s32 2, %v3602
    %v3604 = vrot.slane %v3583, %v3603
    %v3605 = vlaneseq
    %v3606 = vshrl.u32 %v3605, 7
    %v3607 = vsub.s32 3, %v3606
    %v3608 = vrot.slane %v3583, %v3607
    %v3609 = vlaneseq
    %v3610 = vshrl.u32 %v3609, 7
    %v3611 = vsub.s32 4, %v3610
    %v3612 = vrot.slane %v3583, %v3611
    %v3613 = vlaneseq
    %v3614 = vshrl.u32 %v3613, 7
    %v3615 = vsub.s32 5, %v3614
    %v3616 = vrot.slane %v3583, %v3615
    %v3617 = vlaneseq
    %v3618 = vshrl.u32 %v3617, 7
    %v3619 = vsub.s32 6, %v3618
    %v3620 = vrot.slane %v3583, %v3619
    %v3621 = vlaneseq
    %v3622 = vshrl.u32 %v3621, 7
    %v3623 = vsub.s32 7, %v3622
    %v3624 = vrot.slane %v3583, %v3623
    %v3625 = vlaneseq
    %v3626 = vshrl.u32 %v3625, 7
    %v3627 = vsub.s32 0, %v3626
    %v3628 = vrot.slane %v3590, %v3627
    %v3629 = vlaneseq
    %v3630 = vshrl.u32 %v3629, 7
    %v3631 = vsub.s32 1, %v3630
    %v3632 = vrot.slane %v3590, %v3631
    %v3633 = vlaneseq
    %v3634 = vshrl.u32 %v3633, 7
    %v3635 = vsub.s32 2, %v3634
    %v3636 = vrot.slane %v3590, %v3635
    %v3637 = vlaneseq
    %v3638 = vshrl.u32 %v3637, 7
    %v3639 = vsub.s32 3, %v3638
    %v3640 = vrot.slane %v3590, %v3639
    %v3641 = vlaneseq
    %v3642 = vshrl.u32 %v3641, 7
    %v3643 = vsub.s32 4, %v3642
    %v3644 = vrot.slane %v3590, %v3643
    %v3645 = vlaneseq
    %v3646 = vshrl.u32 %v3645, 7
    %v3647 = vsub.s32 5, %v3646
    %v3648 = vrot.slane %v3590, %v3647
    %v3649 = vlaneseq
    %v3650 = vshrl.u32 %v3649, 7
    %v3651 = vsub.s32 6, %v3650
    %v3652 = vrot.slane %v3590, %v3651
    %v3653 = vlaneseq
    %v3654 = vshrl.u32 %v3653, 7
    %v3655 = vsub.s32 7, %v3654
    %v3656 = vrot.slane %v3590, %v3655
    %v3673 = vmul.f32 %v3561, %v3596
    %v3674 = vmul.f32 %v3562, %v3600
    %v3675 = vmul.f32 %v3563, %v3604
    %v3676 = vmul.f32 %v3564, %v3608
    %v3677 = vmul.f32 %v3565, %v3612
    %v3678 = vmul.f32 %v3566, %v3616
    %v3679 = vmul.f32 %v3567, %v3620
    %v3680 = vmul.f32 %v3568, %v3624
    %v3681 = vmul.f32 %v3569, %v3628
    %v3682 = vmul.f32 %v3570, %v3632
    %v3683 = vmul.f32 %v3571, %v3636
    %v3684 = vmul.f32 %v3572, %v3640
    %v3685 = vmul.f32 %v3573, %v3644
    %v3686 = vmul.f32 %v3574, %v3648
    %v3687 = vmul.f32 %v3575, %v3652
    %v3688 = vmul.f32 %v3576, %v3656
    %v3689 = vlaneseq
    %v3690 = vshrl.u32 %v3689, 7
    %s3691 = sld [smem:[#allocation2 + $0x3]]
    %v3692 = vstv %s3691
    %v3693 = vadd.f32 %v3692, 0.0
    %vm3694 = vcmask 7168
    %v3695 = vsel %vm3694, %v3673, -inf
    %v3696 = vsel %vm3694, %v3674, -inf
    %v3697 = vsel %vm3694, %v3675, -inf
    %v3698 = vmax.f32 %v3695, %v3697
    %v3699 = vsel %vm3694, %v3676, -inf
    %v3700 = vmax.f32 %v3696, %v3699
    %v3701 = vsel %vm3694, %v3677, -inf
    %v3702 = vmax.f32 %v3698, %v3701
    %v3703 = vsel %vm3694, %v3678, -inf
    %v3704 = vmax.f32 %v3700, %v3703
    %v3705 = vsel %vm3694, %v3679, -inf
    %v3706 = vmax.f32 %v3702, %v3705
    %v3707 = vsel %vm3694, %v3680, -inf
    %v3708 = vmax.f32 %v3704, %v3707
    %v3709 = vmax.f32 %v3706, %v3708
    %v3710 = vsel %vm3694, %v3681, -inf
    %v3711 = vsel %vm3694, %v3682, -inf
    %v3712 = vsel %vm3694, %v3683, -inf
    %v3713 = vmax.f32 %v3710, %v3712
    %v3714 = vsel %vm3694, %v3684, -inf
    %v3715 = vmax.f32 %v3711, %v3714
    %v3716 = vsel %vm3694, %v3685, -inf
    %v3717 = vmax.f32 %v3713, %v3716
    %v3718 = vsel %vm3694, %v3686, -inf
    %v3719 = vmax.f32 %v3715, %v3718
    %v3720 = vsel %vm3694, %v3687, -inf
    %v3721 = vmax.f32 %v3717, %v3720
    %v3722 = vsel %vm3694, %v3688, -inf
    %v3723 = vmax.f32 %v3719, %v3722
    %v3724 = vmax.f32 %v3721, %v3723
    %s3725 = sld [smem:[#allocation2]]
    %v3726 = vstv %s3725
    %v3727 = vmul.f32 %v3709, %v3726
    %v3728 = vmul.f32 %v3724, %v3726
    %v3729 = vadd.f32 %v3693, %v3727
    %v3730 = vadd.f32 %v3693, %v3728
    %vm3731 = vcmp.eq.f32.partialorder %v3673, %v3709
    %vm3732 = vcmp.eq.f32.partialorder %v3674, %v3709
    %vm3733 = vcmp.eq.f32.partialorder %v3675, %v3709
    %vm3734 = vcmp.eq.f32.partialorder %v3676, %v3709
    %vm3735 = vcmp.eq.f32.partialorder %v3677, %v3709
    %vm3736 = vcmp.eq.f32.partialorder %v3678, %v3709
    %vm3737 = vcmp.eq.f32.partialorder %v3679, %v3709
    %vm3738 = vcmp.eq.f32.partialorder %v3680, %v3709
    %vm3739 = vcmp.eq.f32.partialorder %v3681, %v3724
    %vm3740 = vcmp.eq.f32.partialorder %v3682, %v3724
    %vm3741 = vcmp.eq.f32.partialorder %v3683, %v3724
    %vm3742 = vcmp.eq.f32.partialorder %v3684, %v3724
    %vm3743 = vcmp.eq.f32.partialorder %v3685, %v3724
    %vm3744 = vcmp.eq.f32.partialorder %v3686, %v3724
    %vm3745 = vcmp.eq.f32.partialorder %v3687, %v3724
    %vm3746 = vcmp.eq.f32.partialorder %v3688, %v3724
    %v3747 = vlaneseq
    %v3748 = vshrl.u32 %v3747, 7
    %v3749 = vsub.s32 0, %v3748
    %v3750 = vrot.slane %v3690, %v3749
    %v3751 = vlaneseq
    %v3752 = vshrl.u32 %v3751, 7
    %v3753 = vsub.s32 1, %v3752
    %v3754 = vrot.slane %v3690, %v3753
    %v3755 = vlaneseq
    %v3756 = vshrl.u32 %v3755, 7
    %v3757 = vsub.s32 2, %v3756
    %v3758 = vrot.slane %v3690, %v3757
    %v3759 = vlaneseq
    %v3760 = vshrl.u32 %v3759, 7
    %v3761 = vsub.s32 3, %v3760
    %v3762 = vrot.slane %v3690, %v3761
    %v3763 = vlaneseq
    %v3764 = vshrl.u32 %v3763, 7
    %v3765 = vsub.s32 4, %v3764
    %v3766 = vrot.slane %v3690, %v3765
    %v3767 = vlaneseq
    %v3768 = vshrl.u32 %v3767, 7
    %v3769 = vsub.s32 5, %v3768
    %v3770 = vrot.slane %v3690, %v3769
    %v3771 = vlaneseq
    %v3772 = vshrl.u32 %v3771, 7
    %v3773 = vsub.s32 6, %v3772
    %v3774 = vrot.slane %v3690, %v3773
    %v3775 = vlaneseq
    %v3776 = vshrl.u32 %v3775, 7
    %v3777 = vsub.s32 7, %v3776
    %v3778 = vrot.slane %v3690, %v3777
    %v3779 = vsel %vm3731, %v3750, 8
    %v3780 = vsel %vm3732, %v3754, 8
    %v3781 = vsel %vm3733, %v3758, 8
    %v3782 = vsel %vm3734, %v3762, 8
    %v3783 = vsel %vm3735, %v3766, 8
    %v3784 = vsel %vm3736, %v3770, 8
    %v3785 = vsel %vm3737, %v3774, 8
    %v3786 = vsel %vm3738, %v3778, 8
    %v3787 = vsel %vm3739, %v3750, 8
    %v3788 = vsel %vm3740, %v3754, 8
    %v3789 = vsel %vm3741, %v3758, 8
    %v3790 = vsel %vm3742, %v3762, 8
    %v3791 = vsel %vm3743, %v3766, 8
    %v3792 = vsel %vm3744, %v3770, 8
    %v3793 = vsel %vm3745, %v3774, 8
    %v3794 = vsel %vm3746, %v3778, 8
    %v3795 = vsel %vm3694, %v3779, 2147483647
    %v3796 = vsel %vm3694, %v3780, 2147483647
    %v3797 = vsel %vm3694, %v3781, 2147483647
    %vm3798 = vcmp.lt.s32.totalorder %v3795, %v3797
    %v3799 = vsel %vm3798, %v3795, %v3797
    %v3800 = vsel %vm3694, %v3782, 2147483647
    %vm3801 = vcmp.lt.s32.totalorder %v3796, %v3800
    %v3802 = vsel %vm3801, %v3796, %v3800
    %v3803 = vsel %vm3694, %v3783, 2147483647
    %vm3804 = vcmp.lt.s32.totalorder %v3799, %v3803
    %v3805 = vsel %vm3804, %v3799, %v3803
    %v3806 = vsel %vm3694, %v3784, 2147483647
    %vm3807 = vcmp.lt.s32.totalorder %v3802, %v3806
    %v3808 = vsel %vm3807, %v3802, %v3806
    %v3809 = vsel %vm3694, %v3785, 2147483647
    %vm3810 = vcmp.lt.s32.totalorder %v3805, %v3809
    %v3811 = vsel %vm3810, %v3805, %v3809
    %v3812 = vsel %vm3694, %v3786, 2147483647
    %vm3813 = vcmp.lt.s32.totalorder %v3808, %v3812
    %v3814 = vsel %vm3813, %v3808, %v3812
    %vm3815 = vcmp.lt.s32.totalorder %v3811, %v3814
    %v3816 = vsel %vm3815, %v3811, %v3814
    %v3817 = vsel %vm3694, %v3787, 2147483647
    %v3818 = vsel %vm3694, %v3788, 2147483647
    %v3819 = vsel %vm3694, %v3789, 2147483647
    %vm3820 = vcmp.lt.s32.totalorder %v3817, %v3819
    %v3821 = vsel %vm3820, %v3817, %v3819
    %v3822 = vsel %vm3694, %v3790, 2147483647
    %vm3823 = vcmp.lt.s32.totalorder %v3818, %v3822
    %v3824 = vsel %vm3823, %v3818, %v3822
    %v3825 = vsel %vm3694, %v3791, 2147483647
    %vm3826 = vcmp.lt.s32.totalorder %v3821, %v3825
    %v3827 = vsel %vm3826, %v3821, %v3825
    %v3828 = vsel %vm3694, %v3792, 2147483647
    %vm3829 = vcmp.lt.s32.totalorder %v3824, %v3828
    %v3830 = vsel %vm3829, %v3824, %v3828
    %v3831 = vsel %vm3694, %v3793, 2147483647
    %vm3832 = vcmp.lt.s32.totalorder %v3827, %v3831
    %v3833 = vsel %vm3832, %v3827, %v3831
    %v3834 = vsel %vm3694, %v3794, 2147483647
    %vm3835 = vcmp.lt.s32.totalorder %v3830, %v3834
    %v3836 = vsel %vm3835, %v3830, %v3834
    %vm3837 = vcmp.lt.s32.totalorder %v3833, %v3836
    %v3838 = vsel %vm3837, %v3833, %v3836
    %3839 = vset.pattern.permute.xlu0 0
    %3840 = vperm.xlu0 %3839, %v3816
    %v3841 = vpop.permute.xlu0 %3840
    %3842 = vset.pattern.permute.xlu0 0
    %3843 = vperm.xlu0 %3842, %v3838
    %v3844 = vpop.permute.xlu0 %3843
    %v3845 = vlaneseq
    %v3846 = vshrl.u32 %v3845, 7
    %v3847 = vsub.s32 %v87, %v3846
    %v3848 = vrot.slane %v3841, %v3847
    %v3849 = vlaneseq
    %v3850 = vshrl.u32 %v3849, 7
    %v3851 = vsub.s32 %v87, %v3850
    %v3852 = vrot.slane %v3844, %v3851
    %vm3853 = vcmask 1041409
    %vm3854 = vcmask 1042434
    %v3855 = vsel %vm3854, %v3848, %v3848
    %vm3856 = vcmask 1043459
    %v3857 = vsel %vm3856, %v3848, %v3855
    %vm3858 = vcmask 1044484
    %v3859 = vsel %vm3858, %v3848, %v3857
    %vm3860 = vcmask 1045509
    %v3861 = vsel %vm3860, %v3848, %v3859
    %vm3862 = vcmask 1046534
    %v3863 = vsel %vm3862, %v3848, %v3861
    %vm3864 = vcmask 1047559
    %v3865 = vsel %vm3864, %v3848, %v3863
    %v3866 = vsel %vm3854, %v3852, %v3852
    %v3867 = vsel %vm3856, %v3852, %v3866
    %v3868 = vsel %vm3858, %v3852, %v3867
    %v3869 = vsel %vm3860, %v3852, %v3868
    %v3870 = vsel %vm3862, %v3852, %v3869
    %v3871 = vsel %vm3864, %v3852, %v3870
    %vm3872 = vcmp.eq.s32.totalorder %v3690, %v3865
    %vm3873 = vcmp.eq.s32.totalorder %v3690, %v3871
    %3890 = vset.pattern.permute.xlu0 0
    %3891 = vperm.xlu0 %3890, %v3673
    %v3892 = vpop.permute.xlu0 %3891
    %3893 = vset.pattern.permute.xlu0 0
    %3894 = vperm.xlu0 %3893, %v3674
    %v3895 = vpop.permute.xlu0 %3894
    %3896 = vset.pattern.permute.xlu0 0
    %3897 = vperm.xlu0 %3896, %v3675
    %v3898 = vpop.permute.xlu0 %3897
    %3899 = vset.pattern.permute.xlu0 0
    %3900 = vperm.xlu0 %3899, %v3676
    %v3901 = vpop.permute.xlu0 %3900
    %3902 = vset.pattern.permute.xlu0 0
    %3903 = vperm.xlu0 %3902, %v3677
    %v3904 = vpop.permute.xlu0 %3903
    %3905 = vset.pattern.permute.xlu0 0
    %3906 = vperm.xlu0 %3905, %v3678
    %v3907 = vpop.permute.xlu0 %3906
    %3908 = vset.pattern.permute.xlu0 0
    %3909 = vperm.xlu0 %3908, %v3679
    %v3910 = vpop.permute.xlu0 %3909
    %3911 = vset.pattern.permute.xlu0 0
    %3912 = vperm.xlu0 %3911, %v3680
    %v3913 = vpop.permute.xlu0 %3912
    %3914 = vset.pattern.permute.xlu0 0
    %3915 = vperm.xlu0 %3914, %v3681
    %v3916 = vpop.permute.xlu0 %3915
    %3917 = vset.pattern.permute.xlu0 0
    %3918 = vperm.xlu0 %3917, %v3682
    %v3919 = vpop.permute.xlu0 %3918
    %3920 = vset.pattern.permute.xlu0 0
    %3921 = vperm.xlu0 %3920, %v3683
    %v3922 = vpop.permute.xlu0 %3921
    %3923 = vset.pattern.permute.xlu0 0
    %3924 = vperm.xlu0 %3923, %v3684
    %v3925 = vpop.permute.xlu0 %3924
    %3926 = vset.pattern.permute.xlu0 0
    %3927 = vperm.xlu0 %3926, %v3685
    %v3928 = vpop.permute.xlu0 %3927
    %3929 = vset.pattern.permute.xlu0 0
    %3930 = vperm.xlu0 %3929, %v3686
    %v3931 = vpop.permute.xlu0 %3930
    %3932 = vset.pattern.permute.xlu0 0
    %3933 = vperm.xlu0 %3932, %v3687
    %v3934 = vpop.permute.xlu0 %3933
    %3935 = vset.pattern.permute.xlu0 0
    %3936 = vperm.xlu0 %3935, %v3688
    %v3937 = vpop.permute.xlu0 %3936
    %v3938 = vlaneseq
    %v3939 = vshrl.u32 %v3938, 7
    %v3940 = vsub.s32 %v87, %v3939
    %v3941 = vrot.slane %v3892, %v3940
    %v3942 = vlaneseq
    %v3943 = vshrl.u32 %v3942, 7
    %v3944 = vsub.s32 %v87, %v3943
    %v3945 = vrot.slane %v3895, %v3944
    %v3946 = vlaneseq
    %v3947 = vshrl.u32 %v3946, 7
    %v3948 = vsub.s32 %v87, %v3947
    %v3949 = vrot.slane %v3898, %v3948
    %v3950 = vlaneseq
    %v3951 = vshrl.u32 %v3950, 7
    %v3952 = vsub.s32 %v87, %v3951
    %v3953 = vrot.slane %v3901, %v3952
    %v3954 = vlaneseq
    %v3955 = vshrl.u32 %v3954, 7
    %v3956 = vsub.s32 %v87, %v3955
    %v3957 = vrot.slane %v3904, %v3956
    %v3958 = vlaneseq
    %v3959 = vshrl.u32 %v3958, 7
    %v3960 = vsub.s32 %v87, %v3959
    %v3961 = vrot.slane %v3907, %v3960
    %v3962 = vlaneseq
    %v3963 = vshrl.u32 %v3962, 7
    %v3964 = vsub.s32 %v87, %v3963
    %v3965 = vrot.slane %v3910, %v3964
    %v3966 = vlaneseq
    %v3967 = vshrl.u32 %v3966, 7
    %v3968 = vsub.s32 %v87, %v3967
    %v3969 = vrot.slane %v3913, %v3968
    %v3970 = vlaneseq
    %v3971 = vshrl.u32 %v3970, 7
    %v3972 = vsub.s32 %v87, %v3971
    %v3973 = vrot.slane %v3916, %v3972
    %v3974 = vlaneseq
    %v3975 = vshrl.u32 %v3974, 7
    %v3976 = vsub.s32 %v87, %v3975
    %v3977 = vrot.slane %v3919, %v3976
    %v3978 = vlaneseq
    %v3979 = vshrl.u32 %v3978, 7
    %v3980 = vsub.s32 %v87, %v3979
    %v3981 = vrot.slane %v3922, %v3980
    %v3982 = vlaneseq
    %v3983 = vshrl.u32 %v3982, 7
    %v3984 = vsub.s32 %v87, %v3983
    %v3985 = vrot.slane %v3925, %v3984
    %v3986 = vlaneseq
    %v3987 = vshrl.u32 %v3986, 7
    %v3988 = vsub.s32 %v87, %v3987
    %v3989 = vrot.slane %v3928, %v3988
    %v3990 = vlaneseq
    %v3991 = vshrl.u32 %v3990, 7
    %v3992 = vsub.s32 %v87, %v3991
    %v3993 = vrot.slane %v3931, %v3992
    %v3994 = vlaneseq
    %v3995 = vshrl.u32 %v3994, 7
    %v3996 = vsub.s32 %v87, %v3995
    %v3997 = vrot.slane %v3934, %v3996
    %v3998 = vlaneseq
    %v3999 = vshrl.u32 %v3998, 7
    %v4000 = vsub.s32 %v87, %v3999
    %v4001 = vrot.slane %v3937, %v4000
    %v4002 = vsel %vm3853, %v3945, %v3941
    %v4003 = vsel %vm3854, %v3949, %v4002
    %v4004 = vsel %vm3856, %v3953, %v4003
    %v4005 = vsel %vm3858, %v3957, %v4004
    %v4006 = vsel %vm3860, %v3961, %v4005
    %v4007 = vsel %vm3862, %v3965, %v4006
    %v4008 = vsel %vm3864, %v3969, %v4007
    %v4009 = vsel %vm3853, %v3977, %v3973
    %v4010 = vsel %vm3854, %v3981, %v4009
    %v4011 = vsel %vm3856, %v3985, %v4010
    %v4012 = vsel %vm3858, %v3989, %v4011
    %v4013 = vsel %vm3860, %v3993, %v4012
    %v4014 = vsel %vm3862, %v3997, %v4013
    %v4015 = vsel %vm3864, %v4001, %v4014
    %v4018 = vsel %vm3872, -1e+30, %v4008
    %v4019 = vsel %vm3873, -1e+30, %v4015
    %vm4020 = vcmask 64512
    %v4021 = vsel %vm4020, %v4018, -inf
    %v4022 = vrot.slane %v4021, 4
    %v4023 = vmax.f32 %v4021, %v4022
    %v4024 = vrot.slane %v4023, 2
    %v4025 = vmax.f32 %v4023, %v4024
    %v4026 = vrot.slane %v4025, 1
    %v4027 = vmax.f32 %v4025, %v4026
    %v4028 = vsel %vm4020, %v4019, -inf
    %v4029 = vrot.slane %v4028, 4
    %v4030 = vmax.f32 %v4028, %v4029
    %v4031 = vrot.slane %v4030, 2
    %v4032 = vmax.f32 %v4030, %v4031
    %v4033 = vrot.slane %v4032, 1
    %v4034 = vmax.f32 %v4032, %v4033
    %s4035 = sld [smem:[#allocation2 + $0x1]]
    %v4036 = vstv %s4035
    %v4037 = vmul.f32 %v4027, %v4036
    %v4038 = vmul.f32 %v4034, %v4036
    %4042 = vbcast.lane.b32.xlu0 %v4037, 256
    %v4043 = vpop.permute.xlu0 %4042
    %4045 = vbcast.lane.b32.xlu0 %v4038, 256
    %v4046 = vpop.permute.xlu0 %4045
    %v4049 = vadd.f32 %v3729, %v4043
    %v4050 = vadd.f32 %v3730, %v4046
    %vm4051 = vcmp.eq.f32.partialorder %v4018, %v4027
    %vm4052 = vcmp.eq.f32.partialorder %v4019, %v4034
    %v4053 = vsel %vm4051, %v3690, 8
    %v4054 = vsel %vm4052, %v3690, 8
    %v4055 = vsel %vm4020, %v4053, 2147483647
    %v4056 = vrot.slane %v4055, 4
    %vm4057 = vcmp.lt.s32.totalorder %v4055, %v4056
    %v4058 = vsel %vm4057, %v4055, %v4056
    %v4059 = vrot.slane %v4058, 2
    %vm4060 = vcmp.lt.s32.totalorder %v4058, %v4059
    %v4061 = vsel %vm4060, %v4058, %v4059
    %v4062 = vrot.slane %v4061, 1
    %vm4063 = vcmp.lt.s32.totalorder %v4061, %v4062
    %v4064 = vsel %vm4063, %v4061, %v4062
    %v4065 = vsel %vm4020, %v4054, 2147483647
    %v4066 = vrot.slane %v4065, 4
    %vm4067 = vcmp.lt.s32.totalorder %v4065, %v4066
    %v4068 = vsel %vm4067, %v4065, %v4066
    %v4069 = vrot.slane %v4068, 2
    %vm4070 = vcmp.lt.s32.totalorder %v4068, %v4069
    %v4071 = vsel %vm4070, %v4068, %v4069
    %v4072 = vrot.slane %v4071, 1
    %vm4073 = vcmp.lt.s32.totalorder %v4071, %v4072
    %v4074 = vsel %vm4073, %v4071, %v4072
    %vm4075 = vcmp.eq.s32.totalorder %v3690, %v4064
    %vm4076 = vcmp.eq.s32.totalorder %v3690, %v4074
    %v4077 = vsel %vm4075, -1e+30, %v4018
    %v4078 = vsel %vm4076, -1e+30, %v4019
    %v4079 = vsel %vm4020, %v4077, -inf
    %v4080 = vrot.slane %v4079, 4
    %v4081 = vmax.f32 %v4079, %v4080
    %v4082 = vrot.slane %v4081, 2
    %v4083 = vmax.f32 %v4081, %v4082
    %v4084 = vrot.slane %v4083, 1
    %v4085 = vmax.f32 %v4083, %v4084
    %v4086 = vsel %vm4020, %v4078, -inf
    %v4087 = vrot.slane %v4086, 4
    %v4088 = vmax.f32 %v4086, %v4087
    %v4089 = vrot.slane %v4088, 2
    %v4090 = vmax.f32 %v4088, %v4089
    %v4091 = vrot.slane %v4090, 1
    %v4092 = vmax.f32 %v4090, %v4091
    %s4093 = sld [smem:[#allocation2 + $0x2]]
    %v4094 = vstv %s4093
    %v4095 = vmul.f32 %v4085, %v4094
    %v4096 = vmul.f32 %v4092, %v4094
    %4100 = vbcast.lane.b32.xlu0 %v4095, 256
    %v4101 = vpop.permute.xlu0 %4100
    %4103 = vbcast.lane.b32.xlu0 %v4096, 256
    %v4104 = vpop.permute.xlu0 %4103
    %v4107 = vadd.f32 %v4049, %v4101
    %v4108 = vadd.f32 %v4050, %v4104
    %vm4109 = vcmp.eq.f32.partialorder %v85, 0.0
    %v4110 = vsel %vm4109, -1e+12, %v85
    %vm4111 = vcmask 58368
    %v4112 = vsel %vm4111, %v4110, -inf
    %4113 = vmax.xlane.f32.xlu0 %v4112
    %v4114 = vpop.xlane.xlu0 %4113
    %v4115 = vsub.f32 %v4110, %v4114
    %v4116 = vmul.f32 %v4115, 1.442695
    %v4117 = vpow.pop %v4116
    %v4118 = vsel %vm4111, %v4117, 0.0
    %4119 = vadd.xlane.f32.xlu0 %v4118
    %v4120 = vpop.xlane.xlu0 %4119
    %v4121 = vrcp.pop %v4120
    %v4122 = vmul.f32 %v4117, %v4121
    %v4124 = vlaneseq
    %v4125 = vshrl.u32 %v4124, 7
    %v4126 = vsub.s32 0, %v4125
    %v4127 = vrot.slane %v4122, %v4126
    %4129 = vbcast.lane.b32.xlu0 %v4127, 256
    %v4130 = vpop.permute.xlu0 %4129
    %v4131 = vlaneseq
    %v4132 = vshrl.u32 %v4131, 7
    %v4133 = vsub.s32 1, %v4132
    %v4134 = vrot.slane %v4122, %v4133
    %4136 = vbcast.lane.b32.xlu0 %v4134, 256
    %v4137 = vpop.permute.xlu0 %4136
    %v4140 = vmul.f32 %v4107, %v4130
    %v4141 = vmul.f32 %v4108, %v4137
    %4144 = vset.pattern.permute.xlu0 0
    %4145 = vperm.xlu0 %4144, %v4140
    %v4146 = vpop.permute.xlu0 %4145
    %4147 = vset.pattern.permute.xlu0 0
    %4148 = vperm.xlu0 %4147, %v4141
    %v4149 = vpop.permute.xlu0 %4148
    %v4150 = vlaneseq
    %v4151 = vshrl.u32 %v4150, 7
    %v4152 = vsub.s32 %v87, %v4151
    %v4153 = vrot.slane %v4146, %v4152
    %v4154 = vlaneseq
    %v4155 = vshrl.u32 %v4154, 7
    %v4156 = vsub.s32 %v87, %v4155
    %v4157 = vrot.slane %v4149, %v4156
    %v4158 = vsel %vm3853, %v4157, %v4153
    %v4160 = vsel %vm4111, %v4158, 0.0
    %4161 = vadd.xlane.f32.xlu0 %v4160
    %v4162 = vpop.xlane.xlu0 %4161
    %vm4163 = vcmask 1024
    %4164 = vst.msk [vmem:[%s6] sm:$0x3] %vm4163, %v4162
    // Predicated region
    $region34: #{tpu_custom_call.1} parent=1 // pred_check
      _
    $region35: #{tpu_custom_call.1} parent=1 // pred_check_branch
      %4166 = sbr.rel (0) target = $region37
    $region36: #{tpu_custom_call.1} parent=1 // pred_region
      _
    $region37: #{tpu_custom_call.1} parent=1 // pred_fallthru
      _
    // Predicated region
    $region38: #{tpu_custom_call.1} parent=1 // pred_check
      _
    $region39: #{tpu_custom_call.1} parent=1 // pred_check_branch
      %4168 = sbr.rel (0) target = $region41
    $region40: #{tpu_custom_call.1} parent=1 // pred_region
      _
    $region41: #{tpu_custom_call.1} parent=1 // pred_fallthru
      _
    %4169 = vsyncpa [#allocation3], 1
    %4170 = vsyncpa [#allocation4], 1

</llo_original>
